<compile_context>
chip_gen: v6e
topology: v6e:2x2x1
jax: 0.10.0
libtpu: 0.0.40
codegen_flags: <defaults>
</compile_context>

<pallas_src>
import functools

import numpy as np

import jax
import jax.numpy as jnp
from jax.experimental import pallas as pl
from jax.experimental.pallas import tpu as pltpu


# ----------------------------------------------------------------------------
# Fused forward kernel: conv(+bias,ReLU) + 2x2 maxpool + flatten + FC + softmax
# ----------------------------------------------------------------------------
def _fused_forward_kernel(x_ref, m_ref, cb_ref, fcw_ref, fcb_ref, o_ref, *,
                          nc, k, shift):
    """Whole forward pass for a tile of `tb` images.

    x_ref   : (tb, Kpad)  bf16  flattened zero-padded images, row = hp*(C*Wp)+ci*Wp+wp
    m_ref   : (K, F)      bf16  Toeplitz-expanded conv weight (pool parity (0,0))
    cb_ref  : (1, F)      f32   conv bias broadcast to the pooled (h', w', co) layout
    fcw_ref : (F, 128)    bf16  FC weight, rows permuted to the kernel's feature order,
                                columns zero-padded from nc to 128
    fcb_ref : (1, 128)    f32   FC bias (padded)
    o_ref   : (tb, 128)   f32   softmax probabilities (padded lanes written as 0)
    """
    m = m_ref[...]                                          # (K, F) resident in VMEM
    acc = None
    # The four 2x2-pool positions are the same Toeplitz matmul applied to a
    # statically shifted view of the flattened padded image.
    for p in (0, 1):
        for q in (0, 1):
            lhs = x_ref[:, pl.ds(p * shift + q, k)]         # (tb, K) bf16
            a = jnp.dot(lhs, m, preferred_element_type=jnp.float32)   # MXU, f32 acc
            acc = a if acc is None else jnp.maximum(acc, a)
    # maxpool(relu(conv + b)) == relu(maxpool(conv) + b): bias shared, relu monotone.
    feats = jnp.maximum(acc + cb_ref[...], 0.0)             # (tb, F) f32, lane-dense

    # decoder 'linear': Linear(inf, nc) + Softmax over the first nc of 128 lanes.
    logits = jnp.dot(feats.astype(fcw_ref.dtype), fcw_ref[...],
                     preferred_element_type=jnp.float32) + fcb_ref[...]   # (tb, 128)
    col = jax.lax.broadcasted_iota(jnp.int32, logits.shape, 1)
    valid = col < nc
    lm = jnp.where(valid, logits, -1e30)
    mx = jnp.max(lm, axis=-1, keepdims=True)
    e = jnp.where(valid, jnp.exp(lm - mx), 0.0)
    s = jnp.sum(e, axis=-1, keepdims=True)
    o_ref[...] = (e * pl.reciprocal(s, approx=True)).astype(o_ref.dtype)


# ----------------------------------------------------------------------------
# Parameter init (PyTorch-convention tensors) + one-time packing for the kernel
# ----------------------------------------------------------------------------
def init_torch_like_params(key, *, c_in, c_out, h, w, nc):
    k1, k2, k3, k4 = jax.random.split(key, 4)
    conv_w = 0.1 * jax.random.normal(k1, (c_out, c_in, 3, 3), jnp.float32)   # OIHW
    conv_b = 0.1 * jax.random.normal(k2, (c_out,), jnp.float32)
    inf = c_out * (h // 2) * (w // 2)
    fc_w = 0.05 * jax.random.normal(k3, (nc, inf), jnp.float32)              # (out, in)
    fc_b = 0.05 * jax.random.normal(k4, (nc,), jnp.float32)
    return conv_w, conv_b, fc_w, fc_b


def pack_params(conv_w, conv_b, fc_w, fc_b, *, c_in, c_out, h, w, nc, n_pad=128):
    """One-time host-side packing: Toeplitz conv matrix, tiled bias, permuted FC."""
    hp, wp = h + 2, w + 2
    ho, wo = h // 2, w // 2
    K = hp * c_in * wp                      # flattened padded-image length
    F = ho * wo * c_out                     # pooled feature count (lane-dense layout)

    cw = np.asarray(conv_w, np.float32)     # (c_out, c_in, 3, 3)
    big = np.zeros((K, F), np.float32)
    ww = np.arange(wo)
    for kh in range(3):
        for kw in range(3):
            for ci in range(c_in):
                for co in range(c_out):
                    for hh in range(ho):
                        rows = (2 * hh + kh) * (c_in * wp) + ci * wp + (2 * ww + kw)
                        cols = hh * (wo * c_out) + ww * c_out + co
                        big[rows, cols] = cw[co, ci, kh, kw]

    # conv bias broadcast to feature layout: col = hh*(wo*c_out) + ww*c_out + co
    conv_bias_row = np.tile(np.asarray(conv_b, np.float32), ho * wo)[None, :]   # (1, F)

    # FC weight: permute input features from PyTorch NCHW-flatten order
    # (co*ho*wo + hh*wo + ww) to the kernel's (hh, ww, co) order; pad nc -> n_pad.
    fcw = np.asarray(fc_w, np.float32).reshape(nc, c_out, ho, wo)
    fcw = np.transpose(fcw, (2, 3, 1, 0)).reshape(F, nc)
    fcw_pad = np.zeros((F, n_pad), np.float32)
    fcw_pad[:, :nc] = fcw
    fcb_pad = np.zeros((1, n_pad), np.float32)
    fcb_pad[0, :nc] = np.asarray(fc_b, np.float32)

    return {
        "bigm": jnp.asarray(big, jnp.bfloat16),
        "conv_bias": jnp.asarray(conv_bias_row, jnp.float32),
        "fcw": jnp.asarray(fcw_pad, jnp.bfloat16),
        "fcb": jnp.asarray(fcb_pad, jnp.float32),
    }


# ----------------------------------------------------------------------------
# Forward: one fused pallas_call
# ----------------------------------------------------------------------------
def model_forward(x_nchw, params, *, nc):
    B, C, H, W = x_nchw.shape
    hp, wp = H + 2, W + 2
    shift = C * wp                            # flattened row stride of one padded image row
    K, F = params["bigm"].shape
    n_pad = params["fcw"].shape[1]
    assert K == hp * C * wp
    x_cols = ((K + shift + 1 + 127) // 128) * 128   # room for the 4 shifted views

    # Tiny input prep glue (~5 KB): NCHW -> zero-pad spatial -> (b, hp, ci, wp) -> flat row.
    xp = jnp.pad(x_nchw, ((0, 0), (0, 0), (1, 1), (1, 1)))
    x2 = jnp.transpose(xp, (0, 2, 1, 3)).reshape(B, K)
    x2 = jnp.pad(x2, ((0, 0), (0, x_cols - K))).astype(jnp.bfloat16)

    tb = min(B, 128)                          # batch tile; grid scales with real batch
    grid = (pl.cdiv(B, tb),)
    kern = functools.partial(_fused_forward_kernel, nc=nc, k=K, shift=shift)

    out = pl.pallas_call(
        kern,
        out_shape=jax.ShapeDtypeStruct((B, n_pad), jnp.float32),
        grid=grid,
        in_specs=[
            pl.BlockSpec((tb, x_cols), lambda i: (i, 0)),   # per-tile images
            pl.BlockSpec((K, F), lambda i: (0, 0)),         # conv Toeplitz weight (resident)
            pl.BlockSpec((1, F), lambda i: (0, 0)),         # conv bias
            pl.BlockSpec((F, n_pad), lambda i: (0, 0)),     # FC weight (resident)
            pl.BlockSpec((1, n_pad), lambda i: (0, 0)),     # FC bias
        ],
        out_specs=pl.BlockSpec((tb, n_pad), lambda i: (i, 0)),
        compiler_params=pltpu.CompilerParams(
            dimension_semantics=("parallel",)),
    )(x2, params["bigm"], params["conv_bias"], params["fcw"], params["fcb"])

    return out[:, :nc]


# ----------------------------------------------------------------------------
# Pure-JAX reference (mirrors the PyTorch forward) for validation
# ----------------------------------------------------------------------------
def reference_forward(x, conv_w, conv_b, fc_w, fc_b):
    y = jax.lax.conv_general_dilated(
        x, conv_w, window_strides=(1, 1), padding=((1, 1), (1, 1)),
        dimension_numbers=("NCHW", "OIHW", "NCHW"))
    y = jnp.maximum(y + conv_b[None, :, None, None], 0.0)
    y = jax.lax.reduce_window(y, -jnp.inf, jax.lax.max,
                              window_dimensions=(1, 1, 2, 2),
                              window_strides=(1, 1, 2, 2), padding="VALID")
    feats = y.reshape(y.shape[0], -1)                       # PyTorch NCHW flatten
    logits = feats @ fc_w.T + fc_b
    return jax.nn.softmax(logits, axis=-1)


# TODO(synk): the original Model's name-based decoder dispatch ('alexnet'/'lenet')
# and `.to(device)` are framework plumbing with no Pallas equivalent; the 'linear'
# decoder path (Linear + Softmax) is the one implemented here.


if __name__ == "__main__":
    key = jax.random.PRNGKey(0)
    kx, kp = jax.random.split(key)

    B, C, H, W, NC = 2, 4, 16, 16, 10
    C_OUT = 8
    x = jax.random.normal(kx, (B, C, H, W), jnp.float32)      # NCHW, like PyTorch

    conv_w, conv_b, fc_w, fc_b = init_torch_like_params(
        kp, c_in=C, c_out=C_OUT, h=H, w=W, nc=NC)
    params = pack_params(conv_w, conv_b, fc_w, fc_b,
                         c_in=C, c_out=C_OUT, h=H, w=W, nc=NC)

    fwd = jax.jit(model_forward, static_argnames=("nc",))
    out = jax.block_until_ready(fwd(x, params, nc=NC))

    ref = jax.block_until_ready(reference_forward(x, conv_w, conv_b, fc_w, fc_b))

    assert out.shape == (B, NC), out.shape
    assert jnp.allclose(jnp.sum(out, axis=-1), 1.0, atol=1e-2)
    assert jnp.allclose(out, ref, atol=2e-2), float(jnp.max(jnp.abs(out - ref)))
    print("KERNEL_OK")
</pallas_src>

<mosaic_0001>
module attributes {stable_mosaic.version = 11 : i64} {
  func.func @_fused_forward_kernel(%arg0: i32, %arg1: memref<2x1408xbf16, #tpu.memory_space<vmem>>, %arg2: memref<1296x512xbf16, #tpu.memory_space<vmem>>, %arg3: memref<1x512xf32, #tpu.memory_space<vmem>>, %arg4: memref<512x128xbf16, #tpu.memory_space<vmem>>, %arg5: memref<1x128xf32, #tpu.memory_space<vmem>>, %arg6: memref<2x128xf32, #tpu.memory_space<vmem>>) attributes {dimension_semantics = [#tpu.dimension_semantics<parallel>], iteration_bounds = array<i64: 1>, scalar_prefetch = 0 : i64, scratch_operands = 0 : i64, tpu.core_type = #tpu.core_type<tc>, window_params = [{transform_indices = @transform_0, window_bounds = array<i64: 2, 1408>}, {pipeline_mode = #tpu.pipeline_mode<synchronous>, transform_indices = @transform_1, window_bounds = array<i64: 1296, 512>}, {pipeline_mode = #tpu.pipeline_mode<synchronous>, transform_indices = @transform_2, window_bounds = array<i64: 1, 512>}, {pipeline_mode = #tpu.pipeline_mode<synchronous>, transform_indices = @transform_3, window_bounds = array<i64: 512, 128>}, {pipeline_mode = #tpu.pipeline_mode<synchronous>, transform_indices = @transform_4, window_bounds = array<i64: 1, 128>}, {transform_indices = @transform_5, window_bounds = array<i64: 2, 128>}]} {
    %c0 = arith.constant 0 : index
    %c0_0 = arith.constant 0 : index
    %0 = vector.load %arg2[%c0, %c0_0] : memref<1296x512xbf16, #tpu.memory_space<vmem>>, vector<1296x512xbf16>
    %c0_1 = arith.constant 0 : index
    %c0_2 = arith.constant 0 : index
    %1 = vector.load %arg1[%c0_1, %c0_2] : memref<2x1408xbf16, #tpu.memory_space<vmem>>, vector<2x1296xbf16>
    %cst = arith.constant dense<0.000000e+00> : vector<2x512xf32>
    %2 = tpu.matmul %1, %0, %cst {dimension_numbers = #tpu.dot_dimension_numbers<[1], [0], [0], [1], [0, 0, 1, 1], [], []>} : vector<2x1296xbf16>, vector<1296x512xbf16>, vector<2x512xf32> -> vector<2x512xf32>
    %c0_3 = arith.constant 0 : index
    %c1 = arith.constant 1 : index
    %3 = vector.load %arg1[%c0_3, %c1] : memref<2x1408xbf16, #tpu.memory_space<vmem>>, vector<2x1296xbf16>
    %cst_4 = arith.constant dense<0.000000e+00> : vector<2x512xf32>
    %4 = tpu.matmul %3, %0, %cst_4 {dimension_numbers = #tpu.dot_dimension_numbers<[1], [0], [0], [1], [0, 0, 1, 1], [], []>} : vector<2x1296xbf16>, vector<1296x512xbf16>, vector<2x512xf32> -> vector<2x512xf32>
    %5 = arith.maximumf %2, %4 : vector<2x512xf32>
    %c0_5 = arith.constant 0 : index
    %c72 = arith.constant 72 : index
    %6 = vector.load %arg1[%c0_5, %c72] : memref<2x1408xbf16, #tpu.memory_space<vmem>>, vector<2x1296xbf16>
    %cst_6 = arith.constant dense<0.000000e+00> : vector<2x512xf32>
    %7 = tpu.matmul %6, %0, %cst_6 {dimension_numbers = #tpu.dot_dimension_numbers<[1], [0], [0], [1], [0, 0, 1, 1], [], []>} : vector<2x1296xbf16>, vector<1296x512xbf16>, vector<2x512xf32> -> vector<2x512xf32>
    %8 = arith.maximumf %5, %7 : vector<2x512xf32>
    %c0_7 = arith.constant 0 : index
    %c73 = arith.constant 73 : index
    %9 = vector.load %arg1[%c0_7, %c73] : memref<2x1408xbf16, #tpu.memory_space<vmem>>, vector<2x1296xbf16>
    %cst_8 = arith.constant dense<0.000000e+00> : vector<2x512xf32>
    %10 = tpu.matmul %9, %0, %cst_8 {dimension_numbers = #tpu.dot_dimension_numbers<[1], [0], [0], [1], [0, 0, 1, 1], [], []>} : vector<2x1296xbf16>, vector<1296x512xbf16>, vector<2x512xf32> -> vector<2x512xf32>
    %11 = arith.maximumf %8, %10 : vector<2x512xf32>
    %c0_9 = arith.constant 0 : index
    %c0_10 = arith.constant 0 : index
    %12 = vector.load %arg3[%c0_9, %c0_10] : memref<1x512xf32, #tpu.memory_space<vmem>>, vector<1x512xf32>
    %13 = vector.broadcast %12 : vector<1x512xf32> to vector<2x512xf32>
    %14 = arith.addf %11, %13 : vector<2x512xf32>
    %cst_11 = arith.constant 0.000000e+00 : f32
    %15 = vector.broadcast %cst_11 : f32 to vector<2x512xf32>
    %16 = arith.maximumf %14, %15 : vector<2x512xf32>
    %17 = arith.truncf %16 : vector<2x512xf32> to vector<2x512xbf16>
    %c0_12 = arith.constant 0 : index
    %c0_13 = arith.constant 0 : index
    %18 = vector.load %arg4[%c0_12, %c0_13] : memref<512x128xbf16, #tpu.memory_space<vmem>>, vector<512x128xbf16>
    %cst_14 = arith.constant dense<0.000000e+00> : vector<2x128xf32>
    %19 = tpu.matmul %17, %18, %cst_14 {dimension_numbers = #tpu.dot_dimension_numbers<[1], [0], [0], [1], [0, 0, 1, 1], [], []>} : vector<2x512xbf16>, vector<512x128xbf16>, vector<2x128xf32> -> vector<2x128xf32>
    %c0_15 = arith.constant 0 : index
    %c0_16 = arith.constant 0 : index
    %20 = vector.load %arg5[%c0_15, %c0_16] : memref<1x128xf32, #tpu.memory_space<vmem>>, vector<1x128xf32>
    %21 = vector.broadcast %20 : vector<1x128xf32> to vector<2x128xf32>
    %22 = arith.addf %19, %21 : vector<2x128xf32>
    %23 = tpu.iota {dimensions = array<i32: 1>} : vector<2x128xi32>
    %c10_i32 = arith.constant 10 : i32
    %24 = vector.broadcast %c10_i32 : i32 to vector<2x128xi32>
    %25 = arith.cmpi slt, %23, %24 : vector<2x128xi32>
    %cst_17 = arith.constant -1.000000e+30 : f32
    %26 = vector.broadcast %cst_17 : f32 to vector<2x128xf32>
    %27 = arith.select %25, %22, %26 : vector<2x128xi1>, vector<2x128xf32>
    %cst_18 = arith.constant dense<0xFF800000> : vector<2xf32>
    %28 = vector.multi_reduction <maximumf>, %27, %cst_18 [1] : vector<2x128xf32> to vector<2xf32>
    %29 = vector.shape_cast %28 : vector<2xf32> to vector<2x1xf32>
    %30 = vector.broadcast %29 : vector<2x1xf32> to vector<2x128xf32>
    %31 = arith.subf %27, %30 : vector<2x128xf32>
    %32 = math.exp %31 : vector<2x128xf32>
    %cst_19 = arith.constant 0.000000e+00 : f32
    %33 = vector.broadcast %cst_19 : f32 to vector<2x128xf32>
    %34 = arith.select %25, %32, %33 : vector<2x128xi1>, vector<2x128xf32>
    %cst_20 = arith.constant dense<0.000000e+00> : vector<2xf32>
    %35 = vector.multi_reduction <add>, %34, %cst_20 [1] : vector<2x128xf32> to vector<2xf32>
    %36 = vector.shape_cast %35 : vector<2xf32> to vector<2x1xf32>
    %37 = tpu.reciprocal %36 {approx = true} : vector<2x1xf32> -> vector<2x1xf32>
    %38 = vector.broadcast %37 : vector<2x1xf32> to vector<2x128xf32>
    %39 = arith.mulf %34, %38 : vector<2x128xf32>
    %c0_21 = arith.constant 0 : index
    %c0_22 = arith.constant 0 : index
    %40 = vector.load %arg6[%c0_21, %c0_22] : memref<2x128xf32, #tpu.memory_space<vmem>>, vector<2x128xf32>
    tpu.vector_store %arg6[%c0_21, %c0_22], %39 {strides = array<i32>} : memref<2x128xf32, #tpu.memory_space<vmem>>, vector<2x128xf32>,
    return
  }
  func.func @transform_0(%arg0: i32) -> (i32, i32) {
    %c0_i32 = arith.constant 0 : i32
    %c0_i32_0 = arith.constant 0 : i32
    return %arg0, %c0_i32 : i32, i32
  }
  func.func @transform_1(%arg0: i32) -> (i32, i32) {
    %c0_i32 = arith.constant 0 : i32
    %c0_i32_0 = arith.constant 0 : i32
    %c0_i32_1 = arith.constant 0 : i32
    return %c0_i32, %c0_i32_0 : i32, i32
  }
  func.func @transform_2(%arg0: i32) -> (i32, i32) {
    %c0_i32 = arith.constant 0 : i32
    %c0_i32_0 = arith.constant 0 : i32
    %c0_i32_1 = arith.constant 0 : i32
    return %c0_i32, %c0_i32_0 : i32, i32
  }
  func.func @transform_3(%arg0: i32) -> (i32, i32) {
    %c0_i32 = arith.constant 0 : i32
    %c0_i32_0 = arith.constant 0 : i32
    %c0_i32_1 = arith.constant 0 : i32
    return %c0_i32, %c0_i32_0 : i32, i32
  }
  func.func @transform_4(%arg0: i32) -> (i32, i32) {
    %c0_i32 = arith.constant 0 : i32
    %c0_i32_0 = arith.constant 0 : i32
    %c0_i32_1 = arith.constant 0 : i32
    return %c0_i32, %c0_i32_0 : i32, i32
  }
  func.func @transform_5(%arg0: i32) -> (i32, i32) {
    %c0_i32 = arith.constant 0 : i32
    %c0_i32_0 = arith.constant 0 : i32
    return %arg0, %c0_i32 : i32, i32
  }
}

</mosaic_0001>

<llo_original>
// kernel: model_forward.1
$region0: #{model_forward.1}
  #allocation0 [shape = 'u32[]', space=smem, size = 0x4, offset = 0x4, fixed_abs, tag = 'smem constant byte address 0x4 - core index']
  #allocation1 [shape = 'u32[144,128]{1,0:T(1,128)}', space=vmem, size = 0x12000, scoped, tag = 'internal scratch']
  %s0 = inlined_call_operand.vmem [shape: bf16[2,1408], index: 0, kind: input, shape index: {}]
  %s1 = inlined_call_operand.hbm [shape: bf16[1296,512], index: 1, kind: input, shape index: {}]
  %s2 = inlined_call_operand.hbm [shape: f32[1,512], index: 2, kind: input, shape index: {}]
  %s3 = inlined_call_operand.hbm [shape: bf16[512,128], index: 3, kind: input, shape index: {}]
  %s4 = inlined_call_operand.hbm [shape: f32[1,128], index: 4, kind: input, shape index: {}]
  %s5 = inlined_call_operand.hbm [shape: f32[2,128], index: 5, kind: output, shape index: {}]
  %s6 = sld [smem:[#allocation0]]
  $region46: #{model_forward.1} parent=0
    _
  %s8 = ssub.s32 1, %s6
  %s9 = scalar_select 0, %s8, %s6
  $region1: #{model_forward.1} parent=0
    #allocation2 [shape = 'u8[1327104]{0}', space=vmem, size = 0x144000, scoped, tag = 'input window, operand 1, single buffered']
    #allocation3 [shape = 's32[1]{0}', space=sflag, size = 0x4, scoped, tag = 'scoped memory for model_forward.1']
    #allocation4 [shape = 's32[1]{0}', space=sflag, size = 0x4, scoped, tag = 'scoped memory for model_forward.1']
    #allocation5 [shape = 'u8[2048]{0}', space=vmem, size = 0x800, scoped, tag = 'input window, operand 2, single buffered']
    #allocation6 [shape = 's32[1]{0}', space=sflag, size = 0x4, scoped, tag = 'scoped memory for model_forward.1']
    #allocation7 [shape = 'u8[131072]{0}', space=vmem, size = 0x20000, scoped, tag = 'input window, operand 3, single buffered']
    #allocation8 [shape = 'u8[512]{0}', space=vmem, size = 0x400, scoped, tag = 'input window, operand 4, single buffered']
    #allocation9 [shape = 's32[1]{0}', space=sflag, size = 0x4, scoped, tag = 'scoped memory for model_forward.1']
    #allocation10 [shape = 'u8[1024]{0}', space=vmem, size = 0x400, scoped, tag = 'output window, operand 0, single buffered']
    %10 = vsyncpa [#allocation3], 0
    %11 = vsyncpa [#allocation6], 0
    %12 = vsyncpa [#allocation9], 0
    %13 = vsyncpa [#allocation4], 0
    // Predicated region
    $region2: #{model_forward.1} parent=1 // pred_check
      _
    $region3: #{model_forward.1} parent=1 // pred_check_branch
      %15 = sbr.rel (0) target = $region5
    $region4: #{model_forward.1} parent=1 // pred_region
      _
    $region5: #{model_forward.1} parent=1 // pred_fallthru
      _
    // Predicated region
    $region6: #{model_forward.1} parent=1 // pred_check
      _
    $region7: #{model_forward.1} parent=1 // pred_check_branch
      %17 = sbr.rel (0) target = $region9
    $region8: #{model_forward.1} parent=1 // pred_region
      %s19 = ssub.s32 41472, 41472
      %20 = vsyncadd [#allocation3], %s19
      %s21 = sshll.u32 [#allocation2], 4
      %s22 = int_to_ptr.vmem [resolvable:$true] %s21
      %27 = dma.hbm_to_vmem [thread:$0]  %s1, 41472, %s22, [#allocation3], 256, 256, 16
    $region9: #{model_forward.1} parent=1 // pred_fallthru
      _
    // Predicated region
    $region10: #{model_forward.1} parent=1 // pred_check
      _
    $region11: #{model_forward.1} parent=1 // pred_check_branch
      %29 = sbr.rel (0) target = $region13
    $region12: #{model_forward.1} parent=1 // pred_region
      %s31 = ssub.s32 64, 64
      %32 = vsyncadd [#allocation6], %s31
      %s34 = sshll.u32 [#allocation5], 4
      %s35 = int_to_ptr.vmem [resolvable:$true] %s34
      %37 = dma.hbm_to_vmem [thread:$0]  %s2, 64, %s35, [#allocation6]
    $region13: #{model_forward.1} parent=1 // pred_fallthru
      _
    // Predicated region
    $region14: #{model_forward.1} parent=1 // pred_check
      _
    $region15: #{model_forward.1} parent=1 // pred_check_branch
      %39 = sbr.rel (0) target = $region17
    $region16: #{model_forward.1} parent=1 // pred_region
      %s41 = ssub.s32 4096, 4096
      %42 = vsyncadd [#allocation6], %s41
      %s43 = sshll.u32 [#allocation7], 4
      %s44 = int_to_ptr.vmem [resolvable:$true] %s43
      %49 = dma.hbm_to_vmem [thread:$0]  %s3, 4096, %s44, [#allocation6], 64, 64, 4
    $region17: #{model_forward.1} parent=1 // pred_fallthru
      _
    // Predicated region
    $region18: #{model_forward.1} parent=1 // pred_check
      _
    $region19: #{model_forward.1} parent=1 // pred_check_branch
      %51 = sbr.rel (0) target = $region21
    $region20: #{model_forward.1} parent=1 // pred_region
      %s53 = ssub.s32 16, 16
      %54 = vsyncadd [#allocation9], %s53
      %s56 = sshll.u32 [#allocation8], 4
      %s57 = int_to_ptr.vmem [resolvable:$true] %s56
      %59 = dma.hbm_to_vmem [thread:$0]  %s4, 16, %s57, [#allocation9]
    $region21: #{model_forward.1} parent=1 // pred_fallthru
      _
    // Predicated region
    $region22: #{model_forward.1} parent=1 // pred_check
      _
    $region23: #{model_forward.1} parent=1 // pred_check_branch
      %61 = sbr.rel (0) target = $region25
    $region24: #{model_forward.1} parent=1 // pred_region
      %62 = dma.done [#allocation3], 41472
    $region25: #{model_forward.1} parent=1 // pred_fallthru
      _
    // Predicated region
    $region26: #{model_forward.1} parent=1 // pred_check
      _
    $region27: #{model_forward.1} parent=1 // pred_check_branch
      %64 = sbr.rel (0) target = $region29
    $region28: #{model_forward.1} parent=1 // pred_region
      %65 = dma.done [#allocation6], 64
    $region29: #{model_forward.1} parent=1 // pred_fallthru
      _
    // Predicated region
    $region30: #{model_forward.1} parent=1 // pred_check
      _
    $region31: #{model_forward.1} parent=1 // pred_check_branch
      %67 = sbr.rel (0) target = $region33
    $region32: #{model_forward.1} parent=1 // pred_region
      %68 = dma.done [#allocation6], 4096
    $region33: #{model_forward.1} parent=1 // pred_fallthru
      _
    // Predicated region
    $region34: #{model_forward.1} parent=1 // pred_check
      _
    $region35: #{model_forward.1} parent=1 // pred_check_branch
      %70 = sbr.rel (0) target = $region37
    $region36: #{model_forward.1} parent=1 // pred_region
      %71 = dma.done [#allocation9], 16
    $region37: #{model_forward.1} parent=1 // pred_fallthru
      _
    %v73 = vld [vmem:[#allocation2] sm:$0xff]
    %v74 = vld [vmem:[#allocation2 + $0x8] sm:$0xff]
    %v75 = vld [vmem:[#allocation2 + $0x10] sm:$0xff]
    %v76 = vld [vmem:[#allocation2 + $0x18] sm:$0xff]
    %v77 = vld [vmem:[#allocation2 + $0x20] sm:$0xff]
    %v78 = vld [vmem:[#allocation2 + $0x28] sm:$0xff]
    %v79 = vld [vmem:[#allocation2 + $0x30] sm:$0xff]
    %v80 = vld [vmem:[#allocation2 + $0x38] sm:$0xff]
    %v81 = vld [vmem:[#allocation2 + $0x40] sm:$0xff]
    %v82 = vld [vmem:[#allocation2 + $0x48] sm:$0xff]
    %v83 = vld [vmem:[#allocation2 + $0x50] sm:$0xff]
    %v84 = vld [vmem:[#allocation2 + $0x58] sm:$0xff]
    %v85 = vld [vmem:[#allocation2 + $0x60] sm:$0xff]
    %v86 = vld [vmem:[#allocation2 + $0x68] sm:$0xff]
    %v87 = vld [vmem:[#allocation2 + $0x70] sm:$0xff]
    %v88 = vld [vmem:[#allocation2 + $0x78] sm:$0xff]
    %v89 = vld [vmem:[#allocation2 + $0x80] sm:$0xff]
    %v90 = vld [vmem:[#allocation2 + $0x88] sm:$0xff]
    %v91 = vld [vmem:[#allocation2 + $0x90] sm:$0xff]
    %v92 = vld [vmem:[#allocation2 + $0x98] sm:$0xff]
    %v93 = vld [vmem:[#allocation2 + $0xa0] sm:$0xff]
    %v94 = vld [vmem:[#allocation2 + $0xa8] sm:$0xff]
    %v95 = vld [vmem:[#allocation2 + $0xb0] sm:$0xff]
    %v96 = vld [vmem:[#allocation2 + $0xb8] sm:$0xff]
    %v97 = vld [vmem:[#allocation2 + $0xc0] sm:$0xff]
    %v98 = vld [vmem:[#allocation2 + $0xc8] sm:$0xff]
    %v99 = vld [vmem:[#allocation2 + $0xd0] sm:$0xff]
    %v100 = vld [vmem:[#allocation2 + $0xd8] sm:$0xff]
    %v101 = vld [vmem:[#allocation2 + $0xe0] sm:$0xff]
    %v102 = vld [vmem:[#allocation2 + $0xe8] sm:$0xff]
    %v103 = vld [vmem:[#allocation2 + $0xf0] sm:$0xff]
    %v104 = vld [vmem:[#allocation2 + $0xf8] sm:$0xff]
    %v105 = vld [vmem:[#allocation2 + $0x100] sm:$0xff]
    %v106 = vld [vmem:[#allocation2 + $0x108] sm:$0xff]
    %v107 = vld [vmem:[#allocation2 + $0x110] sm:$0xff]
    %v108 = vld [vmem:[#allocation2 + $0x118] sm:$0xff]
    %v109 = vld [vmem:[#allocation2 + $0x120] sm:$0xff]
    %v110 = vld [vmem:[#allocation2 + $0x128] sm:$0xff]
    %v111 = vld [vmem:[#allocation2 + $0x130] sm:$0xff]
    %v112 = vld [vmem:[#allocation2 + $0x138] sm:$0xff]
    %v113 = vld [vmem:[#allocation2 + $0x140] sm:$0xff]
    %v114 = vld [vmem:[#allocation2 + $0x148] sm:$0xff]
    %v115 = vld [vmem:[#allocation2 + $0x150] sm:$0xff]
    %v116 = vld [vmem:[#allocation2 + $0x158] sm:$0xff]
    %v117 = vld [vmem:[#allocation2 + $0x160] sm:$0xff]
    %v118 = vld [vmem:[#allocation2 + $0x168] sm:$0xff]
    %v119 = vld [vmem:[#allocation2 + $0x170] sm:$0xff]
    %v120 = vld [vmem:[#allocation2 + $0x178] sm:$0xff]
    %v121 = vld [vmem:[#allocation2 + $0x180] sm:$0xff]
    %v122 = vld [vmem:[#allocation2 + $0x188] sm:$0xff]
    %v123 = vld [vmem:[#allocation2 + $0x190] sm:$0xff]
    %v124 = vld [vmem:[#allocation2 + $0x198] sm:$0xff]
    %v125 = vld [vmem:[#allocation2 + $0x1a0] sm:$0xff]
    %v126 = vld [vmem:[#allocation2 + $0x1a8] sm:$0xff]
    %v127 = vld [vmem:[#allocation2 + $0x1b0] sm:$0xff]
    %v128 = vld [vmem:[#allocation2 + $0x1b8] sm:$0xff]
    %v129 = vld [vmem:[#allocation2 + $0x1c0] sm:$0xff]
    %v130 = vld [vmem:[#allocation2 + $0x1c8] sm:$0xff]
    %v131 = vld [vmem:[#allocation2 + $0x1d0] sm:$0xff]
    %v132 = vld [vmem:[#allocation2 + $0x1d8] sm:$0xff]
    %v133 = vld [vmem:[#allocation2 + $0x1e0] sm:$0xff]
    %v134 = vld [vmem:[#allocation2 + $0x1e8] sm:$0xff]
    %v135 = vld [vmem:[#allocation2 + $0x1f0] sm:$0xff]
    %v136 = vld [vmem:[#allocation2 + $0x1f8] sm:$0xff]
    %v137 = vld [vmem:[#allocation2 + $0x200] sm:$0xff]
    %v138 = vld [vmem:[#allocation2 + $0x208] sm:$0xff]
    %v139 = vld [vmem:[#allocation2 + $0x210] sm:$0xff]
    %v140 = vld [vmem:[#allocation2 + $0x218] sm:$0xff]
    %v141 = vld [vmem:[#allocation2 + $0x220] sm:$0xff]
    %v142 = vld [vmem:[#allocation2 + $0x228] sm:$0xff]
    %v143 = vld [vmem:[#allocation2 + $0x230] sm:$0xff]
    %v144 = vld [vmem:[#allocation2 + $0x238] sm:$0xff]
    %v145 = vld [vmem:[#allocation2 + $0x240] sm:$0xff]
    %v146 = vld [vmem:[#allocation2 + $0x248] sm:$0xff]
    %v147 = vld [vmem:[#allocation2 + $0x250] sm:$0xff]
    %v148 = vld [vmem:[#allocation2 + $0x258] sm:$0xff]
    %v149 = vld [vmem:[#allocation2 + $0x260] sm:$0xff]
    %v150 = vld [vmem:[#allocation2 + $0x268] sm:$0xff]
    %v151 = vld [vmem:[#allocation2 + $0x270] sm:$0xff]
    %v152 = vld [vmem:[#allocation2 + $0x278] sm:$0xff]
    %v153 = vld [vmem:[#allocation2 + $0x280] sm:$0xff]
    %v154 = vld [vmem:[#allocation2 + $0x288] sm:$0xff]
    %v155 = vld [vmem:[#allocation2 + $0x290] sm:$0xff]
    %v156 = vld [vmem:[#allocation2 + $0x298] sm:$0xff]
    %v157 = vld [vmem:[#allocation2 + $0x2a0] sm:$0xff]
    %v158 = vld [vmem:[#allocation2 + $0x2a8] sm:$0xff]
    %v159 = vld [vmem:[#allocation2 + $0x2b0] sm:$0xff]
    %v160 = vld [vmem:[#allocation2 + $0x2b8] sm:$0xff]
    %v161 = vld [vmem:[#allocation2 + $0x2c0] sm:$0xff]
    %v162 = vld [vmem:[#allocation2 + $0x2c8] sm:$0xff]
    %v163 = vld [vmem:[#allocation2 + $0x2d0] sm:$0xff]
    %v164 = vld [vmem:[#allocation2 + $0x2d8] sm:$0xff]
    %v165 = vld [vmem:[#allocation2 + $0x2e0] sm:$0xff]
    %v166 = vld [vmem:[#allocation2 + $0x2e8] sm:$0xff]
    %v167 = vld [vmem:[#allocation2 + $0x2f0] sm:$0xff]
    %v168 = vld [vmem:[#allocation2 + $0x2f8] sm:$0xff]
    %v169 = vld [vmem:[#allocation2 + $0x300] sm:$0xff]
    %v170 = vld [vmem:[#allocation2 + $0x308] sm:$0xff]
    %v171 = vld [vmem:[#allocation2 + $0x310] sm:$0xff]
    %v172 = vld [vmem:[#allocation2 + $0x318] sm:$0xff]
    %v173 = vld [vmem:[#allocation2 + $0x320] sm:$0xff]
    %v174 = vld [vmem:[#allocation2 + $0x328] sm:$0xff]
    %v175 = vld [vmem:[#allocation2 + $0x330] sm:$0xff]
    %v176 = vld [vmem:[#allocation2 + $0x338] sm:$0xff]
    %v177 = vld [vmem:[#allocation2 + $0x340] sm:$0xff]
    %v178 = vld [vmem:[#allocation2 + $0x348] sm:$0xff]
    %v179 = vld [vmem:[#allocation2 + $0x350] sm:$0xff]
    %v180 = vld [vmem:[#allocation2 + $0x358] sm:$0xff]
    %v181 = vld [vmem:[#allocation2 + $0x360] sm:$0xff]
    %v182 = vld [vmem:[#allocation2 + $0x368] sm:$0xff]
    %v183 = vld [vmem:[#allocation2 + $0x370] sm:$0xff]
    %v184 = vld [vmem:[#allocation2 + $0x378] sm:$0xff]
    %v185 = vld [vmem:[#allocation2 + $0x380] sm:$0xff]
    %v186 = vld [vmem:[#allocation2 + $0x388] sm:$0xff]
    %v187 = vld [vmem:[#allocation2 + $0x390] sm:$0xff]
    %v188 = vld [vmem:[#allocation2 + $0x398] sm:$0xff]
    %v189 = vld [vmem:[#allocation2 + $0x3a0] sm:$0xff]
    %v190 = vld [vmem:[#allocation2 + $0x3a8] sm:$0xff]
    %v191 = vld [vmem:[#allocation2 + $0x3b0] sm:$0xff]
    %v192 = vld [vmem:[#allocation2 + $0x3b8] sm:$0xff]
    %v193 = vld [vmem:[#allocation2 + $0x3c0] sm:$0xff]
    %v194 = vld [vmem:[#allocation2 + $0x3c8] sm:$0xff]
    %v195 = vld [vmem:[#allocation2 + $0x3d0] sm:$0xff]
    %v196 = vld [vmem:[#allocation2 + $0x3d8] sm:$0xff]
    %v197 = vld [vmem:[#allocation2 + $0x3e0] sm:$0xff]
    %v198 = vld [vmem:[#allocation2 + $0x3e8] sm:$0xff]
    %v199 = vld [vmem:[#allocation2 + $0x3f0] sm:$0xff]
    %v200 = vld [vmem:[#allocation2 + $0x3f8] sm:$0xff]
    %v201 = vld [vmem:[#allocation2 + $0x400] sm:$0xff]
    %v202 = vld [vmem:[#allocation2 + $0x408] sm:$0xff]
    %v203 = vld [vmem:[#allocation2 + $0x410] sm:$0xff]
    %v204 = vld [vmem:[#allocation2 + $0x418] sm:$0xff]
    %v205 = vld [vmem:[#allocation2 + $0x420] sm:$0xff]
    %v206 = vld [vmem:[#allocation2 + $0x428] sm:$0xff]
    %v207 = vld [vmem:[#allocation2 + $0x430] sm:$0xff]
    %v208 = vld [vmem:[#allocation2 + $0x438] sm:$0xff]
    %v209 = vld [vmem:[#allocation2 + $0x440] sm:$0xff]
    %v210 = vld [vmem:[#allocation2 + $0x448] sm:$0xff]
    %v211 = vld [vmem:[#allocation2 + $0x450] sm:$0xff]
    %v212 = vld [vmem:[#allocation2 + $0x458] sm:$0xff]
    %v213 = vld [vmem:[#allocation2 + $0x460] sm:$0xff]
    %v214 = vld [vmem:[#allocation2 + $0x468] sm:$0xff]
    %v215 = vld [vmem:[#allocation2 + $0x470] sm:$0xff]
    %v216 = vld [vmem:[#allocation2 + $0x478] sm:$0xff]
    %v217 = vld [vmem:[#allocation2 + $0x480] sm:$0xff]
    %v218 = vld [vmem:[#allocation2 + $0x488] sm:$0xff]
    %v219 = vld [vmem:[#allocation2 + $0x490] sm:$0xff]
    %v220 = vld [vmem:[#allocation2 + $0x498] sm:$0xff]
    %v221 = vld [vmem:[#allocation2 + $0x4a0] sm:$0xff]
    %v222 = vld [vmem:[#allocation2 + $0x4a8] sm:$0xff]
    %v223 = vld [vmem:[#allocation2 + $0x4b0] sm:$0xff]
    %v224 = vld [vmem:[#allocation2 + $0x4b8] sm:$0xff]
    %v225 = vld [vmem:[#allocation2 + $0x4c0] sm:$0xff]
    %v226 = vld [vmem:[#allocation2 + $0x4c8] sm:$0xff]
    %v227 = vld [vmem:[#allocation2 + $0x4d0] sm:$0xff]
    %v228 = vld [vmem:[#allocation2 + $0x4d8] sm:$0xff]
    %v229 = vld [vmem:[#allocation2 + $0x4e0] sm:$0xff]
    %v230 = vld [vmem:[#allocation2 + $0x4e8] sm:$0xff]
    %v231 = vld [vmem:[#allocation2 + $0x4f0] sm:$0xff]
    %v232 = vld [vmem:[#allocation2 + $0x4f8] sm:$0xff]
    %v233 = vld [vmem:[#allocation2 + $0x500] sm:$0xff]
    %v234 = vld [vmem:[#allocation2 + $0x508] sm:$0xff]
    %v235 = vld [vmem:[#allocation2 + $0x510] sm:$0xff]
    %v236 = vld [vmem:[#allocation2 + $0x518] sm:$0xff]
    %v237 = vld [vmem:[#allocation2 + $0x520] sm:$0xff]
    %v238 = vld [vmem:[#allocation2 + $0x528] sm:$0xff]
    %v239 = vld [vmem:[#allocation2 + $0x530] sm:$0xff]
    %v240 = vld [vmem:[#allocation2 + $0x538] sm:$0xff]
    %v241 = vld [vmem:[#allocation2 + $0x540] sm:$0xff]
    %v242 = vld [vmem:[#allocation2 + $0x548] sm:$0xff]
    %v243 = vld [vmem:[#allocation2 + $0x550] sm:$0xff]
    %v244 = vld [vmem:[#allocation2 + $0x558] sm:$0xff]
    %v245 = vld [vmem:[#allocation2 + $0x560] sm:$0xff]
    %v246 = vld [vmem:[#allocation2 + $0x568] sm:$0xff]
    %v247 = vld [vmem:[#allocation2 + $0x570] sm:$0xff]
    %v248 = vld [vmem:[#allocation2 + $0x578] sm:$0xff]
    %v249 = vld [vmem:[#allocation2 + $0x580] sm:$0xff]
    %v250 = vld [vmem:[#allocation2 + $0x588] sm:$0xff]
    %v251 = vld [vmem:[#allocation2 + $0x590] sm:$0xff]
    %v252 = vld [vmem:[#allocation2 + $0x598] sm:$0xff]
    %v253 = vld [vmem:[#allocation2 + $0x5a0] sm:$0xff]
    %v254 = vld [vmem:[#allocation2 + $0x5a8] sm:$0xff]
    %v255 = vld [vmem:[#allocation2 + $0x5b0] sm:$0xff]
    %v256 = vld [vmem:[#allocation2 + $0x5b8] sm:$0xff]
    %v257 = vld [vmem:[#allocation2 + $0x5c0] sm:$0xff]
    %v258 = vld [vmem:[#allocation2 + $0x5c8] sm:$0xff]
    %v259 = vld [vmem:[#allocation2 + $0x5d0] sm:$0xff]
    %v260 = vld [vmem:[#allocation2 + $0x5d8] sm:$0xff]
    %v261 = vld [vmem:[#allocation2 + $0x5e0] sm:$0xff]
    %v262 = vld [vmem:[#allocation2 + $0x5e8] sm:$0xff]
    %v263 = vld [vmem:[#allocation2 + $0x5f0] sm:$0xff]
    %v264 = vld [vmem:[#allocation2 + $0x5f8] sm:$0xff]
    %v265 = vld [vmem:[#allocation2 + $0x600] sm:$0xff]
    %v266 = vld [vmem:[#allocation2 + $0x608] sm:$0xff]
    %v267 = vld [vmem:[#allocation2 + $0x610] sm:$0xff]
    %v268 = vld [vmem:[#allocation2 + $0x618] sm:$0xff]
    %v269 = vld [vmem:[#allocation2 + $0x620] sm:$0xff]
    %v270 = vld [vmem:[#allocation2 + $0x628] sm:$0xff]
    %v271 = vld [vmem:[#allocation2 + $0x630] sm:$0xff]
    %v272 = vld [vmem:[#allocation2 + $0x638] sm:$0xff]
    %v273 = vld [vmem:[#allocation2 + $0x640] sm:$0xff]
    %v274 = vld [vmem:[#allocation2 + $0x648] sm:$0xff]
    %v275 = vld [vmem:[#allocation2 + $0x650] sm:$0xff]
    %v276 = vld [vmem:[#allocation2 + $0x658] sm:$0xff]
    %v277 = vld [vmem:[#allocation2 + $0x660] sm:$0xff]
    %v278 = vld [vmem:[#allocation2 + $0x668] sm:$0xff]
    %v279 = vld [vmem:[#allocation2 + $0x670] sm:$0xff]
    %v280 = vld [vmem:[#allocation2 + $0x678] sm:$0xff]
    %v281 = vld [vmem:[#allocation2 + $0x680] sm:$0xff]
    %v282 = vld [vmem:[#allocation2 + $0x688] sm:$0xff]
    %v283 = vld [vmem:[#allocation2 + $0x690] sm:$0xff]
    %v284 = vld [vmem:[#allocation2 + $0x698] sm:$0xff]
    %v285 = vld [vmem:[#allocation2 + $0x6a0] sm:$0xff]
    %v286 = vld [vmem:[#allocation2 + $0x6a8] sm:$0xff]
    %v287 = vld [vmem:[#allocation2 + $0x6b0] sm:$0xff]
    %v288 = vld [vmem:[#allocation2 + $0x6b8] sm:$0xff]
    %v289 = vld [vmem:[#allocation2 + $0x6c0] sm:$0xff]
    %v290 = vld [vmem:[#allocation2 + $0x6c8] sm:$0xff]
    %v291 = vld [vmem:[#allocation2 + $0x6d0] sm:$0xff]
    %v292 = vld [vmem:[#allocation2 + $0x6d8] sm:$0xff]
    %v293 = vld [vmem:[#allocation2 + $0x6e0] sm:$0xff]
    %v294 = vld [vmem:[#allocation2 + $0x6e8] sm:$0xff]
    %v295 = vld [vmem:[#allocation2 + $0x6f0] sm:$0xff]
    %v296 = vld [vmem:[#allocation2 + $0x6f8] sm:$0xff]
    %v297 = vld [vmem:[#allocation2 + $0x700] sm:$0xff]
    %v298 = vld [vmem:[#allocation2 + $0x708] sm:$0xff]
    %v299 = vld [vmem:[#allocation2 + $0x710] sm:$0xff]
    %v300 = vld [vmem:[#allocation2 + $0x718] sm:$0xff]
    %v301 = vld [vmem:[#allocation2 + $0x720] sm:$0xff]
    %v302 = vld [vmem:[#allocation2 + $0x728] sm:$0xff]
    %v303 = vld [vmem:[#allocation2 + $0x730] sm:$0xff]
    %v304 = vld [vmem:[#allocation2 + $0x738] sm:$0xff]
    %v305 = vld [vmem:[#allocation2 + $0x740] sm:$0xff]
    %v306 = vld [vmem:[#allocation2 + $0x748] sm:$0xff]
    %v307 = vld [vmem:[#allocation2 + $0x750] sm:$0xff]
    %v308 = vld [vmem:[#allocation2 + $0x758] sm:$0xff]
    %v309 = vld [vmem:[#allocation2 + $0x760] sm:$0xff]
    %v310 = vld [vmem:[#allocation2 + $0x768] sm:$0xff]
    %v311 = vld [vmem:[#allocation2 + $0x770] sm:$0xff]
    %v312 = vld [vmem:[#allocation2 + $0x778] sm:$0xff]
    %v313 = vld [vmem:[#allocation2 + $0x780] sm:$0xff]
    %v314 = vld [vmem:[#allocation2 + $0x788] sm:$0xff]
    %v315 = vld [vmem:[#allocation2 + $0x790] sm:$0xff]
    %v316 = vld [vmem:[#allocation2 + $0x798] sm:$0xff]
    %v317 = vld [vmem:[#allocation2 + $0x7a0] sm:$0xff]
    %v318 = vld [vmem:[#allocation2 + $0x7a8] sm:$0xff]
    %v319 = vld [vmem:[#allocation2 + $0x7b0] sm:$0xff]
    %v320 = vld [vmem:[#allocation2 + $0x7b8] sm:$0xff]
    %v321 = vld [vmem:[#allocation2 + $0x7c0] sm:$0xff]
    %v322 = vld [vmem:[#allocation2 + $0x7c8] sm:$0xff]
    %v323 = vld [vmem:[#allocation2 + $0x7d0] sm:$0xff]
    %v324 = vld [vmem:[#allocation2 + $0x7d8] sm:$0xff]
    %v325 = vld [vmem:[#allocation2 + $0x7e0] sm:$0xff]
    %v326 = vld [vmem:[#allocation2 + $0x7e8] sm:$0xff]
    %v327 = vld [vmem:[#allocation2 + $0x7f0] sm:$0xff]
    %v328 = vld [vmem:[#allocation2 + $0x7f8] sm:$0xff]
    %v329 = vld [vmem:[#allocation2 + $0x800] sm:$0xff]
    %v330 = vld [vmem:[#allocation2 + $0x808] sm:$0xff]
    %v331 = vld [vmem:[#allocation2 + $0x810] sm:$0xff]
    %v332 = vld [vmem:[#allocation2 + $0x818] sm:$0xff]
    %v333 = vld [vmem:[#allocation2 + $0x820] sm:$0xff]
    %v334 = vld [vmem:[#allocation2 + $0x828] sm:$0xff]
    %v335 = vld [vmem:[#allocation2 + $0x830] sm:$0xff]
    %v336 = vld [vmem:[#allocation2 + $0x838] sm:$0xff]
    %v337 = vld [vmem:[#allocation2 + $0x840] sm:$0xff]
    %v338 = vld [vmem:[#allocation2 + $0x848] sm:$0xff]
    %v339 = vld [vmem:[#allocation2 + $0x850] sm:$0xff]
    %v340 = vld [vmem:[#allocation2 + $0x858] sm:$0xff]
    %v341 = vld [vmem:[#allocation2 + $0x860] sm:$0xff]
    %v342 = vld [vmem:[#allocation2 + $0x868] sm:$0xff]
    %v343 = vld [vmem:[#allocation2 + $0x870] sm:$0xff]
    %v344 = vld [vmem:[#allocation2 + $0x878] sm:$0xff]
    %v345 = vld [vmem:[#allocation2 + $0x880] sm:$0xff]
    %v346 = vld [vmem:[#allocation2 + $0x888] sm:$0xff]
    %v347 = vld [vmem:[#allocation2 + $0x890] sm:$0xff]
    %v348 = vld [vmem:[#allocation2 + $0x898] sm:$0xff]
    %v349 = vld [vmem:[#allocation2 + $0x8a0] sm:$0xff]
    %v350 = vld [vmem:[#allocation2 + $0x8a8] sm:$0xff]
    %v351 = vld [vmem:[#allocation2 + $0x8b0] sm:$0xff]
    %v352 = vld [vmem:[#allocation2 + $0x8b8] sm:$0xff]
    %v353 = vld [vmem:[#allocation2 + $0x8c0] sm:$0xff]
    %v354 = vld [vmem:[#allocation2 + $0x8c8] sm:$0xff]
    %v355 = vld [vmem:[#allocation2 + $0x8d0] sm:$0xff]
    %v356 = vld [vmem:[#allocation2 + $0x8d8] sm:$0xff]
    %v357 = vld [vmem:[#allocation2 + $0x8e0] sm:$0xff]
    %v358 = vld [vmem:[#allocation2 + $0x8e8] sm:$0xff]
    %v359 = vld [vmem:[#allocation2 + $0x8f0] sm:$0xff]
    %v360 = vld [vmem:[#allocation2 + $0x8f8] sm:$0xff]
    %v361 = vld [vmem:[#allocation2 + $0x900] sm:$0xff]
    %v362 = vld [vmem:[#allocation2 + $0x908] sm:$0xff]
    %v363 = vld [vmem:[#allocation2 + $0x910] sm:$0xff]
    %v364 = vld [vmem:[#allocation2 + $0x918] sm:$0xff]
    %v365 = vld [vmem:[#allocation2 + $0x920] sm:$0xff]
    %v366 = vld [vmem:[#allocation2 + $0x928] sm:$0xff]
    %v367 = vld [vmem:[#allocation2 + $0x930] sm:$0xff]
    %v368 = vld [vmem:[#allocation2 + $0x938] sm:$0xff]
    %v369 = vld [vmem:[#allocation2 + $0x940] sm:$0xff]
    %v370 = vld [vmem:[#allocation2 + $0x948] sm:$0xff]
    %v371 = vld [vmem:[#allocation2 + $0x950] sm:$0xff]
    %v372 = vld [vmem:[#allocation2 + $0x958] sm:$0xff]
    %v373 = vld [vmem:[#allocation2 + $0x960] sm:$0xff]
    %v374 = vld [vmem:[#allocation2 + $0x968] sm:$0xff]
    %v375 = vld [vmem:[#allocation2 + $0x970] sm:$0xff]
    %v376 = vld [vmem:[#allocation2 + $0x978] sm:$0xff]
    %v377 = vld [vmem:[#allocation2 + $0x980] sm:$0xff]
    %v378 = vld [vmem:[#allocation2 + $0x988] sm:$0xff]
    %v379 = vld [vmem:[#allocation2 + $0x990] sm:$0xff]
    %v380 = vld [vmem:[#allocation2 + $0x998] sm:$0xff]
    %v381 = vld [vmem:[#allocation2 + $0x9a0] sm:$0xff]
    %v382 = vld [vmem:[#allocation2 + $0x9a8] sm:$0xff]
    %v383 = vld [vmem:[#allocation2 + $0x9b0] sm:$0xff]
    %v384 = vld [vmem:[#allocation2 + $0x9b8] sm:$0xff]
    %v385 = vld [vmem:[#allocation2 + $0x9c0] sm:$0xff]
    %v386 = vld [vmem:[#allocation2 + $0x9c8] sm:$0xff]
    %v387 = vld [vmem:[#allocation2 + $0x9d0] sm:$0xff]
    %v388 = vld [vmem:[#allocation2 + $0x9d8] sm:$0xff]
    %v389 = vld [vmem:[#allocation2 + $0x9e0] sm:$0xff]
    %v390 = vld [vmem:[#allocation2 + $0x9e8] sm:$0xff]
    %v391 = vld [vmem:[#allocation2 + $0x9f0] sm:$0xff]
    %v392 = vld [vmem:[#allocation2 + $0x9f8] sm:$0xff]
    %v393 = vld [vmem:[#allocation2 + $0xa00] sm:$0xff]
    %v394 = vld [vmem:[#allocation2 + $0xa08] sm:$0xff]
    %v395 = vld [vmem:[#allocation2 + $0xa10] sm:$0xff]
    %v396 = vld [vmem:[#allocation2 + $0xa18] sm:$0xff]
    %v397 = vld [vmem:[%s0] sm:$0xff]
    %v398 = vld [vmem:[%s0 + $0x8] sm:$0x7]
    %v401 = vcombine.high %v397, %v397
    %v403 = vunpack.c.l.s4 1966171168
    %v404 = vunpack.c.0.s8 %v403
    %v405 = vlaneseq
    %v406 = vshrl.u32 %v405, 7
    %v407 = vsub.s32 %v404, %v406
    %v408 = vrot.slane %v397, %v407
    %v410 = vunpack.c.l.s4 1966171168
    %v411 = vunpack.c.0.s8 %v410
    %v412 = vlaneseq
    %v413 = vshrl.u32 %v412, 7
    %v414 = vsub.s32 %v411, %v413
    %v415 = vrot.slane %v401, %v414
    %v416 = vcombine.high %v408, %v408
    %v417 = vcombine.high %v415, %v415
    %v419 = vunpack.c.l.s4 1966171168
    %v420 = vunpack.c.0.s8 %v419
    %v421 = vlaneseq
    %v422 = vshrl.u32 %v421, 7
    %v423 = vsub.s32 %v420, %v422
    %v424 = vrot.slane %v408, %v423
    %v426 = vunpack.c.l.s4 1966171168
    %v427 = vunpack.c.0.s8 %v426
    %v428 = vlaneseq
    %v429 = vshrl.u32 %v428, 7
    %v430 = vsub.s32 %v427, %v429
    %v431 = vrot.slane %v415, %v430
    %v433 = vunpack.c.l.s4 1966171168
    %v434 = vunpack.c.0.s8 %v433
    %v435 = vlaneseq
    %v436 = vshrl.u32 %v435, 7
    %v437 = vsub.s32 %v434, %v436
    %v438 = vrot.slane %v416, %v437
    %v440 = vunpack.c.l.s4 1966171168
    %v441 = vunpack.c.0.s8 %v440
    %v442 = vlaneseq
    %v443 = vshrl.u32 %v442, 7
    %v444 = vsub.s32 %v441, %v443
    %v445 = vrot.slane %v417, %v444
    %v446 = vcombine.high %v424, %v424
    %v447 = vcombine.high %v431, %v431
    %v448 = vcombine.high %v438, %v438
    %v449 = vcombine.high %v445, %v445
    %v451 = vunpack.c.l.s4 1966171168
    %v452 = vunpack.c.0.s8 %v451
    %v453 = vlaneseq
    %v454 = vshrl.u32 %v453, 7
    %v455 = vsub.s32 %v452, %v454
    %v456 = vrot.slane %v398, %v455
    %v457 = vcombine.high %v456, %v456
    %v459 = vunpack.c.l.s4 1966171168
    %v460 = vunpack.c.0.s8 %v459
    %v461 = vlaneseq
    %v462 = vshrl.u32 %v461, 7
    %v463 = vsub.s32 %v460, %v462
    %v464 = vrot.slane %v456, %v463
    %v466 = vunpack.c.l.s4 1966171168
    %v467 = vunpack.c.0.s8 %v466
    %v468 = vlaneseq
    %v469 = vshrl.u32 %v468, 7
    %v470 = vsub.s32 %v467, %v469
    %v471 = vrot.slane %v457, %v470
    %v472 = vcombine.high %v464, %v464
    %v807 = vunpack.c.l.b16 %v73
    %v808 = vunpack.c.h.b16 %v73
    %v809 = vunpack.c.l.b16 %v74
    %v810 = vunpack.c.h.b16 %v74
    %v811 = vunpack.c.l.b16 %v75
    %v812 = vunpack.c.h.b16 %v75
    %v813 = vunpack.c.l.b16 %v76
    %v814 = vunpack.c.h.b16 %v76
    %v815 = vunpack.c.l.b16 %v77
    %v816 = vunpack.c.h.b16 %v77
    %v817 = vunpack.c.l.b16 %v78
    %v818 = vunpack.c.h.b16 %v78
    %v819 = vunpack.c.l.b16 %v79
    %v820 = vunpack.c.h.b16 %v79
    %v821 = vunpack.c.l.b16 %v80
    %v822 = vunpack.c.h.b16 %v80
    %v823 = vunpack.c.l.b16 %v81
    %v824 = vunpack.c.h.b16 %v81
    %v825 = vunpack.c.l.b16 %v82
    %v826 = vunpack.c.h.b16 %v82
    %v827 = vunpack.c.l.b16 %v83
    %v828 = vunpack.c.h.b16 %v83
    %v829 = vunpack.c.l.b16 %v84
    %v830 = vunpack.c.h.b16 %v84
    %v831 = vunpack.c.l.b16 %v85
    %v832 = vunpack.c.h.b16 %v85
    %v833 = vunpack.c.l.b16 %v86
    %v834 = vunpack.c.h.b16 %v86
    %v835 = vunpack.c.l.b16 %v87
    %v836 = vunpack.c.h.b16 %v87
    %v837 = vunpack.c.l.b16 %v88
    %v838 = vunpack.c.h.b16 %v88
    %v839 = vunpack.c.l.b16 %v89
    %v840 = vunpack.c.h.b16 %v89
    %v841 = vunpack.c.l.b16 %v90
    %v842 = vunpack.c.h.b16 %v90
    %v843 = vunpack.c.l.b16 %v91
    %v844 = vunpack.c.h.b16 %v91
    %v845 = vunpack.c.l.b16 %v92
    %v846 = vunpack.c.h.b16 %v92
    %v847 = vunpack.c.l.b16 %v93
    %v848 = vunpack.c.h.b16 %v93
    %v849 = vunpack.c.l.b16 %v94
    %v850 = vunpack.c.h.b16 %v94
    %v851 = vunpack.c.l.b16 %v95
    %v852 = vunpack.c.h.b16 %v95
    %v853 = vunpack.c.l.b16 %v96
    %v854 = vunpack.c.h.b16 %v96
    %v855 = vunpack.c.l.b16 %v97
    %v856 = vunpack.c.h.b16 %v97
    %v857 = vunpack.c.l.b16 %v98
    %v858 = vunpack.c.h.b16 %v98
    %v859 = vunpack.c.l.b16 %v99
    %v860 = vunpack.c.h.b16 %v99
    %v861 = vunpack.c.l.b16 %v100
    %v862 = vunpack.c.h.b16 %v100
    %v863 = vunpack.c.l.b16 %v101
    %v864 = vunpack.c.h.b16 %v101
    %v865 = vunpack.c.l.b16 %v102
    %v866 = vunpack.c.h.b16 %v102
    %v867 = vunpack.c.l.b16 %v103
    %v868 = vunpack.c.h.b16 %v103
    %v869 = vunpack.c.l.b16 %v104
    %v870 = vunpack.c.h.b16 %v104
    %v871 = vunpack.c.l.b16 %v105
    %v872 = vunpack.c.h.b16 %v105
    %v873 = vunpack.c.l.b16 %v106
    %v874 = vunpack.c.h.b16 %v106
    %v875 = vunpack.c.l.b16 %v107
    %v876 = vunpack.c.h.b16 %v107
    %v877 = vunpack.c.l.b16 %v108
    %v878 = vunpack.c.h.b16 %v108
    %v879 = vunpack.c.l.b16 %v109
    %v880 = vunpack.c.h.b16 %v109
    %v881 = vunpack.c.l.b16 %v110
    %v882 = vunpack.c.h.b16 %v110
    %v883 = vunpack.c.l.b16 %v111
    %v884 = vunpack.c.h.b16 %v111
    %v885 = vunpack.c.l.b16 %v112
    %v886 = vunpack.c.h.b16 %v112
    %v887 = vunpack.c.l.b16 %v113
    %v888 = vunpack.c.h.b16 %v113
    %v889 = vunpack.c.l.b16 %v114
    %v890 = vunpack.c.h.b16 %v114
    %v891 = vunpack.c.l.b16 %v115
    %v892 = vunpack.c.h.b16 %v115
    %v893 = vunpack.c.l.b16 %v116
    %v894 = vunpack.c.h.b16 %v116
    %v895 = vunpack.c.l.b16 %v117
    %v896 = vunpack.c.h.b16 %v117
    %v897 = vunpack.c.l.b16 %v118
    %v898 = vunpack.c.h.b16 %v118
    %v899 = vunpack.c.l.b16 %v119
    %v900 = vunpack.c.h.b16 %v119
    %v901 = vunpack.c.l.b16 %v120
    %v902 = vunpack.c.h.b16 %v120
    %v903 = vunpack.c.l.b16 %v121
    %v904 = vunpack.c.h.b16 %v121
    %v905 = vunpack.c.l.b16 %v122
    %v906 = vunpack.c.h.b16 %v122
    %v907 = vunpack.c.l.b16 %v123
    %v908 = vunpack.c.h.b16 %v123
    %v909 = vunpack.c.l.b16 %v124
    %v910 = vunpack.c.h.b16 %v124
    %v911 = vunpack.c.l.b16 %v125
    %v912 = vunpack.c.h.b16 %v125
    %v913 = vunpack.c.l.b16 %v126
    %v914 = vunpack.c.h.b16 %v126
    %v915 = vunpack.c.l.b16 %v127
    %v916 = vunpack.c.h.b16 %v127
    %v917 = vunpack.c.l.b16 %v128
    %v918 = vunpack.c.h.b16 %v128
    %v919 = vunpack.c.l.b16 %v129
    %v920 = vunpack.c.h.b16 %v129
    %v921 = vunpack.c.l.b16 %v130
    %v922 = vunpack.c.h.b16 %v130
    %v923 = vunpack.c.l.b16 %v131
    %v924 = vunpack.c.h.b16 %v131
    %v925 = vunpack.c.l.b16 %v132
    %v926 = vunpack.c.h.b16 %v132
    %v927 = vunpack.c.l.b16 %v133
    %v928 = vunpack.c.h.b16 %v133
    %v929 = vunpack.c.l.b16 %v134
    %v930 = vunpack.c.h.b16 %v134
    %v931 = vunpack.c.l.b16 %v135
    %v932 = vunpack.c.h.b16 %v135
    %v933 = vunpack.c.l.b16 %v136
    %v934 = vunpack.c.h.b16 %v136
    %v935 = vunpack.c.l.b16 %v137
    %v936 = vunpack.c.h.b16 %v137
    %v937 = vunpack.c.l.b16 %v138
    %v938 = vunpack.c.h.b16 %v138
    %v939 = vunpack.c.l.b16 %v139
    %v940 = vunpack.c.h.b16 %v139
    %v941 = vunpack.c.l.b16 %v140
    %v942 = vunpack.c.h.b16 %v140
    %v943 = vunpack.c.l.b16 %v141
    %v944 = vunpack.c.h.b16 %v141
    %v945 = vunpack.c.l.b16 %v142
    %v946 = vunpack.c.h.b16 %v142
    %v947 = vunpack.c.l.b16 %v143
    %v948 = vunpack.c.h.b16 %v143
    %v949 = vunpack.c.l.b16 %v144
    %v950 = vunpack.c.h.b16 %v144
    %v951 = vunpack.c.l.b16 %v145
    %v952 = vunpack.c.h.b16 %v145
    %v953 = vunpack.c.l.b16 %v146
    %v954 = vunpack.c.h.b16 %v146
    %v955 = vunpack.c.l.b16 %v147
    %v956 = vunpack.c.h.b16 %v147
    %v957 = vunpack.c.l.b16 %v148
    %v958 = vunpack.c.h.b16 %v148
    %v959 = vunpack.c.l.b16 %v149
    %v960 = vunpack.c.h.b16 %v149
    %v961 = vunpack.c.l.b16 %v150
    %v962 = vunpack.c.h.b16 %v150
    %v963 = vunpack.c.l.b16 %v151
    %v964 = vunpack.c.h.b16 %v151
    %v965 = vunpack.c.l.b16 %v152
    %v966 = vunpack.c.h.b16 %v152
    %v967 = vunpack.c.l.b16 %v153
    %v968 = vunpack.c.h.b16 %v153
    %v969 = vunpack.c.l.b16 %v154
    %v970 = vunpack.c.h.b16 %v154
    %v971 = vunpack.c.l.b16 %v155
    %v972 = vunpack.c.h.b16 %v155
    %v973 = vunpack.c.l.b16 %v156
    %v974 = vunpack.c.h.b16 %v156
    %v975 = vunpack.c.l.b16 %v157
    %v976 = vunpack.c.h.b16 %v157
    %v977 = vunpack.c.l.b16 %v158
    %v978 = vunpack.c.h.b16 %v158
    %v979 = vunpack.c.l.b16 %v159
    %v980 = vunpack.c.h.b16 %v159
    %v981 = vunpack.c.l.b16 %v160
    %v982 = vunpack.c.h.b16 %v160
    %v983 = vunpack.c.l.b16 %v161
    %v984 = vunpack.c.h.b16 %v161
    %v985 = vunpack.c.l.b16 %v162
    %v986 = vunpack.c.h.b16 %v162
    %v987 = vunpack.c.l.b16 %v163
    %v988 = vunpack.c.h.b16 %v163
    %v989 = vunpack.c.l.b16 %v164
    %v990 = vunpack.c.h.b16 %v164
    %v991 = vunpack.c.l.b16 %v165
    %v992 = vunpack.c.h.b16 %v165
    %v993 = vunpack.c.l.b16 %v166
    %v994 = vunpack.c.h.b16 %v166
    %v995 = vunpack.c.l.b16 %v167
    %v996 = vunpack.c.h.b16 %v167
    %v997 = vunpack.c.l.b16 %v168
    %v998 = vunpack.c.h.b16 %v168
    %v999 = vunpack.c.l.b16 %v169
    %v1000 = vunpack.c.h.b16 %v169
    %v1001 = vunpack.c.l.b16 %v170
    %v1002 = vunpack.c.h.b16 %v170
    %v1003 = vunpack.c.l.b16 %v171
    %v1004 = vunpack.c.h.b16 %v171
    %v1005 = vunpack.c.l.b16 %v172
    %v1006 = vunpack.c.h.b16 %v172
    %v1007 = vunpack.c.l.b16 %v173
    %v1008 = vunpack.c.h.b16 %v173
    %v1009 = vunpack.c.l.b16 %v174
    %v1010 = vunpack.c.h.b16 %v174
    %v1011 = vunpack.c.l.b16 %v175
    %v1012 = vunpack.c.h.b16 %v175
    %v1013 = vunpack.c.l.b16 %v176
    %v1014 = vunpack.c.h.b16 %v176
    %v1015 = vunpack.c.l.b16 %v177
    %v1016 = vunpack.c.h.b16 %v177
    %v1017 = vunpack.c.l.b16 %v178
    %v1018 = vunpack.c.h.b16 %v178
    %v1019 = vunpack.c.l.b16 %v179
    %v1020 = vunpack.c.h.b16 %v179
    %v1021 = vunpack.c.l.b16 %v180
    %v1022 = vunpack.c.h.b16 %v180
    %v1023 = vunpack.c.l.b16 %v181
    %v1024 = vunpack.c.h.b16 %v181
    %v1025 = vunpack.c.l.b16 %v182
    %v1026 = vunpack.c.h.b16 %v182
    %v1027 = vunpack.c.l.b16 %v183
    %v1028 = vunpack.c.h.b16 %v183
    %v1029 = vunpack.c.l.b16 %v184
    %v1030 = vunpack.c.h.b16 %v184
    %v1031 = vunpack.c.l.b16 %v185
    %v1032 = vunpack.c.h.b16 %v185
    %v1033 = vunpack.c.l.b16 %v186
    %v1034 = vunpack.c.h.b16 %v186
    %v1035 = vunpack.c.l.b16 %v187
    %v1036 = vunpack.c.h.b16 %v187
    %v1037 = vunpack.c.l.b16 %v188
    %v1038 = vunpack.c.h.b16 %v188
    %v1039 = vunpack.c.l.b16 %v189
    %v1040 = vunpack.c.h.b16 %v189
    %v1041 = vunpack.c.l.b16 %v190
    %v1042 = vunpack.c.h.b16 %v190
    %v1043 = vunpack.c.l.b16 %v191
    %v1044 = vunpack.c.h.b16 %v191
    %v1045 = vunpack.c.l.b16 %v192
    %v1046 = vunpack.c.h.b16 %v192
    %v1047 = vunpack.c.l.b16 %v193
    %v1048 = vunpack.c.h.b16 %v193
    %v1049 = vunpack.c.l.b16 %v194
    %v1050 = vunpack.c.h.b16 %v194
    %v1051 = vunpack.c.l.b16 %v195
    %v1052 = vunpack.c.h.b16 %v195
    %v1053 = vunpack.c.l.b16 %v196
    %v1054 = vunpack.c.h.b16 %v196
    %v1055 = vunpack.c.l.b16 %v197
    %v1056 = vunpack.c.h.b16 %v197
    %v1057 = vunpack.c.l.b16 %v198
    %v1058 = vunpack.c.h.b16 %v198
    %v1059 = vunpack.c.l.b16 %v199
    %v1060 = vunpack.c.h.b16 %v199
    %v1061 = vunpack.c.l.b16 %v200
    %v1062 = vunpack.c.h.b16 %v200
    %v1063 = vunpack.c.l.b16 %v201
    %v1064 = vunpack.c.h.b16 %v201
    %v1065 = vunpack.c.l.b16 %v202
    %v1066 = vunpack.c.h.b16 %v202
    %v1067 = vunpack.c.l.b16 %v203
    %v1068 = vunpack.c.h.b16 %v203
    %v1069 = vunpack.c.l.b16 %v204
    %v1070 = vunpack.c.h.b16 %v204
    %v1071 = vunpack.c.l.b16 %v205
    %v1072 = vunpack.c.h.b16 %v205
    %v1073 = vunpack.c.l.b16 %v206
    %v1074 = vunpack.c.h.b16 %v206
    %v1075 = vunpack.c.l.b16 %v207
    %v1076 = vunpack.c.h.b16 %v207
    %v1077 = vunpack.c.l.b16 %v208
    %v1078 = vunpack.c.h.b16 %v208
    %v1079 = vunpack.c.l.b16 %v209
    %v1080 = vunpack.c.h.b16 %v209
    %v1081 = vunpack.c.l.b16 %v210
    %v1082 = vunpack.c.h.b16 %v210
    %v1083 = vunpack.c.l.b16 %v211
    %v1084 = vunpack.c.h.b16 %v211
    %v1085 = vunpack.c.l.b16 %v212
    %v1086 = vunpack.c.h.b16 %v212
    %v1087 = vunpack.c.l.b16 %v213
    %v1088 = vunpack.c.h.b16 %v213
    %v1089 = vunpack.c.l.b16 %v214
    %v1090 = vunpack.c.h.b16 %v214
    %v1091 = vunpack.c.l.b16 %v215
    %v1092 = vunpack.c.h.b16 %v215
    %v1093 = vunpack.c.l.b16 %v216
    %v1094 = vunpack.c.h.b16 %v216
    %v1095 = vunpack.c.l.b16 %v217
    %v1096 = vunpack.c.h.b16 %v217
    %v1097 = vunpack.c.l.b16 %v218
    %v1098 = vunpack.c.h.b16 %v218
    %v1099 = vunpack.c.l.b16 %v219
    %v1100 = vunpack.c.h.b16 %v219
    %v1101 = vunpack.c.l.b16 %v220
    %v1102 = vunpack.c.h.b16 %v220
    %v1103 = vunpack.c.l.b16 %v221
    %v1104 = vunpack.c.h.b16 %v221
    %v1105 = vunpack.c.l.b16 %v222
    %v1106 = vunpack.c.h.b16 %v222
    %v1107 = vunpack.c.l.b16 %v223
    %v1108 = vunpack.c.h.b16 %v223
    %v1109 = vunpack.c.l.b16 %v224
    %v1110 = vunpack.c.h.b16 %v224
    %v1111 = vunpack.c.l.b16 %v225
    %v1112 = vunpack.c.h.b16 %v225
    %v1113 = vunpack.c.l.b16 %v226
    %v1114 = vunpack.c.h.b16 %v226
    %v1115 = vunpack.c.l.b16 %v227
    %v1116 = vunpack.c.h.b16 %v227
    %v1117 = vunpack.c.l.b16 %v228
    %v1118 = vunpack.c.h.b16 %v228
    %v1119 = vunpack.c.l.b16 %v229
    %v1120 = vunpack.c.h.b16 %v229
    %v1121 = vunpack.c.l.b16 %v230
    %v1122 = vunpack.c.h.b16 %v230
    %v1123 = vunpack.c.l.b16 %v231
    %v1124 = vunpack.c.h.b16 %v231
    %v1125 = vunpack.c.l.b16 %v232
    %v1126 = vunpack.c.h.b16 %v232
    %v1127 = vunpack.c.l.b16 %v233
    %v1128 = vunpack.c.h.b16 %v233
    %v1129 = vunpack.c.l.b16 %v234
    %v1130 = vunpack.c.h.b16 %v234
    %v1131 = vunpack.c.l.b16 %v235
    %v1132 = vunpack.c.h.b16 %v235
    %v1133 = vunpack.c.l.b16 %v236
    %v1134 = vunpack.c.h.b16 %v236
    %v1135 = vunpack.c.l.b16 %v237
    %v1136 = vunpack.c.h.b16 %v237
    %v1137 = vunpack.c.l.b16 %v238
    %v1138 = vunpack.c.h.b16 %v238
    %v1139 = vunpack.c.l.b16 %v239
    %v1140 = vunpack.c.h.b16 %v239
    %v1141 = vunpack.c.l.b16 %v240
    %v1142 = vunpack.c.h.b16 %v240
    %v1143 = vunpack.c.l.b16 %v241
    %v1144 = vunpack.c.h.b16 %v241
    %v1145 = vunpack.c.l.b16 %v242
    %v1146 = vunpack.c.h.b16 %v242
    %v1147 = vunpack.c.l.b16 %v243
    %v1148 = vunpack.c.h.b16 %v243
    %v1149 = vunpack.c.l.b16 %v244
    %v1150 = vunpack.c.h.b16 %v244
    %v1151 = vunpack.c.l.b16 %v245
    %v1152 = vunpack.c.h.b16 %v245
    %v1153 = vunpack.c.l.b16 %v246
    %v1154 = vunpack.c.h.b16 %v246
    %v1155 = vunpack.c.l.b16 %v247
    %v1156 = vunpack.c.h.b16 %v247
    %v1157 = vunpack.c.l.b16 %v248
    %v1158 = vunpack.c.h.b16 %v248
    %v1159 = vunpack.c.l.b16 %v249
    %v1160 = vunpack.c.h.b16 %v249
    %v1161 = vunpack.c.l.b16 %v250
    %v1162 = vunpack.c.h.b16 %v250
    %v1163 = vunpack.c.l.b16 %v251
    %v1164 = vunpack.c.h.b16 %v251
    %v1165 = vunpack.c.l.b16 %v252
    %v1166 = vunpack.c.h.b16 %v252
    %v1167 = vunpack.c.l.b16 %v253
    %v1168 = vunpack.c.h.b16 %v253
    %v1169 = vunpack.c.l.b16 %v254
    %v1170 = vunpack.c.h.b16 %v254
    %v1171 = vunpack.c.l.b16 %v255
    %v1172 = vunpack.c.h.b16 %v255
    %v1173 = vunpack.c.l.b16 %v256
    %v1174 = vunpack.c.h.b16 %v256
    %v1175 = vunpack.c.l.b16 %v257
    %v1176 = vunpack.c.h.b16 %v257
    %v1177 = vunpack.c.l.b16 %v258
    %v1178 = vunpack.c.h.b16 %v258
    %v1179 = vunpack.c.l.b16 %v259
    %v1180 = vunpack.c.h.b16 %v259
    %v1181 = vunpack.c.l.b16 %v260
    %v1182 = vunpack.c.h.b16 %v260
    %v1183 = vunpack.c.l.b16 %v261
    %v1184 = vunpack.c.h.b16 %v261
    %v1185 = vunpack.c.l.b16 %v262
    %v1186 = vunpack.c.h.b16 %v262
    %v1187 = vunpack.c.l.b16 %v263
    %v1188 = vunpack.c.h.b16 %v263
    %v1189 = vunpack.c.l.b16 %v264
    %v1190 = vunpack.c.h.b16 %v264
    %v1191 = vunpack.c.l.b16 %v265
    %v1192 = vunpack.c.h.b16 %v265
    %v1193 = vunpack.c.l.b16 %v266
    %v1194 = vunpack.c.h.b16 %v266
    %v1195 = vunpack.c.l.b16 %v267
    %v1196 = vunpack.c.h.b16 %v267
    %v1197 = vunpack.c.l.b16 %v268
    %v1198 = vunpack.c.h.b16 %v268
    %v1199 = vunpack.c.l.b16 %v269
    %v1200 = vunpack.c.h.b16 %v269
    %v1201 = vunpack.c.l.b16 %v270
    %v1202 = vunpack.c.h.b16 %v270
    %v1203 = vunpack.c.l.b16 %v271
    %v1204 = vunpack.c.h.b16 %v271
    %v1205 = vunpack.c.l.b16 %v272
    %v1206 = vunpack.c.h.b16 %v272
    %v1207 = vunpack.c.l.b16 %v273
    %v1208 = vunpack.c.h.b16 %v273
    %v1209 = vunpack.c.l.b16 %v274
    %v1210 = vunpack.c.h.b16 %v274
    %v1211 = vunpack.c.l.b16 %v275
    %v1212 = vunpack.c.h.b16 %v275
    %v1213 = vunpack.c.l.b16 %v276
    %v1214 = vunpack.c.h.b16 %v276
    %v1215 = vunpack.c.l.b16 %v277
    %v1216 = vunpack.c.h.b16 %v277
    %v1217 = vunpack.c.l.b16 %v278
    %v1218 = vunpack.c.h.b16 %v278
    %v1219 = vunpack.c.l.b16 %v279
    %v1220 = vunpack.c.h.b16 %v279
    %v1221 = vunpack.c.l.b16 %v280
    %v1222 = vunpack.c.h.b16 %v280
    %v1223 = vunpack.c.l.b16 %v281
    %v1224 = vunpack.c.h.b16 %v281
    %v1225 = vunpack.c.l.b16 %v282
    %v1226 = vunpack.c.h.b16 %v282
    %v1227 = vunpack.c.l.b16 %v283
    %v1228 = vunpack.c.h.b16 %v283
    %v1229 = vunpack.c.l.b16 %v284
    %v1230 = vunpack.c.h.b16 %v284
    %v1231 = vunpack.c.l.b16 %v285
    %v1232 = vunpack.c.h.b16 %v285
    %v1233 = vunpack.c.l.b16 %v286
    %v1234 = vunpack.c.h.b16 %v286
    %v1235 = vunpack.c.l.b16 %v287
    %v1236 = vunpack.c.h.b16 %v287
    %v1237 = vunpack.c.l.b16 %v288
    %v1238 = vunpack.c.h.b16 %v288
    %v1239 = vunpack.c.l.b16 %v289
    %v1240 = vunpack.c.h.b16 %v289
    %v1241 = vunpack.c.l.b16 %v290
    %v1242 = vunpack.c.h.b16 %v290
    %v1243 = vunpack.c.l.b16 %v291
    %v1244 = vunpack.c.h.b16 %v291
    %v1245 = vunpack.c.l.b16 %v292
    %v1246 = vunpack.c.h.b16 %v292
    %v1247 = vunpack.c.l.b16 %v293
    %v1248 = vunpack.c.h.b16 %v293
    %v1249 = vunpack.c.l.b16 %v294
    %v1250 = vunpack.c.h.b16 %v294
    %v1251 = vunpack.c.l.b16 %v295
    %v1252 = vunpack.c.h.b16 %v295
    %v1253 = vunpack.c.l.b16 %v296
    %v1254 = vunpack.c.h.b16 %v296
    %v1255 = vunpack.c.l.b16 %v297
    %v1256 = vunpack.c.h.b16 %v297
    %v1257 = vunpack.c.l.b16 %v298
    %v1258 = vunpack.c.h.b16 %v298
    %v1259 = vunpack.c.l.b16 %v299
    %v1260 = vunpack.c.h.b16 %v299
    %v1261 = vunpack.c.l.b16 %v300
    %v1262 = vunpack.c.h.b16 %v300
    %v1263 = vunpack.c.l.b16 %v301
    %v1264 = vunpack.c.h.b16 %v301
    %v1265 = vunpack.c.l.b16 %v302
    %v1266 = vunpack.c.h.b16 %v302
    %v1267 = vunpack.c.l.b16 %v303
    %v1268 = vunpack.c.h.b16 %v303
    %v1269 = vunpack.c.l.b16 %v304
    %v1270 = vunpack.c.h.b16 %v304
    %v1271 = vunpack.c.l.b16 %v305
    %v1272 = vunpack.c.h.b16 %v305
    %v1273 = vunpack.c.l.b16 %v306
    %v1274 = vunpack.c.h.b16 %v306
    %v1275 = vunpack.c.l.b16 %v307
    %v1276 = vunpack.c.h.b16 %v307
    %v1277 = vunpack.c.l.b16 %v308
    %v1278 = vunpack.c.h.b16 %v308
    %v1279 = vunpack.c.l.b16 %v309
    %v1280 = vunpack.c.h.b16 %v309
    %v1281 = vunpack.c.l.b16 %v310
    %v1282 = vunpack.c.h.b16 %v310
    %v1283 = vunpack.c.l.b16 %v311
    %v1284 = vunpack.c.h.b16 %v311
    %v1285 = vunpack.c.l.b16 %v312
    %v1286 = vunpack.c.h.b16 %v312
    %v1287 = vunpack.c.l.b16 %v313
    %v1288 = vunpack.c.h.b16 %v313
    %v1289 = vunpack.c.l.b16 %v314
    %v1290 = vunpack.c.h.b16 %v314
    %v1291 = vunpack.c.l.b16 %v315
    %v1292 = vunpack.c.h.b16 %v315
    %v1293 = vunpack.c.l.b16 %v316
    %v1294 = vunpack.c.h.b16 %v316
    %v1295 = vunpack.c.l.b16 %v317
    %v1296 = vunpack.c.h.b16 %v317
    %v1297 = vunpack.c.l.b16 %v318
    %v1298 = vunpack.c.h.b16 %v318
    %v1299 = vunpack.c.l.b16 %v319
    %v1300 = vunpack.c.h.b16 %v319
    %v1301 = vunpack.c.l.b16 %v320
    %v1302 = vunpack.c.h.b16 %v320
    %v1303 = vunpack.c.l.b16 %v321
    %v1304 = vunpack.c.h.b16 %v321
    %v1305 = vunpack.c.l.b16 %v322
    %v1306 = vunpack.c.h.b16 %v322
    %v1307 = vunpack.c.l.b16 %v323
    %v1308 = vunpack.c.h.b16 %v323
    %v1309 = vunpack.c.l.b16 %v324
    %v1310 = vunpack.c.h.b16 %v324
    %v1311 = vunpack.c.l.b16 %v325
    %v1312 = vunpack.c.h.b16 %v325
    %v1313 = vunpack.c.l.b16 %v326
    %v1314 = vunpack.c.h.b16 %v326
    %v1315 = vunpack.c.l.b16 %v327
    %v1316 = vunpack.c.h.b16 %v327
    %v1317 = vunpack.c.l.b16 %v328
    %v1318 = vunpack.c.h.b16 %v328
    %v1319 = vunpack.c.l.b16 %v329
    %v1320 = vunpack.c.h.b16 %v329
    %v1321 = vunpack.c.l.b16 %v330
    %v1322 = vunpack.c.h.b16 %v330
    %v1323 = vunpack.c.l.b16 %v331
    %v1324 = vunpack.c.h.b16 %v331
    %v1325 = vunpack.c.l.b16 %v332
    %v1326 = vunpack.c.h.b16 %v332
    %v1327 = vunpack.c.l.b16 %v333
    %v1328 = vunpack.c.h.b16 %v333
    %v1329 = vunpack.c.l.b16 %v334
    %v1330 = vunpack.c.h.b16 %v334
    %v1331 = vunpack.c.l.b16 %v335
    %v1332 = vunpack.c.h.b16 %v335
    %v1333 = vunpack.c.l.b16 %v336
    %v1334 = vunpack.c.h.b16 %v336
    %v1335 = vunpack.c.l.b16 %v337
    %v1336 = vunpack.c.h.b16 %v337
    %v1337 = vunpack.c.l.b16 %v338
    %v1338 = vunpack.c.h.b16 %v338
    %v1339 = vunpack.c.l.b16 %v339
    %v1340 = vunpack.c.h.b16 %v339
    %v1341 = vunpack.c.l.b16 %v340
    %v1342 = vunpack.c.h.b16 %v340
    %v1343 = vunpack.c.l.b16 %v341
    %v1344 = vunpack.c.h.b16 %v341
    %v1345 = vunpack.c.l.b16 %v342
    %v1346 = vunpack.c.h.b16 %v342
    %v1347 = vunpack.c.l.b16 %v343
    %v1348 = vunpack.c.h.b16 %v343
    %v1349 = vunpack.c.l.b16 %v344
    %v1350 = vunpack.c.h.b16 %v344
    %v1351 = vunpack.c.l.b16 %v345
    %v1352 = vunpack.c.h.b16 %v345
    %v1353 = vunpack.c.l.b16 %v346
    %v1354 = vunpack.c.h.b16 %v346
    %v1355 = vunpack.c.l.b16 %v347
    %v1356 = vunpack.c.h.b16 %v347
    %v1357 = vunpack.c.l.b16 %v348
    %v1358 = vunpack.c.h.b16 %v348
    %v1359 = vunpack.c.l.b16 %v349
    %v1360 = vunpack.c.h.b16 %v349
    %v1361 = vunpack.c.l.b16 %v350
    %v1362 = vunpack.c.h.b16 %v350
    %v1363 = vunpack.c.l.b16 %v351
    %v1364 = vunpack.c.h.b16 %v351
    %v1365 = vunpack.c.l.b16 %v352
    %v1366 = vunpack.c.h.b16 %v352
    %v1367 = vunpack.c.l.b16 %v353
    %v1368 = vunpack.c.h.b16 %v353
    %v1369 = vunpack.c.l.b16 %v354
    %v1370 = vunpack.c.h.b16 %v354
    %v1371 = vunpack.c.l.b16 %v355
    %v1372 = vunpack.c.h.b16 %v355
    %v1373 = vunpack.c.l.b16 %v356
    %v1374 = vunpack.c.h.b16 %v356
    %v1375 = vunpack.c.l.b16 %v357
    %v1376 = vunpack.c.h.b16 %v357
    %v1377 = vunpack.c.l.b16 %v358
    %v1378 = vunpack.c.h.b16 %v358
    %v1379 = vunpack.c.l.b16 %v359
    %v1380 = vunpack.c.h.b16 %v359
    %v1381 = vunpack.c.l.b16 %v360
    %v1382 = vunpack.c.h.b16 %v360
    %v1383 = vunpack.c.l.b16 %v361
    %v1384 = vunpack.c.h.b16 %v361
    %v1385 = vunpack.c.l.b16 %v362
    %v1386 = vunpack.c.h.b16 %v362
    %v1387 = vunpack.c.l.b16 %v363
    %v1388 = vunpack.c.h.b16 %v363
    %v1389 = vunpack.c.l.b16 %v364
    %v1390 = vunpack.c.h.b16 %v364
    %v1391 = vunpack.c.l.b16 %v365
    %v1392 = vunpack.c.h.b16 %v365
    %v1393 = vunpack.c.l.b16 %v366
    %v1394 = vunpack.c.h.b16 %v366
    %v1395 = vunpack.c.l.b16 %v367
    %v1396 = vunpack.c.h.b16 %v367
    %v1397 = vunpack.c.l.b16 %v368
    %v1398 = vunpack.c.h.b16 %v368
    %v1399 = vunpack.c.l.b16 %v369
    %v1400 = vunpack.c.h.b16 %v369
    %v1401 = vunpack.c.l.b16 %v370
    %v1402 = vunpack.c.h.b16 %v370
    %v1403 = vunpack.c.l.b16 %v371
    %v1404 = vunpack.c.h.b16 %v371
    %v1405 = vunpack.c.l.b16 %v372
    %v1406 = vunpack.c.h.b16 %v372
    %v1407 = vunpack.c.l.b16 %v373
    %v1408 = vunpack.c.h.b16 %v373
    %v1409 = vunpack.c.l.b16 %v374
    %v1410 = vunpack.c.h.b16 %v374
    %v1411 = vunpack.c.l.b16 %v375
    %v1412 = vunpack.c.h.b16 %v375
    %v1413 = vunpack.c.l.b16 %v376
    %v1414 = vunpack.c.h.b16 %v376
    %v1415 = vunpack.c.l.b16 %v377
    %v1416 = vunpack.c.h.b16 %v377
    %v1417 = vunpack.c.l.b16 %v378
    %v1418 = vunpack.c.h.b16 %v378
    %v1419 = vunpack.c.l.b16 %v379
    %v1420 = vunpack.c.h.b16 %v379
    %v1421 = vunpack.c.l.b16 %v380
    %v1422 = vunpack.c.h.b16 %v380
    %v1423 = vunpack.c.l.b16 %v381
    %v1424 = vunpack.c.h.b16 %v381
    %v1425 = vunpack.c.l.b16 %v382
    %v1426 = vunpack.c.h.b16 %v382
    %v1427 = vunpack.c.l.b16 %v383
    %v1428 = vunpack.c.h.b16 %v383
    %v1429 = vunpack.c.l.b16 %v384
    %v1430 = vunpack.c.h.b16 %v384
    %v1431 = vunpack.c.l.b16 %v385
    %v1432 = vunpack.c.h.b16 %v385
    %v1433 = vunpack.c.l.b16 %v386
    %v1434 = vunpack.c.h.b16 %v386
    %v1435 = vunpack.c.l.b16 %v387
    %v1436 = vunpack.c.h.b16 %v387
    %v1437 = vunpack.c.l.b16 %v388
    %v1438 = vunpack.c.h.b16 %v388
    %v1439 = vunpack.c.l.b16 %v389
    %v1440 = vunpack.c.h.b16 %v389
    %v1441 = vunpack.c.l.b16 %v390
    %v1442 = vunpack.c.h.b16 %v390
    %v1443 = vunpack.c.l.b16 %v391
    %v1444 = vunpack.c.h.b16 %v391
    %v1445 = vunpack.c.l.b16 %v392
    %v1446 = vunpack.c.h.b16 %v392
    %v1447 = vunpack.c.l.b16 %v393
    %v1448 = vunpack.c.h.b16 %v393
    %v1449 = vunpack.c.l.b16 %v394
    %v1450 = vunpack.c.h.b16 %v394
    %v1451 = vunpack.c.l.b16 %v395
    %v1452 = vunpack.c.h.b16 %v395
    %v1453 = vunpack.c.l.b16 %v396
    %v1454 = vunpack.c.h.b16 %v396
    %v1455 = vpack.c.b16 %v811, %v807
    %v1456 = vpack.c.b16 %v812, %v808
    %v1457 = vpack.c.b16 %v813, %v809
    %v1458 = vpack.c.b16 %v814, %v810
    %v1459 = vpack.c.b16 %v819, %v815
    %v1460 = vpack.c.b16 %v820, %v816
    %v1461 = vpack.c.b16 %v821, %v817
    %v1462 = vpack.c.b16 %v822, %v818
    %v1463 = vpack.c.b16 %v827, %v823
    %v1464 = vpack.c.b16 %v828, %v824
    %v1465 = vpack.c.b16 %v829, %v825
    %v1466 = vpack.c.b16 %v830, %v826
    %v1467 = vpack.c.b16 %v835, %v831
    %v1468 = vpack.c.b16 %v836, %v832
    %v1469 = vpack.c.b16 %v837, %v833
    %v1470 = vpack.c.b16 %v838, %v834
    %v1471 = vpack.c.b16 %v843, %v839
    %v1472 = vpack.c.b16 %v844, %v840
    %v1473 = vpack.c.b16 %v845, %v841
    %v1474 = vpack.c.b16 %v846, %v842
    %v1475 = vpack.c.b16 %v851, %v847
    %v1476 = vpack.c.b16 %v852, %v848
    %v1477 = vpack.c.b16 %v853, %v849
    %v1478 = vpack.c.b16 %v854, %v850
    %v1479 = vpack.c.b16 %v859, %v855
    %v1480 = vpack.c.b16 %v860, %v856
    %v1481 = vpack.c.b16 %v861, %v857
    %v1482 = vpack.c.b16 %v862, %v858
    %v1483 = vpack.c.b16 %v867, %v863
    %v1484 = vpack.c.b16 %v868, %v864
    %v1485 = vpack.c.b16 %v869, %v865
    %v1486 = vpack.c.b16 %v870, %v866
    %v1487 = vpack.c.b16 %v875, %v871
    %v1488 = vpack.c.b16 %v876, %v872
    %v1489 = vpack.c.b16 %v877, %v873
    %v1490 = vpack.c.b16 %v878, %v874
    %v1491 = vpack.c.b16 %v883, %v879
    %v1492 = vpack.c.b16 %v884, %v880
    %v1493 = vpack.c.b16 %v885, %v881
    %v1494 = vpack.c.b16 %v886, %v882
    %v1495 = vpack.c.b16 %v891, %v887
    %v1496 = vpack.c.b16 %v892, %v888
    %v1497 = vpack.c.b16 %v893, %v889
    %v1498 = vpack.c.b16 %v894, %v890
    %v1499 = vpack.c.b16 %v899, %v895
    %v1500 = vpack.c.b16 %v900, %v896
    %v1501 = vpack.c.b16 %v901, %v897
    %v1502 = vpack.c.b16 %v902, %v898
    %v1503 = vpack.c.b16 %v907, %v903
    %v1504 = vpack.c.b16 %v908, %v904
    %v1505 = vpack.c.b16 %v909, %v905
    %v1506 = vpack.c.b16 %v910, %v906
    %v1507 = vpack.c.b16 %v915, %v911
    %v1508 = vpack.c.b16 %v916, %v912
    %v1509 = vpack.c.b16 %v917, %v913
    %v1510 = vpack.c.b16 %v918, %v914
    %v1511 = vpack.c.b16 %v923, %v919
    %v1512 = vpack.c.b16 %v924, %v920
    %v1513 = vpack.c.b16 %v925, %v921
    %v1514 = vpack.c.b16 %v926, %v922
    %v1515 = vpack.c.b16 %v931, %v927
    %v1516 = vpack.c.b16 %v932, %v928
    %v1517 = vpack.c.b16 %v933, %v929
    %v1518 = vpack.c.b16 %v934, %v930
    %v1519 = vpack.c.b16 %v939, %v935
    %v1520 = vpack.c.b16 %v940, %v936
    %v1521 = vpack.c.b16 %v941, %v937
    %v1522 = vpack.c.b16 %v942, %v938
    %v1523 = vpack.c.b16 %v947, %v943
    %v1524 = vpack.c.b16 %v948, %v944
    %v1525 = vpack.c.b16 %v949, %v945
    %v1526 = vpack.c.b16 %v950, %v946
    %v1527 = vpack.c.b16 %v955, %v951
    %v1528 = vpack.c.b16 %v956, %v952
    %v1529 = vpack.c.b16 %v957, %v953
    %v1530 = vpack.c.b16 %v958, %v954
    %v1531 = vpack.c.b16 %v963, %v959
    %v1532 = vpack.c.b16 %v964, %v960
    %v1533 = vpack.c.b16 %v965, %v961
    %v1534 = vpack.c.b16 %v966, %v962
    %v1535 = vpack.c.b16 %v971, %v967
    %v1536 = vpack.c.b16 %v972, %v968
    %v1537 = vpack.c.b16 %v973, %v969
    %v1538 = vpack.c.b16 %v974, %v970
    %v1539 = vpack.c.b16 %v979, %v975
    %v1540 = vpack.c.b16 %v980, %v976
    %v1541 = vpack.c.b16 %v981, %v977
    %v1542 = vpack.c.b16 %v982, %v978
    %v1543 = vpack.c.b16 %v987, %v983
    %v1544 = vpack.c.b16 %v988, %v984
    %v1545 = vpack.c.b16 %v989, %v985
    %v1546 = vpack.c.b16 %v990, %v986
    %v1547 = vpack.c.b16 %v995, %v991
    %v1548 = vpack.c.b16 %v996, %v992
    %v1549 = vpack.c.b16 %v997, %v993
    %v1550 = vpack.c.b16 %v998, %v994
    %v1551 = vpack.c.b16 %v1003, %v999
    %v1552 = vpack.c.b16 %v1004, %v1000
    %v1553 = vpack.c.b16 %v1005, %v1001
    %v1554 = vpack.c.b16 %v1006, %v1002
    %v1555 = vpack.c.b16 %v1011, %v1007
    %v1556 = vpack.c.b16 %v1012, %v1008
    %v1557 = vpack.c.b16 %v1013, %v1009
    %v1558 = vpack.c.b16 %v1014, %v1010
    %v1559 = vpack.c.b16 %v1019, %v1015
    %v1560 = vpack.c.b16 %v1020, %v1016
    %v1561 = vpack.c.b16 %v1021, %v1017
    %v1562 = vpack.c.b16 %v1022, %v1018
    %v1563 = vpack.c.b16 %v1027, %v1023
    %v1564 = vpack.c.b16 %v1028, %v1024
    %v1565 = vpack.c.b16 %v1029, %v1025
    %v1566 = vpack.c.b16 %v1030, %v1026
    %v1567 = vpack.c.b16 %v1035, %v1031
    %v1568 = vpack.c.b16 %v1036, %v1032
    %v1569 = vpack.c.b16 %v1037, %v1033
    %v1570 = vpack.c.b16 %v1038, %v1034
    %v1571 = vpack.c.b16 %v1043, %v1039
    %v1572 = vpack.c.b16 %v1044, %v1040
    %v1573 = vpack.c.b16 %v1045, %v1041
    %v1574 = vpack.c.b16 %v1046, %v1042
    %v1575 = vpack.c.b16 %v1051, %v1047
    %v1576 = vpack.c.b16 %v1052, %v1048
    %v1577 = vpack.c.b16 %v1053, %v1049
    %v1578 = vpack.c.b16 %v1054, %v1050
    %v1579 = vpack.c.b16 %v1059, %v1055
    %v1580 = vpack.c.b16 %v1060, %v1056
    %v1581 = vpack.c.b16 %v1061, %v1057
    %v1582 = vpack.c.b16 %v1062, %v1058
    %v1583 = vpack.c.b16 %v1067, %v1063
    %v1584 = vpack.c.b16 %v1068, %v1064
    %v1585 = vpack.c.b16 %v1069, %v1065
    %v1586 = vpack.c.b16 %v1070, %v1066
    %v1587 = vpack.c.b16 %v1075, %v1071
    %v1588 = vpack.c.b16 %v1076, %v1072
    %v1589 = vpack.c.b16 %v1077, %v1073
    %v1590 = vpack.c.b16 %v1078, %v1074
    %v1591 = vpack.c.b16 %v1083, %v1079
    %v1592 = vpack.c.b16 %v1084, %v1080
    %v1593 = vpack.c.b16 %v1085, %v1081
    %v1594 = vpack.c.b16 %v1086, %v1082
    %v1595 = vpack.c.b16 %v1091, %v1087
    %v1596 = vpack.c.b16 %v1092, %v1088
    %v1597 = vpack.c.b16 %v1093, %v1089
    %v1598 = vpack.c.b16 %v1094, %v1090
    %v1599 = vpack.c.b16 %v1099, %v1095
    %v1600 = vpack.c.b16 %v1100, %v1096
    %v1601 = vpack.c.b16 %v1101, %v1097
    %v1602 = vpack.c.b16 %v1102, %v1098
    %v1603 = vpack.c.b16 %v1107, %v1103
    %v1604 = vpack.c.b16 %v1108, %v1104
    %v1605 = vpack.c.b16 %v1109, %v1105
    %v1606 = vpack.c.b16 %v1110, %v1106
    %v1607 = vpack.c.b16 %v1115, %v1111
    %v1608 = vpack.c.b16 %v1116, %v1112
    %v1609 = vpack.c.b16 %v1117, %v1113
    %v1610 = vpack.c.b16 %v1118, %v1114
    %v1611 = vpack.c.b16 %v1123, %v1119
    %v1612 = vpack.c.b16 %v1124, %v1120
    %v1613 = vpack.c.b16 %v1125, %v1121
    %v1614 = vpack.c.b16 %v1126, %v1122
    %v1615 = vpack.c.b16 %v1131, %v1127
    %v1616 = vpack.c.b16 %v1132, %v1128
    %v1617 = vpack.c.b16 %v1133, %v1129
    %v1618 = vpack.c.b16 %v1134, %v1130
    %v1619 = vpack.c.b16 %v1139, %v1135
    %v1620 = vpack.c.b16 %v1140, %v1136
    %v1621 = vpack.c.b16 %v1141, %v1137
    %v1622 = vpack.c.b16 %v1142, %v1138
    %v1623 = vpack.c.b16 %v1147, %v1143
    %v1624 = vpack.c.b16 %v1148, %v1144
    %v1625 = vpack.c.b16 %v1149, %v1145
    %v1626 = vpack.c.b16 %v1150, %v1146
    %v1627 = vpack.c.b16 %v1155, %v1151
    %v1628 = vpack.c.b16 %v1156, %v1152
    %v1629 = vpack.c.b16 %v1157, %v1153
    %v1630 = vpack.c.b16 %v1158, %v1154
    %v1631 = vpack.c.b16 %v1163, %v1159
    %v1632 = vpack.c.b16 %v1164, %v1160
    %v1633 = vpack.c.b16 %v1165, %v1161
    %v1634 = vpack.c.b16 %v1166, %v1162
    %v1635 = vpack.c.b16 %v1171, %v1167
    %v1636 = vpack.c.b16 %v1172, %v1168
    %v1637 = vpack.c.b16 %v1173, %v1169
    %v1638 = vpack.c.b16 %v1174, %v1170
    %v1639 = vpack.c.b16 %v1179, %v1175
    %v1640 = vpack.c.b16 %v1180, %v1176
    %v1641 = vpack.c.b16 %v1181, %v1177
    %v1642 = vpack.c.b16 %v1182, %v1178
    %v1643 = vpack.c.b16 %v1187, %v1183
    %v1644 = vpack.c.b16 %v1188, %v1184
    %v1645 = vpack.c.b16 %v1189, %v1185
    %v1646 = vpack.c.b16 %v1190, %v1186
    %v1647 = vpack.c.b16 %v1195, %v1191
    %v1648 = vpack.c.b16 %v1196, %v1192
    %v1649 = vpack.c.b16 %v1197, %v1193
    %v1650 = vpack.c.b16 %v1198, %v1194
    %v1651 = vpack.c.b16 %v1203, %v1199
    %v1652 = vpack.c.b16 %v1204, %v1200
    %v1653 = vpack.c.b16 %v1205, %v1201
    %v1654 = vpack.c.b16 %v1206, %v1202
    %v1655 = vpack.c.b16 %v1211, %v1207
    %v1656 = vpack.c.b16 %v1212, %v1208
    %v1657 = vpack.c.b16 %v1213, %v1209
    %v1658 = vpack.c.b16 %v1214, %v1210
    %v1659 = vpack.c.b16 %v1219, %v1215
    %v1660 = vpack.c.b16 %v1220, %v1216
    %v1661 = vpack.c.b16 %v1221, %v1217
    %v1662 = vpack.c.b16 %v1222, %v1218
    %v1663 = vpack.c.b16 %v1227, %v1223
    %v1664 = vpack.c.b16 %v1228, %v1224
    %v1665 = vpack.c.b16 %v1229, %v1225
    %v1666 = vpack.c.b16 %v1230, %v1226
    %v1667 = vpack.c.b16 %v1235, %v1231
    %v1668 = vpack.c.b16 %v1236, %v1232
    %v1669 = vpack.c.b16 %v1237, %v1233
    %v1670 = vpack.c.b16 %v1238, %v1234
    %v1671 = vpack.c.b16 %v1243, %v1239
    %v1672 = vpack.c.b16 %v1244, %v1240
    %v1673 = vpack.c.b16 %v1245, %v1241
    %v1674 = vpack.c.b16 %v1246, %v1242
    %v1675 = vpack.c.b16 %v1251, %v1247
    %v1676 = vpack.c.b16 %v1252, %v1248
    %v1677 = vpack.c.b16 %v1253, %v1249
    %v1678 = vpack.c.b16 %v1254, %v1250
    %v1679 = vpack.c.b16 %v1259, %v1255
    %v1680 = vpack.c.b16 %v1260, %v1256
    %v1681 = vpack.c.b16 %v1261, %v1257
    %v1682 = vpack.c.b16 %v1262, %v1258
    %v1683 = vpack.c.b16 %v1267, %v1263
    %v1684 = vpack.c.b16 %v1268, %v1264
    %v1685 = vpack.c.b16 %v1269, %v1265
    %v1686 = vpack.c.b16 %v1270, %v1266
    %v1687 = vpack.c.b16 %v1275, %v1271
    %v1688 = vpack.c.b16 %v1276, %v1272
    %v1689 = vpack.c.b16 %v1277, %v1273
    %v1690 = vpack.c.b16 %v1278, %v1274
    %v1691 = vpack.c.b16 %v1283, %v1279
    %v1692 = vpack.c.b16 %v1284, %v1280
    %v1693 = vpack.c.b16 %v1285, %v1281
    %v1694 = vpack.c.b16 %v1286, %v1282
    %v1695 = vpack.c.b16 %v1291, %v1287
    %v1696 = vpack.c.b16 %v1292, %v1288
    %v1697 = vpack.c.b16 %v1293, %v1289
    %v1698 = vpack.c.b16 %v1294, %v1290
    %v1699 = vpack.c.b16 %v1299, %v1295
    %v1700 = vpack.c.b16 %v1300, %v1296
    %v1701 = vpack.c.b16 %v1301, %v1297
    %v1702 = vpack.c.b16 %v1302, %v1298
    %v1703 = vpack.c.b16 %v1307, %v1303
    %v1704 = vpack.c.b16 %v1308, %v1304
    %v1705 = vpack.c.b16 %v1309, %v1305
    %v1706 = vpack.c.b16 %v1310, %v1306
    %v1707 = vpack.c.b16 %v1315, %v1311
    %v1708 = vpack.c.b16 %v1316, %v1312
    %v1709 = vpack.c.b16 %v1317, %v1313
    %v1710 = vpack.c.b16 %v1318, %v1314
    %v1711 = vpack.c.b16 %v1323, %v1319
    %v1712 = vpack.c.b16 %v1324, %v1320
    %v1713 = vpack.c.b16 %v1325, %v1321
    %v1714 = vpack.c.b16 %v1326, %v1322
    %v1715 = vpack.c.b16 %v1331, %v1327
    %v1716 = vpack.c.b16 %v1332, %v1328
    %v1717 = vpack.c.b16 %v1333, %v1329
    %v1718 = vpack.c.b16 %v1334, %v1330
    %v1719 = vpack.c.b16 %v1339, %v1335
    %v1720 = vpack.c.b16 %v1340, %v1336
    %v1721 = vpack.c.b16 %v1341, %v1337
    %v1722 = vpack.c.b16 %v1342, %v1338
    %v1723 = vpack.c.b16 %v1347, %v1343
    %v1724 = vpack.c.b16 %v1348, %v1344
    %v1725 = vpack.c.b16 %v1349, %v1345
    %v1726 = vpack.c.b16 %v1350, %v1346
    %v1727 = vpack.c.b16 %v1355, %v1351
    %v1728 = vpack.c.b16 %v1356, %v1352
    %v1729 = vpack.c.b16 %v1357, %v1353
    %v1730 = vpack.c.b16 %v1358, %v1354
    %v1731 = vpack.c.b16 %v1363, %v1359
    %v1732 = vpack.c.b16 %v1364, %v1360
    %v1733 = vpack.c.b16 %v1365, %v1361
    %v1734 = vpack.c.b16 %v1366, %v1362
    %v1735 = vpack.c.b16 %v1371, %v1367
    %v1736 = vpack.c.b16 %v1372, %v1368
    %v1737 = vpack.c.b16 %v1373, %v1369
    %v1738 = vpack.c.b16 %v1374, %v1370
    %v1739 = vpack.c.b16 %v1379, %v1375
    %v1740 = vpack.c.b16 %v1380, %v1376
    %v1741 = vpack.c.b16 %v1381, %v1377
    %v1742 = vpack.c.b16 %v1382, %v1378
    %v1743 = vpack.c.b16 %v1387, %v1383
    %v1744 = vpack.c.b16 %v1388, %v1384
    %v1745 = vpack.c.b16 %v1389, %v1385
    %v1746 = vpack.c.b16 %v1390, %v1386
    %v1747 = vpack.c.b16 %v1395, %v1391
    %v1748 = vpack.c.b16 %v1396, %v1392
    %v1749 = vpack.c.b16 %v1397, %v1393
    %v1750 = vpack.c.b16 %v1398, %v1394
    %v1751 = vpack.c.b16 %v1403, %v1399
    %v1752 = vpack.c.b16 %v1404, %v1400
    %v1753 = vpack.c.b16 %v1405, %v1401
    %v1754 = vpack.c.b16 %v1406, %v1402
    %v1755 = vpack.c.b16 %v1411, %v1407
    %v1756 = vpack.c.b16 %v1412, %v1408
    %v1757 = vpack.c.b16 %v1413, %v1409
    %v1758 = vpack.c.b16 %v1414, %v1410
    %v1759 = vpack.c.b16 %v1419, %v1415
    %v1760 = vpack.c.b16 %v1420, %v1416
    %v1761 = vpack.c.b16 %v1421, %v1417
    %v1762 = vpack.c.b16 %v1422, %v1418
    %v1763 = vpack.c.b16 %v1427, %v1423
    %v1764 = vpack.c.b16 %v1428, %v1424
    %v1765 = vpack.c.b16 %v1429, %v1425
    %v1766 = vpack.c.b16 %v1430, %v1426
    %v1767 = vpack.c.b16 %v1435, %v1431
    %v1768 = vpack.c.b16 %v1436, %v1432
    %v1769 = vpack.c.b16 %v1437, %v1433
    %v1770 = vpack.c.b16 %v1438, %v1434
    %v1771 = vpack.c.b16 %v1443, %v1439
    %v1772 = vpack.c.b16 %v1444, %v1440
    %v1773 = vpack.c.b16 %v1445, %v1441
    %v1774 = vpack.c.b16 %v1446, %v1442
    %v1775 = vpack.c.b16 %v1451, %v1447
    %v1776 = vpack.c.b16 %v1452, %v1448
    %v1777 = vpack.c.b16 %v1453, %v1449
    %v1778 = vpack.c.b16 %v1454, %v1450
    %vm2103 = vcmask 130048
    %v2105 = vsel %vm2103, %v472, 0
    %2107 = vmatprep.subr.bf16.mxu0 %v1484
    %2108 = vmatpush1.bf16.msra.mxu0 %v1483
    %2109 = vmatprep.subr.bf16.mxu0 %v1480
    %2110 = vmatpush1.bf16.msra.mxu0 %v1479
    %2111 = vmatprep.subr.bf16.mxu0 %v1476
    %2112 = vmatpush1.bf16.msra.mxu0 %v1475
    %2113 = vmatprep.subr.bf16.mxu0 %v1472
    %2114 = vmatpush1.bf16.msra.mxu0 %v1471
    %2115 = vmatprep.subr.bf16.mxu0 %v1468
    %2116 = vmatpush1.bf16.msra.mxu0 %v1467
    %2117 = vmatprep.subr.bf16.mxu0 %v1464
    %2118 = vmatpush1.bf16.msra.mxu0 %v1463
    %2119 = vmatprep.subr.bf16.mxu0 %v1460
    %2120 = vmatpush1.bf16.msra.mxu0 %v1459
    %2121 = vmatprep.subr.bf16.mxu0 %v1456
    %2122 = vmatpush1.bf16.msra.mxu0 %v1455
    %2123 = vmatprep.subr.bf16.mxu0 %v1516
    %2124 = vmatpush2.bf16.msra.mxu0 %v1515
    %2125 = vmatprep.subr.bf16.mxu0 %v1512
    %2126 = vmatpush2.bf16.msra.mxu0 %v1511
    %2127 = vmatprep.subr.bf16.mxu0 %v1508
    %2128 = vmatpush2.bf16.msra.mxu0 %v1507
    %2129 = vmatprep.subr.bf16.mxu0 %v1504
    %2130 = vmatpush2.bf16.msra.mxu0 %v1503
    %2131 = vmatprep.subr.bf16.mxu0 %v1500
    %2132 = vmatpush2.bf16.msra.mxu0 %v1499
    %2133 = vmatprep.subr.bf16.mxu0 %v1496
    %2134 = vmatpush2.bf16.msra.mxu0 %v1495
    %2135 = vmatprep.subr.bf16.mxu0 %v1492
    %2136 = vmatpush2.bf16.msra.mxu0 %v1491
    %2137 = vmatprep.subr.bf16.mxu0 %v1488
    %2138 = vmatpush2.bf16.msra.mxu0 %v1487
    %2139 = vmatprep.mubr.bf16.mxu0 %v438
    %2140 = vmatmul.mubr.bf16.gmra.mxu0 %v424
    %v2141 = vpop.f32.mrf.mxu0
    %v2142 = vadd.f32 0.0, %v2141
    %v2143 = vpop.f32.mrf.mxu0
    %v2144 = vadd.f32 0.0, %v2143
    %v2145 = vpop.f32.mrf.mxu0
    %v2146 = vpop.f32.mrf.mxu0
    %2147 = vdwg.mxu0
    %2148 = vmatprep.subr.bf16.mxu0 %v1548
    %2149 = vmatpush1.bf16.msra.mxu0 %v1547
    %2150 = vmatprep.subr.bf16.mxu0 %v1544
    %2151 = vmatpush1.bf16.msra.mxu0 %v1543
    %2152 = vmatprep.subr.bf16.mxu0 %v1540
    %2153 = vmatpush1.bf16.msra.mxu0 %v1539
    %2154 = vmatprep.subr.bf16.mxu0 %v1536
    %2155 = vmatpush1.bf16.msra.mxu0 %v1535
    %2156 = vmatprep.subr.bf16.mxu0 %v1532
    %2157 = vmatpush1.bf16.msra.mxu0 %v1531
    %2158 = vmatprep.subr.bf16.mxu0 %v1528
    %2159 = vmatpush1.bf16.msra.mxu0 %v1527
    %2160 = vmatprep.subr.bf16.mxu0 %v1524
    %2161 = vmatpush1.bf16.msra.mxu0 %v1523
    %2162 = vmatprep.subr.bf16.mxu0 %v1520
    %2163 = vmatpush1.bf16.msra.mxu0 %v1519
    %2164 = vmatprep.subr.bf16.mxu0 %v1580
    %2165 = vmatpush2.bf16.msra.mxu0 %v1579
    %2166 = vmatprep.subr.bf16.mxu0 %v1576
    %2167 = vmatpush2.bf16.msra.mxu0 %v1575
    %2168 = vmatprep.subr.bf16.mxu0 %v1572
    %2169 = vmatpush2.bf16.msra.mxu0 %v1571
    %2170 = vmatprep.subr.bf16.mxu0 %v1568
    %2171 = vmatpush2.bf16.msra.mxu0 %v1567
    %2172 = vmatprep.subr.bf16.mxu0 %v1564
    %2173 = vmatpush2.bf16.msra.mxu0 %v1563
    %2174 = vmatprep.subr.bf16.mxu0 %v1560
    %2175 = vmatpush2.bf16.msra.mxu0 %v1559
    %2176 = vmatprep.subr.bf16.mxu0 %v1556
    %2177 = vmatpush2.bf16.msra.mxu0 %v1555
    %2178 = vmatprep.subr.bf16.mxu0 %v1552
    %2179 = vmatpush2.bf16.msra.mxu0 %v1551
    %2180 = vmatprep.mubr.bf16.mxu0 %v448
    %2181 = vmatmul.mubr.bf16.gmra.mxu0 %v446
    %v2182 = vpop.f32.mrf.mxu0
    %v2183 = vadd.f32 %v2142, %v2182
    %v2184 = vpop.f32.mrf.mxu0
    %v2185 = vadd.f32 %v2144, %v2184
    %v2186 = vpop.f32.mrf.mxu0
    %v2187 = vpop.f32.mrf.mxu0
    %2188 = vdwg.mxu0
    %2189 = vmatprep.subr.bf16.mxu0 %v1612
    %2190 = vmatpush1.bf16.msra.mxu0 %v1611
    %2191 = vmatprep.subr.bf16.mxu0 %v1608
    %2192 = vmatpush1.bf16.msra.mxu0 %v1607
    %2193 = vmatprep.subr.bf16.mxu0 %v1604
    %2194 = vmatpush1.bf16.msra.mxu0 %v1603
    %2195 = vmatprep.subr.bf16.mxu0 %v1600
    %2196 = vmatpush1.bf16.msra.mxu0 %v1599
    %2197 = vmatprep.subr.bf16.mxu0 %v1596
    %2198 = vmatpush1.bf16.msra.mxu0 %v1595
    %2199 = vmatprep.subr.bf16.mxu0 %v1592
    %2200 = vmatpush1.bf16.msra.mxu0 %v1591
    %2201 = vmatprep.subr.bf16.mxu0 %v1588
    %2202 = vmatpush1.bf16.msra.mxu0 %v1587
    %2203 = vmatprep.subr.bf16.mxu0 %v1584
    %2204 = vmatpush1.bf16.msra.mxu0 %v1583
    %2205 = vmatprep.subr.bf16.mxu0 %v1644
    %2206 = vmatpush2.bf16.msra.mxu0 %v1643
    %2207 = vmatprep.subr.bf16.mxu0 %v1640
    %2208 = vmatpush2.bf16.msra.mxu0 %v1639
    %2209 = vmatprep.subr.bf16.mxu0 %v1636
    %2210 = vmatpush2.bf16.msra.mxu0 %v1635
    %2211 = vmatprep.subr.bf16.mxu0 %v1632
    %2212 = vmatpush2.bf16.msra.mxu0 %v1631
    %2213 = vmatprep.subr.bf16.mxu0 %v1628
    %2214 = vmatpush2.bf16.msra.mxu0 %v1627
    %2215 = vmatprep.subr.bf16.mxu0 %v1624
    %2216 = vmatpush2.bf16.msra.mxu0 %v1623
    %2217 = vmatprep.subr.bf16.mxu0 %v1620
    %2218 = vmatpush2.bf16.msra.mxu0 %v1619
    %2219 = vmatprep.subr.bf16.mxu0 %v1616
    %2220 = vmatpush2.bf16.msra.mxu0 %v1615
    %2221 = vmatprep.mubr.bf16.mxu0 %v445
    %2222 = vmatmul.mubr.bf16.gmra.mxu0 %v431
    %v2223 = vpop.f32.mrf.mxu0
    %v2224 = vadd.f32 %v2183, %v2223
    %v2225 = vpop.f32.mrf.mxu0
    %v2226 = vadd.f32 %v2185, %v2225
    %v2227 = vpop.f32.mrf.mxu0
    %v2228 = vpop.f32.mrf.mxu0
    %2229 = vdwg.mxu0
    %2230 = vmatprep.subr.bf16.mxu0 %v1676
    %2231 = vmatpush1.bf16.msra.mxu0 %v1675
    %2232 = vmatprep.subr.bf16.mxu0 %v1672
    %2233 = vmatpush1.bf16.msra.mxu0 %v1671
    %2234 = vmatprep.subr.bf16.mxu0 %v1668
    %2235 = vmatpush1.bf16.msra.mxu0 %v1667
    %2236 = vmatprep.subr.bf16.mxu0 %v1664
    %2237 = vmatpush1.bf16.msra.mxu0 %v1663
    %2238 = vmatprep.subr.bf16.mxu0 %v1660
    %2239 = vmatpush1.bf16.msra.mxu0 %v1659
    %2240 = vmatprep.subr.bf16.mxu0 %v1656
    %2241 = vmatpush1.bf16.msra.mxu0 %v1655
    %2242 = vmatprep.subr.bf16.mxu0 %v1652
    %2243 = vmatpush1.bf16.msra.mxu0 %v1651
    %2244 = vmatprep.subr.bf16.mxu0 %v1648
    %2245 = vmatpush1.bf16.msra.mxu0 %v1647
    %2246 = vmatprep.subr.bf16.mxu0 %v1708
    %2247 = vmatpush2.bf16.msra.mxu0 %v1707
    %2248 = vmatprep.subr.bf16.mxu0 %v1704
    %2249 = vmatpush2.bf16.msra.mxu0 %v1703
    %2250 = vmatprep.subr.bf16.mxu0 %v1700
    %2251 = vmatpush2.bf16.msra.mxu0 %v1699
    %2252 = vmatprep.subr.bf16.mxu0 %v1696
    %2253 = vmatpush2.bf16.msra.mxu0 %v1695
    %2254 = vmatprep.subr.bf16.mxu0 %v1692
    %2255 = vmatpush2.bf16.msra.mxu0 %v1691
    %2256 = vmatprep.subr.bf16.mxu0 %v1688
    %2257 = vmatpush2.bf16.msra.mxu0 %v1687
    %2258 = vmatprep.subr.bf16.mxu0 %v1684
    %2259 = vmatpush2.bf16.msra.mxu0 %v1683
    %2260 = vmatprep.subr.bf16.mxu0 %v1680
    %2261 = vmatpush2.bf16.msra.mxu0 %v1679
    %2262 = vmatprep.mubr.bf16.mxu0 %v449
    %2263 = vmatmul.mubr.bf16.gmra.mxu0 %v447
    %v2264 = vpop.f32.mrf.mxu0
    %v2265 = vadd.f32 %v2224, %v2264
    %v2266 = vpop.f32.mrf.mxu0
    %v2267 = vadd.f32 %v2226, %v2266
    %v2268 = vpop.f32.mrf.mxu0
    %v2269 = vpop.f32.mrf.mxu0
    %2270 = vdwg.mxu0
    %2271 = vmatprep.subr.bf16.mxu0 %v1740
    %2272 = vmatpush1.bf16.msra.mxu0 %v1739
    %2273 = vmatprep.subr.bf16.mxu0 %v1736
    %2274 = vmatpush1.bf16.msra.mxu0 %v1735
    %2275 = vmatprep.subr.bf16.mxu0 %v1732
    %2276 = vmatpush1.bf16.msra.mxu0 %v1731
    %2277 = vmatprep.subr.bf16.mxu0 %v1728
    %2278 = vmatpush1.bf16.msra.mxu0 %v1727
    %2279 = vmatprep.subr.bf16.mxu0 %v1724
    %2280 = vmatpush1.bf16.msra.mxu0 %v1723
    %2281 = vmatprep.subr.bf16.mxu0 %v1720
    %2282 = vmatpush1.bf16.msra.mxu0 %v1719
    %2283 = vmatprep.subr.bf16.mxu0 %v1716
    %2284 = vmatpush1.bf16.msra.mxu0 %v1715
    %2285 = vmatprep.subr.bf16.mxu0 %v1712
    %2286 = vmatpush1.bf16.msra.mxu0 %v1711
    %2287 = vmatprep.subr.bf16.mxu0 %v1772
    %2288 = vmatpush2.bf16.msra.mxu0 %v1771
    %2289 = vmatprep.subr.bf16.mxu0 %v1768
    %2290 = vmatpush2.bf16.msra.mxu0 %v1767
    %2291 = vmatprep.subr.bf16.mxu0 %v1764
    %2292 = vmatpush2.bf16.msra.mxu0 %v1763
    %2293 = vmatprep.subr.bf16.mxu0 %v1760
    %2294 = vmatpush2.bf16.msra.mxu0 %v1759
    %2295 = vmatprep.subr.bf16.mxu0 %v1756
    %2296 = vmatpush2.bf16.msra.mxu0 %v1755
    %2297 = vmatprep.subr.bf16.mxu0 %v1752
    %2298 = vmatpush2.bf16.msra.mxu0 %v1751
    %2299 = vmatprep.subr.bf16.mxu0 %v1748
    %2300 = vmatpush2.bf16.msra.mxu0 %v1747
    %2301 = vmatprep.subr.bf16.mxu0 %v1744
    %2302 = vmatpush2.bf16.msra.mxu0 %v1743
    %2303 = vmatprep.mubr.bf16.mxu0 %v471
    %2304 = vmatmul.mubr.bf16.gmra.mxu0 %v464
    %v2305 = vpop.f32.mrf.mxu0
    %v2306 = vadd.f32 %v2265, %v2305
    %v2307 = vpop.f32.mrf.mxu0
    %v2308 = vadd.f32 %v2267, %v2307
    %v2309 = vpop.f32.mrf.mxu0
    %v2310 = vpop.f32.mrf.mxu0
    %2311 = vdwg.mxu0
    %2312 = vmatprep.subr.bf16.mxu0 0
    %2313 = vmatpush1.bf16.msra.mxu0 0
    %2314 = vmatprep.subr.bf16.mxu0 0
    %2315 = vmatpush1.bf16.msra.mxu0 0
    %2316 = vmatprep.subr.bf16.mxu0 0
    %2317 = vmatpush1.bf16.msra.mxu0 0
    %2318 = vmatprep.subr.bf16.mxu0 0
    %2319 = vmatpush1.bf16.msra.mxu0 0
    %2320 = vmatprep.subr.bf16.mxu0 0
    %2321 = vmatpush1.bf16.msra.mxu0 0
    %2322 = vmatprep.subr.bf16.mxu0 0
    %2323 = vmatpush1.bf16.msra.mxu0 0
    %2324 = vmatprep.subr.bf16.mxu0 0
    %2325 = vmatpush1.bf16.msra.mxu0 0
    %2326 = vmatprep.subr.bf16.mxu0 %v1776
    %2327 = vmatpush1.bf16.msra.mxu0 %v1775
    %2328 = vmatprep.subr.bf16.mxu0 0
    %2329 = vmatpush2.bf16.msra.mxu0 0
    %2330 = vmatprep.subr.bf16.mxu0 0
    %2331 = vmatpush2.bf16.msra.mxu0 0
    %2332 = vmatprep.subr.bf16.mxu0 0
    %2333 = vmatpush2.bf16.msra.mxu0 0
    %2334 = vmatprep.subr.bf16.mxu0 0
    %2335 = vmatpush2.bf16.msra.mxu0 0
    %2336 = vmatprep.subr.bf16.mxu0 0
    %2337 = vmatpush2.bf16.msra.mxu0 0
    %2338 = vmatprep.subr.bf16.mxu0 0
    %2339 = vmatpush2.bf16.msra.mxu0 0
    %2340 = vmatprep.subr.bf16.mxu0 0
    %2341 = vmatpush2.bf16.msra.mxu0 0
    %2342 = vmatprep.subr.bf16.mxu0 0
    %2343 = vmatpush2.bf16.msra.mxu0 0
    %2344 = vmatprep.mubr.bf16.mxu0 0
    %2345 = vmatmul.mubr.bf16.gmra.mxu0 %v2105
    %v2346 = vpop.f32.mrf.mxu0
    %v2347 = vadd.f32 %v2306, %v2346
    %v2348 = vpop.f32.mrf.mxu0
    %v2349 = vadd.f32 %v2308, %v2348
    %v2350 = vpop.f32.mrf.mxu0
    %v2351 = vpop.f32.mrf.mxu0
    %2352 = vdwg.mxu0
    %2353 = vmatprep.subr.bf16.mxu0 %v1486
    %2354 = vmatpush1.bf16.msra.mxu0 %v1485
    %2355 = vmatprep.subr.bf16.mxu0 %v1482
    %2356 = vmatpush1.bf16.msra.mxu0 %v1481
    %2357 = vmatprep.subr.bf16.mxu0 %v1478
    %2358 = vmatpush1.bf16.msra.mxu0 %v1477
    %2359 = vmatprep.subr.bf16.mxu0 %v1474
    %2360 = vmatpush1.bf16.msra.mxu0 %v1473
    %2361 = vmatprep.subr.bf16.mxu0 %v1470
    %2362 = vmatpush1.bf16.msra.mxu0 %v1469
    %2363 = vmatprep.subr.bf16.mxu0 %v1466
    %2364 = vmatpush1.bf16.msra.mxu0 %v1465
    %2365 = vmatprep.subr.bf16.mxu0 %v1462
    %2366 = vmatpush1.bf16.msra.mxu0 %v1461
    %2367 = vmatprep.subr.bf16.mxu0 %v1458
    %2368 = vmatpush1.bf16.msra.mxu0 %v1457
    %2369 = vmatprep.subr.bf16.mxu0 %v1518
    %2370 = vmatpush2.bf16.msra.mxu0 %v1517
    %2371 = vmatprep.subr.bf16.mxu0 %v1514
    %2372 = vmatpush2.bf16.msra.mxu0 %v1513
    %2373 = vmatprep.subr.bf16.mxu0 %v1510
    %2374 = vmatpush2.bf16.msra.mxu0 %v1509
    %2375 = vmatprep.subr.bf16.mxu0 %v1506
    %2376 = vmatpush2.bf16.msra.mxu0 %v1505
    %2377 = vmatprep.subr.bf16.mxu0 %v1502
    %2378 = vmatpush2.bf16.msra.mxu0 %v1501
    %2379 = vmatprep.subr.bf16.mxu0 %v1498
    %2380 = vmatpush2.bf16.msra.mxu0 %v1497
    %2381 = vmatprep.subr.bf16.mxu0 %v1494
    %2382 = vmatpush2.bf16.msra.mxu0 %v1493
    %2383 = vmatprep.subr.bf16.mxu0 %v1490
    %2384 = vmatpush2.bf16.msra.mxu0 %v1489
    %2385 = vmatprep.mubr.bf16.mxu0 %v438
    %2386 = vmatmul.mubr.bf16.gmra.mxu0 %v424
    %v2387 = vpop.f32.mrf.mxu0
    %v2388 = vadd.f32 0.0, %v2387
    %v2389 = vpop.f32.mrf.mxu0
    %v2390 = vadd.f32 0.0, %v2389
    %v2391 = vpop.f32.mrf.mxu0
    %v2392 = vpop.f32.mrf.mxu0
    %2393 = vdwg.mxu0
    %2394 = vmatprep.subr.bf16.mxu0 %v1550
    %2395 = vmatpush1.bf16.msra.mxu0 %v1549
    %2396 = vmatprep.subr.bf16.mxu0 %v1546
    %2397 = vmatpush1.bf16.msra.mxu0 %v1545
    %2398 = vmatprep.subr.bf16.mxu0 %v1542
    %2399 = vmatpush1.bf16.msra.mxu0 %v1541
    %2400 = vmatprep.subr.bf16.mxu0 %v1538
    %2401 = vmatpush1.bf16.msra.mxu0 %v1537
    %2402 = vmatprep.subr.bf16.mxu0 %v1534
    %2403 = vmatpush1.bf16.msra.mxu0 %v1533
    %2404 = vmatprep.subr.bf16.mxu0 %v1530
    %2405 = vmatpush1.bf16.msra.mxu0 %v1529
    %2406 = vmatprep.subr.bf16.mxu0 %v1526
    %2407 = vmatpush1.bf16.msra.mxu0 %v1525
    %2408 = vmatprep.subr.bf16.mxu0 %v1522
    %2409 = vmatpush1.bf16.msra.mxu0 %v1521
    %2410 = vmatprep.subr.bf16.mxu0 %v1582
    %2411 = vmatpush2.bf16.msra.mxu0 %v1581
    %2412 = vmatprep.subr.bf16.mxu0 %v1578
    %2413 = vmatpush2.bf16.msra.mxu0 %v1577
    %2414 = vmatprep.subr.bf16.mxu0 %v1574
    %2415 = vmatpush2.bf16.msra.mxu0 %v1573
    %2416 = vmatprep.subr.bf16.mxu0 %v1570
    %2417 = vmatpush2.bf16.msra.mxu0 %v1569
    %2418 = vmatprep.subr.bf16.mxu0 %v1566
    %2419 = vmatpush2.bf16.msra.mxu0 %v1565
    %2420 = vmatprep.subr.bf16.mxu0 %v1562
    %2421 = vmatpush2.bf16.msra.mxu0 %v1561
    %2422 = vmatprep.subr.bf16.mxu0 %v1558
    %2423 = vmatpush2.bf16.msra.mxu0 %v1557
    %2424 = vmatprep.subr.bf16.mxu0 %v1554
    %2425 = vmatpush2.bf16.msra.mxu0 %v1553
    %2426 = vmatprep.mubr.bf16.mxu0 %v448
    %2427 = vmatmul.mubr.bf16.gmra.mxu0 %v446
    %v2428 = vpop.f32.mrf.mxu0
    %v2429 = vadd.f32 %v2388, %v2428
    %v2430 = vpop.f32.mrf.mxu0
    %v2431 = vadd.f32 %v2390, %v2430
    %v2432 = vpop.f32.mrf.mxu0
    %v2433 = vpop.f32.mrf.mxu0
    %2434 = vdwg.mxu0
    %2435 = vmatprep.subr.bf16.mxu0 %v1614
    %2436 = vmatpush1.bf16.msra.mxu0 %v1613
    %2437 = vmatprep.subr.bf16.mxu0 %v1610
    %2438 = vmatpush1.bf16.msra.mxu0 %v1609
    %2439 = vmatprep.subr.bf16.mxu0 %v1606
    %2440 = vmatpush1.bf16.msra.mxu0 %v1605
    %2441 = vmatprep.subr.bf16.mxu0 %v1602
    %2442 = vmatpush1.bf16.msra.mxu0 %v1601
    %2443 = vmatprep.subr.bf16.mxu0 %v1598
    %2444 = vmatpush1.bf16.msra.mxu0 %v1597
    %2445 = vmatprep.subr.bf16.mxu0 %v1594
    %2446 = vmatpush1.bf16.msra.mxu0 %v1593
    %2447 = vmatprep.subr.bf16.mxu0 %v1590
    %2448 = vmatpush1.bf16.msra.mxu0 %v1589
    %2449 = vmatprep.subr.bf16.mxu0 %v1586
    %2450 = vmatpush1.bf16.msra.mxu0 %v1585
    %2451 = vmatprep.subr.bf16.mxu0 %v1646
    %2452 = vmatpush2.bf16.msra.mxu0 %v1645
    %2453 = vmatprep.subr.bf16.mxu0 %v1642
    %2454 = vmatpush2.bf16.msra.mxu0 %v1641
    %2455 = vmatprep.subr.bf16.mxu0 %v1638
    %2456 = vmatpush2.bf16.msra.mxu0 %v1637
    %2457 = vmatprep.subr.bf16.mxu0 %v1634
    %2458 = vmatpush2.bf16.msra.mxu0 %v1633
    %2459 = vmatprep.subr.bf16.mxu0 %v1630
    %2460 = vmatpush2.bf16.msra.mxu0 %v1629
    %2461 = vmatprep.subr.bf16.mxu0 %v1626
    %2462 = vmatpush2.bf16.msra.mxu0 %v1625
    %2463 = vmatprep.subr.bf16.mxu0 %v1622
    %2464 = vmatpush2.bf16.msra.mxu0 %v1621
    %2465 = vmatprep.subr.bf16.mxu0 %v1618
    %2466 = vmatpush2.bf16.msra.mxu0 %v1617
    %2467 = vmatprep.mubr.bf16.mxu0 %v445
    %2468 = vmatmul.mubr.bf16.gmra.mxu0 %v431
    %v2469 = vpop.f32.mrf.mxu0
    %v2470 = vadd.f32 %v2429, %v2469
    %v2471 = vpop.f32.mrf.mxu0
    %v2472 = vadd.f32 %v2431, %v2471
    %v2473 = vpop.f32.mrf.mxu0
    %v2474 = vpop.f32.mrf.mxu0
    %2475 = vdwg.mxu0
    %2476 = vmatprep.subr.bf16.mxu0 %v1678
    %2477 = vmatpush1.bf16.msra.mxu0 %v1677
    %2478 = vmatprep.subr.bf16.mxu0 %v1674
    %2479 = vmatpush1.bf16.msra.mxu0 %v1673
    %2480 = vmatprep.subr.bf16.mxu0 %v1670
    %2481 = vmatpush1.bf16.msra.mxu0 %v1669
    %2482 = vmatprep.subr.bf16.mxu0 %v1666
    %2483 = vmatpush1.bf16.msra.mxu0 %v1665
    %2484 = vmatprep.subr.bf16.mxu0 %v1662
    %2485 = vmatpush1.bf16.msra.mxu0 %v1661
    %2486 = vmatprep.subr.bf16.mxu0 %v1658
    %2487 = vmatpush1.bf16.msra.mxu0 %v1657
    %2488 = vmatprep.subr.bf16.mxu0 %v1654
    %2489 = vmatpush1.bf16.msra.mxu0 %v1653
    %2490 = vmatprep.subr.bf16.mxu0 %v1650
    %2491 = vmatpush1.bf16.msra.mxu0 %v1649
    %2492 = vmatprep.subr.bf16.mxu0 %v1710
    %2493 = vmatpush2.bf16.msra.mxu0 %v1709
    %2494 = vmatprep.subr.bf16.mxu0 %v1706
    %2495 = vmatpush2.bf16.msra.mxu0 %v1705
    %2496 = vmatprep.subr.bf16.mxu0 %v1702
    %2497 = vmatpush2.bf16.msra.mxu0 %v1701
    %2498 = vmatprep.subr.bf16.mxu0 %v1698
    %2499 = vmatpush2.bf16.msra.mxu0 %v1697
    %2500 = vmatprep.subr.bf16.mxu0 %v1694
    %2501 = vmatpush2.bf16.msra.mxu0 %v1693
    %2502 = vmatprep.subr.bf16.mxu0 %v1690
    %2503 = vmatpush2.bf16.msra.mxu0 %v1689
    %2504 = vmatprep.subr.bf16.mxu0 %v1686
    %2505 = vmatpush2.bf16.msra.mxu0 %v1685
    %2506 = vmatprep.subr.bf16.mxu0 %v1682
    %2507 = vmatpush2.bf16.msra.mxu0 %v1681
    %2508 = vmatprep.mubr.bf16.mxu0 %v449
    %2509 = vmatmul.mubr.bf16.gmra.mxu0 %v447
    %v2510 = vpop.f32.mrf.mxu0
    %v2511 = vadd.f32 %v2470, %v2510
    %v2512 = vpop.f32.mrf.mxu0
    %v2513 = vadd.f32 %v2472, %v2512
    %v2514 = vpop.f32.mrf.mxu0
    %v2515 = vpop.f32.mrf.mxu0
    %2516 = vdwg.mxu0
    %2517 = vmatprep.subr.bf16.mxu0 %v1742
    %2518 = vmatpush1.bf16.msra.mxu0 %v1741
    %2519 = vmatprep.subr.bf16.mxu0 %v1738
    %2520 = vmatpush1.bf16.msra.mxu0 %v1737
    %2521 = vmatprep.subr.bf16.mxu0 %v1734
    %2522 = vmatpush1.bf16.msra.mxu0 %v1733
    %2523 = vmatprep.subr.bf16.mxu0 %v1730
    %2524 = vmatpush1.bf16.msra.mxu0 %v1729
    %2525 = vmatprep.subr.bf16.mxu0 %v1726
    %2526 = vmatpush1.bf16.msra.mxu0 %v1725
    %2527 = vmatprep.subr.bf16.mxu0 %v1722
    %2528 = vmatpush1.bf16.msra.mxu0 %v1721
    %2529 = vmatprep.subr.bf16.mxu0 %v1718
    %2530 = vmatpush1.bf16.msra.mxu0 %v1717
    %2531 = vmatprep.subr.bf16.mxu0 %v1714
    %2532 = vmatpush1.bf16.msra.mxu0 %v1713
    %2533 = vmatprep.subr.bf16.mxu0 %v1774
    %2534 = vmatpush2.bf16.msra.mxu0 %v1773
    %2535 = vmatprep.subr.bf16.mxu0 %v1770
    %2536 = vmatpush2.bf16.msra.mxu0 %v1769
    %2537 = vmatprep.subr.bf16.mxu0 %v1766
    %2538 = vmatpush2.bf16.msra.mxu0 %v1765
    %2539 = vmatprep.subr.bf16.mxu0 %v1762
    %2540 = vmatpush2.bf16.msra.mxu0 %v1761
    %2541 = vmatprep.subr.bf16.mxu0 %v1758
    %2542 = vmatpush2.bf16.msra.mxu0 %v1757
    %2543 = vmatprep.subr.bf16.mxu0 %v1754
    %2544 = vmatpush2.bf16.msra.mxu0 %v1753
    %2545 = vmatprep.subr.bf16.mxu0 %v1750
    %2546 = vmatpush2.bf16.msra.mxu0 %v1749
    %2547 = vmatprep.subr.bf16.mxu0 %v1746
    %2548 = vmatpush2.bf16.msra.mxu0 %v1745
    %2549 = vmatprep.mubr.bf16.mxu0 %v471
    %2550 = vmatmul.mubr.bf16.gmra.mxu0 %v464
    %v2551 = vpop.f32.mrf.mxu0
    %v2552 = vadd.f32 %v2511, %v2551
    %v2553 = vpop.f32.mrf.mxu0
    %v2554 = vadd.f32 %v2513, %v2553
    %v2555 = vpop.f32.mrf.mxu0
    %v2556 = vpop.f32.mrf.mxu0
    %2557 = vdwg.mxu0
    %2558 = vmatprep.subr.bf16.mxu0 0
    %2559 = vmatpush1.bf16.msra.mxu0 0
    %2560 = vmatprep.subr.bf16.mxu0 0
    %2561 = vmatpush1.bf16.msra.mxu0 0
    %2562 = vmatprep.subr.bf16.mxu0 0
    %2563 = vmatpush1.bf16.msra.mxu0 0
    %2564 = vmatprep.subr.bf16.mxu0 0
    %2565 = vmatpush1.bf16.msra.mxu0 0
    %2566 = vmatprep.subr.bf16.mxu0 0
    %2567 = vmatpush1.bf16.msra.mxu0 0
    %2568 = vmatprep.subr.bf16.mxu0 0
    %2569 = vmatpush1.bf16.msra.mxu0 0
    %2570 = vmatprep.subr.bf16.mxu0 0
    %2571 = vmatpush1.bf16.msra.mxu0 0
    %2572 = vmatprep.subr.bf16.mxu0 %v1778
    %2573 = vmatpush1.bf16.msra.mxu0 %v1777
    %2574 = vmatprep.subr.bf16.mxu0 0
    %2575 = vmatpush2.bf16.msra.mxu0 0
    %2576 = vmatprep.subr.bf16.mxu0 0
    %2577 = vmatpush2.bf16.msra.mxu0 0
    %2578 = vmatprep.subr.bf16.mxu0 0
    %2579 = vmatpush2.bf16.msra.mxu0 0
    %2580 = vmatprep.subr.bf16.mxu0 0
    %2581 = vmatpush2.bf16.msra.mxu0 0
    %2582 = vmatprep.subr.bf16.mxu0 0
    %2583 = vmatpush2.bf16.msra.mxu0 0
    %2584 = vmatprep.subr.bf16.mxu0 0
    %2585 = vmatpush2.bf16.msra.mxu0 0
    %2586 = vmatprep.subr.bf16.mxu0 0
    %2587 = vmatpush2.bf16.msra.mxu0 0
    %2588 = vmatprep.subr.bf16.mxu0 0
    %2589 = vmatpush2.bf16.msra.mxu0 0
    %2590 = vmatprep.mubr.bf16.mxu0 0
    %2591 = vmatmul.mubr.bf16.gmra.mxu0 %v2105
    %v2592 = vpop.f32.mrf.mxu0
    %v2593 = vadd.f32 %v2552, %v2592
    %v2594 = vpop.f32.mrf.mxu0
    %v2595 = vadd.f32 %v2554, %v2594
    %v2596 = vpop.f32.mrf.mxu0
    %v2597 = vpop.f32.mrf.mxu0
    %2598 = vdwg.mxu0
    %v2599 = vld [vmem:[%s0] sm:$0xff]
    %v2600 = vld [vmem:[%s0 + $0x8] sm:$0x7]
    %v2603 = vcombine.high %v2599, %v2599
    %v2605 = vunpack.c.l.s4 1966171168
    %v2606 = vunpack.c.0.s8 %v2605
    %v2607 = vlaneseq
    %v2608 = vshrl.u32 %v2607, 7
    %v2609 = vsub.s32 %v2606, %v2608
    %v2610 = vrot.slane %v2599, %v2609
    %v2612 = vunpack.c.l.s4 1966171168
    %v2613 = vunpack.c.0.s8 %v2612
    %v2614 = vlaneseq
    %v2615 = vshrl.u32 %v2614, 7
    %v2616 = vsub.s32 %v2613, %v2615
    %v2617 = vrot.slane %v2603, %v2616
    %v2618 = vcombine.high %v2610, %v2610
    %v2619 = vcombine.high %v2617, %v2617
    %v2621 = vunpack.c.l.s4 1966171168
    %v2622 = vunpack.c.0.s8 %v2621
    %v2623 = vlaneseq
    %v2624 = vshrl.u32 %v2623, 7
    %v2625 = vsub.s32 %v2622, %v2624
    %v2626 = vrot.slane %v2610, %v2625
    %v2628 = vunpack.c.l.s4 1966171168
    %v2629 = vunpack.c.0.s8 %v2628
    %v2630 = vlaneseq
    %v2631 = vshrl.u32 %v2630, 7
    %v2632 = vsub.s32 %v2629, %v2631
    %v2633 = vrot.slane %v2617, %v2632
    %v2635 = vunpack.c.l.s4 1966171168
    %v2636 = vunpack.c.0.s8 %v2635
    %v2637 = vlaneseq
    %v2638 = vshrl.u32 %v2637, 7
    %v2639 = vsub.s32 %v2636, %v2638
    %v2640 = vrot.slane %v2618, %v2639
    %v2642 = vunpack.c.l.s4 1966171168
    %v2643 = vunpack.c.0.s8 %v2642
    %v2644 = vlaneseq
    %v2645 = vshrl.u32 %v2644, 7
    %v2646 = vsub.s32 %v2643, %v2645
    %v2647 = vrot.slane %v2619, %v2646
    %v2648 = vcombine.high %v2626, %v2626
    %v2649 = vcombine.high %v2633, %v2633
    %v2650 = vcombine.high %v2640, %v2640
    %v2651 = vcombine.high %v2647, %v2647
    %v2653 = vunpack.c.l.s4 1966171168
    %v2654 = vunpack.c.0.s8 %v2653
    %v2655 = vlaneseq
    %v2656 = vshrl.u32 %v2655, 7
    %v2657 = vsub.s32 %v2654, %v2656
    %v2658 = vrot.slane %v2600, %v2657
    %v2659 = vcombine.high %v2658, %v2658
    %v2661 = vunpack.c.l.s4 1966171168
    %v2662 = vunpack.c.0.s8 %v2661
    %v2663 = vlaneseq
    %v2664 = vshrl.u32 %v2663, 7
    %v2665 = vsub.s32 %v2662, %v2664
    %v2666 = vrot.slane %v2658, %v2665
    %v2668 = vunpack.c.l.s4 1966171168
    %v2669 = vunpack.c.0.s8 %v2668
    %v2670 = vlaneseq
    %v2671 = vshrl.u32 %v2670, 7
    %v2672 = vsub.s32 %v2669, %v2671
    %v2673 = vrot.slane %v2659, %v2672
    %v2674 = vcombine.high %v2666, %v2666
    %2675 = vrot.lane.b32.xlu0 %v2626, 127
    %v2676 = vpop.permute.xlu0 %2675
    %2677 = vrot.lane.b32.xlu0 %v2640, 127
    %v2678 = vpop.permute.xlu0 %2677
    %2679 = vrot.lane.b32.xlu0 %v2648, 127
    %v2680 = vpop.permute.xlu0 %2679
    %2681 = vrot.lane.b32.xlu0 %v2650, 127
    %v2682 = vpop.permute.xlu0 %2681
    %2683 = vrot.lane.b32.xlu0 %v2633, 127
    %v2684 = vpop.permute.xlu0 %2683
    %2685 = vrot.lane.b32.xlu0 %v2647, 127
    %v2686 = vpop.permute.xlu0 %2685
    %2687 = vrot.lane.b32.xlu0 %v2649, 127
    %v2688 = vpop.permute.xlu0 %2687
    %2689 = vrot.lane.b32.xlu0 %v2651, 127
    %v2690 = vpop.permute.xlu0 %2689
    %2691 = vrot.lane.b32.xlu0 %v2666, 127
    %v2692 = vpop.permute.xlu0 %2691
    %2693 = vrot.lane.b32.xlu0 %v2673, 127
    %v2694 = vpop.permute.xlu0 %2693
    %2695 = vrot.lane.b32.xlu0 %v2674, 127
    %v2696 = vpop.permute.xlu0 %2695
    %vm2697 = vcmask 1039360
    %v2698 = vsel %vm2697, %v2676, %v2678
    %v2699 = vsel %vm2697, %v2678, %v2680
    %v2700 = vsel %vm2697, %v2680, %v2682
    %v2701 = vsel %vm2697, %v2682, %v2684
    %v2702 = vsel %vm2697, %v2684, %v2686
    %v2703 = vsel %vm2697, %v2686, %v2688
    %v2704 = vsel %vm2697, %v2688, %v2690
    %v2705 = vsel %vm2697, %v2690, %v2692
    %v2706 = vsel %vm2697, %v2692, %v2694
    %v2707 = vsel %vm2697, %v2694, %v2696
    %v2719 = vsel %vm2103, %v2696, 0
    %2721 = vmatprep.subr.bf16.mxu0 %v1484
    %2722 = vmatpush1.bf16.msra.mxu0 %v1483
    %2723 = vmatprep.subr.bf16.mxu0 %v1480
    %2724 = vmatpush1.bf16.msra.mxu0 %v1479
    %2725 = vmatprep.subr.bf16.mxu0 %v1476
    %2726 = vmatpush1.bf16.msra.mxu0 %v1475
    %2727 = vmatprep.subr.bf16.mxu0 %v1472
    %2728 = vmatpush1.bf16.msra.mxu0 %v1471
    %2729 = vmatprep.subr.bf16.mxu0 %v1468
    %2730 = vmatpush1.bf16.msra.mxu0 %v1467
    %2731 = vmatprep.subr.bf16.mxu0 %v1464
    %2732 = vmatpush1.bf16.msra.mxu0 %v1463
    %2733 = vmatprep.subr.bf16.mxu0 %v1460
    %2734 = vmatpush1.bf16.msra.mxu0 %v1459
    %2735 = vmatprep.subr.bf16.mxu0 %v1456
    %2736 = vmatpush1.bf16.msra.mxu0 %v1455
    %2737 = vmatprep.subr.bf16.mxu0 %v1516
    %2738 = vmatpush2.bf16.msra.mxu0 %v1515
    %2739 = vmatprep.subr.bf16.mxu0 %v1512
    %2740 = vmatpush2.bf16.msra.mxu0 %v1511
    %2741 = vmatprep.subr.bf16.mxu0 %v1508
    %2742 = vmatpush2.bf16.msra.mxu0 %v1507
    %2743 = vmatprep.subr.bf16.mxu0 %v1504
    %2744 = vmatpush2.bf16.msra.mxu0 %v1503
    %2745 = vmatprep.subr.bf16.mxu0 %v1500
    %2746 = vmatpush2.bf16.msra.mxu0 %v1499
    %2747 = vmatprep.subr.bf16.mxu0 %v1496
    %2748 = vmatpush2.bf16.msra.mxu0 %v1495
    %2749 = vmatprep.subr.bf16.mxu0 %v1492
    %2750 = vmatpush2.bf16.msra.mxu0 %v1491
    %2751 = vmatprep.subr.bf16.mxu0 %v1488
    %2752 = vmatpush2.bf16.msra.mxu0 %v1487
    %2753 = vmatprep.mubr.bf16.mxu0 %v2699
    %2754 = vmatmul.mubr.bf16.gmra.mxu0 %v2698
    %v2755 = vpop.f32.mrf.mxu0
    %v2756 = vadd.f32 0.0, %v2755
    %v2757 = vpop.f32.mrf.mxu0
    %v2758 = vadd.f32 0.0, %v2757
    %v2759 = vpop.f32.mrf.mxu0
    %v2760 = vpop.f32.mrf.mxu0
    %2761 = vdwg.mxu0
    %2762 = vmatprep.subr.bf16.mxu0 %v1548
    %2763 = vmatpush1.bf16.msra.mxu0 %v1547
    %2764 = vmatprep.subr.bf16.mxu0 %v1544
    %2765 = vmatpush1.bf16.msra.mxu0 %v1543
    %2766 = vmatprep.subr.bf16.mxu0 %v1540
    %2767 = vmatpush1.bf16.msra.mxu0 %v1539
    %2768 = vmatprep.subr.bf16.mxu0 %v1536
    %2769 = vmatpush1.bf16.msra.mxu0 %v1535
    %2770 = vmatprep.subr.bf16.mxu0 %v1532
    %2771 = vmatpush1.bf16.msra.mxu0 %v1531
    %2772 = vmatprep.subr.bf16.mxu0 %v1528
    %2773 = vmatpush1.bf16.msra.mxu0 %v1527
    %2774 = vmatprep.subr.bf16.mxu0 %v1524
    %2775 = vmatpush1.bf16.msra.mxu0 %v1523
    %2776 = vmatprep.subr.bf16.mxu0 %v1520
    %2777 = vmatpush1.bf16.msra.mxu0 %v1519
    %2778 = vmatprep.subr.bf16.mxu0 %v1580
    %2779 = vmatpush2.bf16.msra.mxu0 %v1579
    %2780 = vmatprep.subr.bf16.mxu0 %v1576
    %2781 = vmatpush2.bf16.msra.mxu0 %v1575
    %2782 = vmatprep.subr.bf16.mxu0 %v1572
    %2783 = vmatpush2.bf16.msra.mxu0 %v1571
    %2784 = vmatprep.subr.bf16.mxu0 %v1568
    %2785 = vmatpush2.bf16.msra.mxu0 %v1567
    %2786 = vmatprep.subr.bf16.mxu0 %v1564
    %2787 = vmatpush2.bf16.msra.mxu0 %v1563
    %2788 = vmatprep.subr.bf16.mxu0 %v1560
    %2789 = vmatpush2.bf16.msra.mxu0 %v1559
    %2790 = vmatprep.subr.bf16.mxu0 %v1556
    %2791 = vmatpush2.bf16.msra.mxu0 %v1555
    %2792 = vmatprep.subr.bf16.mxu0 %v1552
    %2793 = vmatpush2.bf16.msra.mxu0 %v1551
    %2794 = vmatprep.mubr.bf16.mxu0 %v2701
    %2795 = vmatmul.mubr.bf16.gmra.mxu0 %v2700
    %v2796 = vpop.f32.mrf.mxu0
    %v2797 = vadd.f32 %v2756, %v2796
    %v2798 = vpop.f32.mrf.mxu0
    %v2799 = vadd.f32 %v2758, %v2798
    %v2800 = vpop.f32.mrf.mxu0
    %v2801 = vpop.f32.mrf.mxu0
    %2802 = vdwg.mxu0
    %2803 = vmatprep.subr.bf16.mxu0 %v1612
    %2804 = vmatpush1.bf16.msra.mxu0 %v1611
    %2805 = vmatprep.subr.bf16.mxu0 %v1608
    %2806 = vmatpush1.bf16.msra.mxu0 %v1607
    %2807 = vmatprep.subr.bf16.mxu0 %v1604
    %2808 = vmatpush1.bf16.msra.mxu0 %v1603
    %2809 = vmatprep.subr.bf16.mxu0 %v1600
    %2810 = vmatpush1.bf16.msra.mxu0 %v1599
    %2811 = vmatprep.subr.bf16.mxu0 %v1596
    %2812 = vmatpush1.bf16.msra.mxu0 %v1595
    %2813 = vmatprep.subr.bf16.mxu0 %v1592
    %2814 = vmatpush1.bf16.msra.mxu0 %v1591
    %2815 = vmatprep.subr.bf16.mxu0 %v1588
    %2816 = vmatpush1.bf16.msra.mxu0 %v1587
    %2817 = vmatprep.subr.bf16.mxu0 %v1584
    %2818 = vmatpush1.bf16.msra.mxu0 %v1583
    %2819 = vmatprep.subr.bf16.mxu0 %v1644
    %2820 = vmatpush2.bf16.msra.mxu0 %v1643
    %2821 = vmatprep.subr.bf16.mxu0 %v1640
    %2822 = vmatpush2.bf16.msra.mxu0 %v1639
    %2823 = vmatprep.subr.bf16.mxu0 %v1636
    %2824 = vmatpush2.bf16.msra.mxu0 %v1635
    %2825 = vmatprep.subr.bf16.mxu0 %v1632
    %2826 = vmatpush2.bf16.msra.mxu0 %v1631
    %2827 = vmatprep.subr.bf16.mxu0 %v1628
    %2828 = vmatpush2.bf16.msra.mxu0 %v1627
    %2829 = vmatprep.subr.bf16.mxu0 %v1624
    %2830 = vmatpush2.bf16.msra.mxu0 %v1623
    %2831 = vmatprep.subr.bf16.mxu0 %v1620
    %2832 = vmatpush2.bf16.msra.mxu0 %v1619
    %2833 = vmatprep.subr.bf16.mxu0 %v1616
    %2834 = vmatpush2.bf16.msra.mxu0 %v1615
    %2835 = vmatprep.mubr.bf16.mxu0 %v2703
    %2836 = vmatmul.mubr.bf16.gmra.mxu0 %v2702
    %v2837 = vpop.f32.mrf.mxu0
    %v2838 = vadd.f32 %v2797, %v2837
    %v2839 = vpop.f32.mrf.mxu0
    %v2840 = vadd.f32 %v2799, %v2839
    %v2841 = vpop.f32.mrf.mxu0
    %v2842 = vpop.f32.mrf.mxu0
    %2843 = vdwg.mxu0
    %2844 = vmatprep.subr.bf16.mxu0 %v1676
    %2845 = vmatpush1.bf16.msra.mxu0 %v1675
    %2846 = vmatprep.subr.bf16.mxu0 %v1672
    %2847 = vmatpush1.bf16.msra.mxu0 %v1671
    %2848 = vmatprep.subr.bf16.mxu0 %v1668
    %2849 = vmatpush1.bf16.msra.mxu0 %v1667
    %2850 = vmatprep.subr.bf16.mxu0 %v1664
    %2851 = vmatpush1.bf16.msra.mxu0 %v1663
    %2852 = vmatprep.subr.bf16.mxu0 %v1660
    %2853 = vmatpush1.bf16.msra.mxu0 %v1659
    %2854 = vmatprep.subr.bf16.mxu0 %v1656
    %2855 = vmatpush1.bf16.msra.mxu0 %v1655
    %2856 = vmatprep.subr.bf16.mxu0 %v1652
    %2857 = vmatpush1.bf16.msra.mxu0 %v1651
    %2858 = vmatprep.subr.bf16.mxu0 %v1648
    %2859 = vmatpush1.bf16.msra.mxu0 %v1647
    %2860 = vmatprep.subr.bf16.mxu0 %v1708
    %2861 = vmatpush2.bf16.msra.mxu0 %v1707
    %2862 = vmatprep.subr.bf16.mxu0 %v1704
    %2863 = vmatpush2.bf16.msra.mxu0 %v1703
    %2864 = vmatprep.subr.bf16.mxu0 %v1700
    %2865 = vmatpush2.bf16.msra.mxu0 %v1699
    %2866 = vmatprep.subr.bf16.mxu0 %v1696
    %2867 = vmatpush2.bf16.msra.mxu0 %v1695
    %2868 = vmatprep.subr.bf16.mxu0 %v1692
    %2869 = vmatpush2.bf16.msra.mxu0 %v1691
    %2870 = vmatprep.subr.bf16.mxu0 %v1688
    %2871 = vmatpush2.bf16.msra.mxu0 %v1687
    %2872 = vmatprep.subr.bf16.mxu0 %v1684
    %2873 = vmatpush2.bf16.msra.mxu0 %v1683
    %2874 = vmatprep.subr.bf16.mxu0 %v1680
    %2875 = vmatpush2.bf16.msra.mxu0 %v1679
    %2876 = vmatprep.mubr.bf16.mxu0 %v2705
    %2877 = vmatmul.mubr.bf16.gmra.mxu0 %v2704
    %v2878 = vpop.f32.mrf.mxu0
    %v2879 = vadd.f32 %v2838, %v2878
    %v2880 = vpop.f32.mrf.mxu0
    %v2881 = vadd.f32 %v2840, %v2880
    %v2882 = vpop.f32.mrf.mxu0
    %v2883 = vpop.f32.mrf.mxu0
    %2884 = vdwg.mxu0
    %2885 = vmatprep.subr.bf16.mxu0 %v1740
    %2886 = vmatpush1.bf16.msra.mxu0 %v1739
    %2887 = vmatprep.subr.bf16.mxu0 %v1736
    %2888 = vmatpush1.bf16.msra.mxu0 %v1735
    %2889 = vmatprep.subr.bf16.mxu0 %v1732
    %2890 = vmatpush1.bf16.msra.mxu0 %v1731
    %2891 = vmatprep.subr.bf16.mxu0 %v1728
    %2892 = vmatpush1.bf16.msra.mxu0 %v1727
    %2893 = vmatprep.subr.bf16.mxu0 %v1724
    %2894 = vmatpush1.bf16.msra.mxu0 %v1723
    %2895 = vmatprep.subr.bf16.mxu0 %v1720
    %2896 = vmatpush1.bf16.msra.mxu0 %v1719
    %2897 = vmatprep.subr.bf16.mxu0 %v1716
    %2898 = vmatpush1.bf16.msra.mxu0 %v1715
    %2899 = vmatprep.subr.bf16.mxu0 %v1712
    %2900 = vmatpush1.bf16.msra.mxu0 %v1711
    %2901 = vmatprep.subr.bf16.mxu0 %v1772
    %2902 = vmatpush2.bf16.msra.mxu0 %v1771
    %2903 = vmatprep.subr.bf16.mxu0 %v1768
    %2904 = vmatpush2.bf16.msra.mxu0 %v1767
    %2905 = vmatprep.subr.bf16.mxu0 %v1764
    %2906 = vmatpush2.bf16.msra.mxu0 %v1763
    %2907 = vmatprep.subr.bf16.mxu0 %v1760
    %2908 = vmatpush2.bf16.msra.mxu0 %v1759
    %2909 = vmatprep.subr.bf16.mxu0 %v1756
    %2910 = vmatpush2.bf16.msra.mxu0 %v1755
    %2911 = vmatprep.subr.bf16.mxu0 %v1752
    %2912 = vmatpush2.bf16.msra.mxu0 %v1751
    %2913 = vmatprep.subr.bf16.mxu0 %v1748
    %2914 = vmatpush2.bf16.msra.mxu0 %v1747
    %2915 = vmatprep.subr.bf16.mxu0 %v1744
    %2916 = vmatpush2.bf16.msra.mxu0 %v1743
    %2917 = vmatprep.mubr.bf16.mxu0 %v2707
    %2918 = vmatmul.mubr.bf16.gmra.mxu0 %v2706
    %v2919 = vpop.f32.mrf.mxu0
    %v2920 = vadd.f32 %v2879, %v2919
    %v2921 = vpop.f32.mrf.mxu0
    %v2922 = vadd.f32 %v2881, %v2921
    %v2923 = vpop.f32.mrf.mxu0
    %v2924 = vpop.f32.mrf.mxu0
    %2925 = vdwg.mxu0
    %2926 = vmatprep.subr.bf16.mxu0 0
    %2927 = vmatpush1.bf16.msra.mxu0 0
    %2928 = vmatprep.subr.bf16.mxu0 0
    %2929 = vmatpush1.bf16.msra.mxu0 0
    %2930 = vmatprep.subr.bf16.mxu0 0
    %2931 = vmatpush1.bf16.msra.mxu0 0
    %2932 = vmatprep.subr.bf16.mxu0 0
    %2933 = vmatpush1.bf16.msra.mxu0 0
    %2934 = vmatprep.subr.bf16.mxu0 0
    %2935 = vmatpush1.bf16.msra.mxu0 0
    %2936 = vmatprep.subr.bf16.mxu0 0
    %2937 = vmatpush1.bf16.msra.mxu0 0
    %2938 = vmatprep.subr.bf16.mxu0 0
    %2939 = vmatpush1.bf16.msra.mxu0 0
    %2940 = vmatprep.subr.bf16.mxu0 %v1776
    %2941 = vmatpush1.bf16.msra.mxu0 %v1775
    %2942 = vmatprep.subr.bf16.mxu0 0
    %2943 = vmatpush2.bf16.msra.mxu0 0
    %2944 = vmatprep.subr.bf16.mxu0 0
    %2945 = vmatpush2.bf16.msra.mxu0 0
    %2946 = vmatprep.subr.bf16.mxu0 0
    %2947 = vmatpush2.bf16.msra.mxu0 0
    %2948 = vmatprep.subr.bf16.mxu0 0
    %2949 = vmatpush2.bf16.msra.mxu0 0
    %2950 = vmatprep.subr.bf16.mxu0 0
    %2951 = vmatpush2.bf16.msra.mxu0 0
    %2952 = vmatprep.subr.bf16.mxu0 0
    %2953 = vmatpush2.bf16.msra.mxu0 0
    %2954 = vmatprep.subr.bf16.mxu0 0
    %2955 = vmatpush2.bf16.msra.mxu0 0
    %2956 = vmatprep.subr.bf16.mxu0 0
    %2957 = vmatpush2.bf16.msra.mxu0 0
    %2958 = vmatprep.mubr.bf16.mxu0 0
    %2959 = vmatmul.mubr.bf16.gmra.mxu0 %v2719
    %v2960 = vpop.f32.mrf.mxu0
    %v2961 = vadd.f32 %v2920, %v2960
    %v2962 = vpop.f32.mrf.mxu0
    %v2963 = vadd.f32 %v2922, %v2962
    %v2964 = vpop.f32.mrf.mxu0
    %v2965 = vpop.f32.mrf.mxu0
    %2966 = vdwg.mxu0
    %2967 = vmatprep.subr.bf16.mxu0 %v1486
    %2968 = vmatpush1.bf16.msra.mxu0 %v1485
    %2969 = vmatprep.subr.bf16.mxu0 %v1482
    %2970 = vmatpush1.bf16.msra.mxu0 %v1481
    %2971 = vmatprep.subr.bf16.mxu0 %v1478
    %2972 = vmatpush1.bf16.msra.mxu0 %v1477
    %2973 = vmatprep.subr.bf16.mxu0 %v1474
    %2974 = vmatpush1.bf16.msra.mxu0 %v1473
    %2975 = vmatprep.subr.bf16.mxu0 %v1470
    %2976 = vmatpush1.bf16.msra.mxu0 %v1469
    %2977 = vmatprep.subr.bf16.mxu0 %v1466
    %2978 = vmatpush1.bf16.msra.mxu0 %v1465
    %2979 = vmatprep.subr.bf16.mxu0 %v1462
    %2980 = vmatpush1.bf16.msra.mxu0 %v1461
    %2981 = vmatprep.subr.bf16.mxu0 %v1458
    %2982 = vmatpush1.bf16.msra.mxu0 %v1457
    %2983 = vmatprep.subr.bf16.mxu0 %v1518
    %2984 = vmatpush2.bf16.msra.mxu0 %v1517
    %2985 = vmatprep.subr.bf16.mxu0 %v1514
    %2986 = vmatpush2.bf16.msra.mxu0 %v1513
    %2987 = vmatprep.subr.bf16.mxu0 %v1510
    %2988 = vmatpush2.bf16.msra.mxu0 %v1509
    %2989 = vmatprep.subr.bf16.mxu0 %v1506
    %2990 = vmatpush2.bf16.msra.mxu0 %v1505
    %2991 = vmatprep.subr.bf16.mxu0 %v1502
    %2992 = vmatpush2.bf16.msra.mxu0 %v1501
    %2993 = vmatprep.subr.bf16.mxu0 %v1498
    %2994 = vmatpush2.bf16.msra.mxu0 %v1497
    %2995 = vmatprep.subr.bf16.mxu0 %v1494
    %2996 = vmatpush2.bf16.msra.mxu0 %v1493
    %2997 = vmatprep.subr.bf16.mxu0 %v1490
    %2998 = vmatpush2.bf16.msra.mxu0 %v1489
    %2999 = vmatprep.mubr.bf16.mxu0 %v2699
    %3000 = vmatmul.mubr.bf16.gmra.mxu0 %v2698
    %v3001 = vpop.f32.mrf.mxu0
    %v3002 = vadd.f32 0.0, %v3001
    %v3003 = vpop.f32.mrf.mxu0
    %v3004 = vadd.f32 0.0, %v3003
    %v3005 = vpop.f32.mrf.mxu0
    %v3006 = vpop.f32.mrf.mxu0
    %3007 = vdwg.mxu0
    %3008 = vmatprep.subr.bf16.mxu0 %v1550
    %3009 = vmatpush1.bf16.msra.mxu0 %v1549
    %3010 = vmatprep.subr.bf16.mxu0 %v1546
    %3011 = vmatpush1.bf16.msra.mxu0 %v1545
    %3012 = vmatprep.subr.bf16.mxu0 %v1542
    %3013 = vmatpush1.bf16.msra.mxu0 %v1541
    %3014 = vmatprep.subr.bf16.mxu0 %v1538
    %3015 = vmatpush1.bf16.msra.mxu0 %v1537
    %3016 = vmatprep.subr.bf16.mxu0 %v1534
    %3017 = vmatpush1.bf16.msra.mxu0 %v1533
    %3018 = vmatprep.subr.bf16.mxu0 %v1530
    %3019 = vmatpush1.bf16.msra.mxu0 %v1529
    %3020 = vmatprep.subr.bf16.mxu0 %v1526
    %3021 = vmatpush1.bf16.msra.mxu0 %v1525
    %3022 = vmatprep.subr.bf16.mxu0 %v1522
    %3023 = vmatpush1.bf16.msra.mxu0 %v1521
    %3024 = vmatprep.subr.bf16.mxu0 %v1582
    %3025 = vmatpush2.bf16.msra.mxu0 %v1581
    %3026 = vmatprep.subr.bf16.mxu0 %v1578
    %3027 = vmatpush2.bf16.msra.mxu0 %v1577
    %3028 = vmatprep.subr.bf16.mxu0 %v1574
    %3029 = vmatpush2.bf16.msra.mxu0 %v1573
    %3030 = vmatprep.subr.bf16.mxu0 %v1570
    %3031 = vmatpush2.bf16.msra.mxu0 %v1569
    %3032 = vmatprep.subr.bf16.mxu0 %v1566
    %3033 = vmatpush2.bf16.msra.mxu0 %v1565
    %3034 = vmatprep.subr.bf16.mxu0 %v1562
    %3035 = vmatpush2.bf16.msra.mxu0 %v1561
    %3036 = vmatprep.subr.bf16.mxu0 %v1558
    %3037 = vmatpush2.bf16.msra.mxu0 %v1557
    %3038 = vmatprep.subr.bf16.mxu0 %v1554
    %3039 = vmatpush2.bf16.msra.mxu0 %v1553
    %3040 = vmatprep.mubr.bf16.mxu0 %v2701
    %3041 = vmatmul.mubr.bf16.gmra.mxu0 %v2700
    %v3042 = vpop.f32.mrf.mxu0
    %v3043 = vadd.f32 %v3002, %v3042
    %v3044 = vpop.f32.mrf.mxu0
    %v3045 = vadd.f32 %v3004, %v3044
    %v3046 = vpop.f32.mrf.mxu0
    %v3047 = vpop.f32.mrf.mxu0
    %3048 = vdwg.mxu0
    %3049 = vmatprep.subr.bf16.mxu0 %v1614
    %3050 = vmatpush1.bf16.msra.mxu0 %v1613
    %3051 = vmatprep.subr.bf16.mxu0 %v1610
    %3052 = vmatpush1.bf16.msra.mxu0 %v1609
    %3053 = vmatprep.subr.bf16.mxu0 %v1606
    %3054 = vmatpush1.bf16.msra.mxu0 %v1605
    %3055 = vmatprep.subr.bf16.mxu0 %v1602
    %3056 = vmatpush1.bf16.msra.mxu0 %v1601
    %3057 = vmatprep.subr.bf16.mxu0 %v1598
    %3058 = vmatpush1.bf16.msra.mxu0 %v1597
    %3059 = vmatprep.subr.bf16.mxu0 %v1594
    %3060 = vmatpush1.bf16.msra.mxu0 %v1593
    %3061 = vmatprep.subr.bf16.mxu0 %v1590
    %3062 = vmatpush1.bf16.msra.mxu0 %v1589
    %3063 = vmatprep.subr.bf16.mxu0 %v1586
    %3064 = vmatpush1.bf16.msra.mxu0 %v1585
    %3065 = vmatprep.subr.bf16.mxu0 %v1646
    %3066 = vmatpush2.bf16.msra.mxu0 %v1645
    %3067 = vmatprep.subr.bf16.mxu0 %v1642
    %3068 = vmatpush2.bf16.msra.mxu0 %v1641
    %3069 = vmatprep.subr.bf16.mxu0 %v1638
    %3070 = vmatpush2.bf16.msra.mxu0 %v1637
    %3071 = vmatprep.subr.bf16.mxu0 %v1634
    %3072 = vmatpush2.bf16.msra.mxu0 %v1633
    %3073 = vmatprep.subr.bf16.mxu0 %v1630
    %3074 = vmatpush2.bf16.msra.mxu0 %v1629
    %3075 = vmatprep.subr.bf16.mxu0 %v1626
    %3076 = vmatpush2.bf16.msra.mxu0 %v1625
    %3077 = vmatprep.subr.bf16.mxu0 %v1622
    %3078 = vmatpush2.bf16.msra.mxu0 %v1621
    %3079 = vmatprep.subr.bf16.mxu0 %v1618
    %3080 = vmatpush2.bf16.msra.mxu0 %v1617
    %3081 = vmatprep.mubr.bf16.mxu0 %v2703
    %3082 = vmatmul.mubr.bf16.gmra.mxu0 %v2702
    %v3083 = vpop.f32.mrf.mxu0
    %v3084 = vadd.f32 %v3043, %v3083
    %v3085 = vpop.f32.mrf.mxu0
    %v3086 = vadd.f32 %v3045, %v3085
    %v3087 = vpop.f32.mrf.mxu0
    %v3088 = vpop.f32.mrf.mxu0
    %3089 = vdwg.mxu0
    %3090 = vmatprep.subr.bf16.mxu0 %v1678
    %3091 = vmatpush1.bf16.msra.mxu0 %v1677
    %3092 = vmatprep.subr.bf16.mxu0 %v1674
    %3093 = vmatpush1.bf16.msra.mxu0 %v1673
    %3094 = vmatprep.subr.bf16.mxu0 %v1670
    %3095 = vmatpush1.bf16.msra.mxu0 %v1669
    %3096 = vmatprep.subr.bf16.mxu0 %v1666
    %3097 = vmatpush1.bf16.msra.mxu0 %v1665
    %3098 = vmatprep.subr.bf16.mxu0 %v1662
    %3099 = vmatpush1.bf16.msra.mxu0 %v1661
    %3100 = vmatprep.subr.bf16.mxu0 %v1658
    %3101 = vmatpush1.bf16.msra.mxu0 %v1657
    %3102 = vmatprep.subr.bf16.mxu0 %v1654
    %3103 = vmatpush1.bf16.msra.mxu0 %v1653
    %3104 = vmatprep.subr.bf16.mxu0 %v1650
    %3105 = vmatpush1.bf16.msra.mxu0 %v1649
    %3106 = vmatprep.subr.bf16.mxu0 %v1710
    %3107 = vmatpush2.bf16.msra.mxu0 %v1709
    %3108 = vmatprep.subr.bf16.mxu0 %v1706
    %3109 = vmatpush2.bf16.msra.mxu0 %v1705
    %3110 = vmatprep.subr.bf16.mxu0 %v1702
    %3111 = vmatpush2.bf16.msra.mxu0 %v1701
    %3112 = vmatprep.subr.bf16.mxu0 %v1698
    %3113 = vmatpush2.bf16.msra.mxu0 %v1697
    %3114 = vmatprep.subr.bf16.mxu0 %v1694
    %3115 = vmatpush2.bf16.msra.mxu0 %v1693
    %3116 = vmatprep.subr.bf16.mxu0 %v1690
    %3117 = vmatpush2.bf16.msra.mxu0 %v1689
    %3118 = vmatprep.subr.bf16.mxu0 %v1686
    %3119 = vmatpush2.bf16.msra.mxu0 %v1685
    %3120 = vmatprep.subr.bf16.mxu0 %v1682
    %3121 = vmatpush2.bf16.msra.mxu0 %v1681
    %3122 = vmatprep.mubr.bf16.mxu0 %v2705
    %3123 = vmatmul.mubr.bf16.gmra.mxu0 %v2704
    %v3124 = vpop.f32.mrf.mxu0
    %v3125 = vadd.f32 %v3084, %v3124
    %v3126 = vpop.f32.mrf.mxu0
    %v3127 = vadd.f32 %v3086, %v3126
    %v3128 = vpop.f32.mrf.mxu0
    %v3129 = vpop.f32.mrf.mxu0
    %3130 = vdwg.mxu0
    %3131 = vmatprep.subr.bf16.mxu0 %v1742
    %3132 = vmatpush1.bf16.msra.mxu0 %v1741
    %3133 = vmatprep.subr.bf16.mxu0 %v1738
    %3134 = vmatpush1.bf16.msra.mxu0 %v1737
    %3135 = vmatprep.subr.bf16.mxu0 %v1734
    %3136 = vmatpush1.bf16.msra.mxu0 %v1733
    %3137 = vmatprep.subr.bf16.mxu0 %v1730
    %3138 = vmatpush1.bf16.msra.mxu0 %v1729
    %3139 = vmatprep.subr.bf16.mxu0 %v1726
    %3140 = vmatpush1.bf16.msra.mxu0 %v1725
    %3141 = vmatprep.subr.bf16.mxu0 %v1722
    %3142 = vmatpush1.bf16.msra.mxu0 %v1721
    %3143 = vmatprep.subr.bf16.mxu0 %v1718
    %3144 = vmatpush1.bf16.msra.mxu0 %v1717
    %3145 = vmatprep.subr.bf16.mxu0 %v1714
    %3146 = vmatpush1.bf16.msra.mxu0 %v1713
    %3147 = vmatprep.subr.bf16.mxu0 %v1774
    %3148 = vmatpush2.bf16.msra.mxu0 %v1773
    %3149 = vmatprep.subr.bf16.mxu0 %v1770
    %3150 = vmatpush2.bf16.msra.mxu0 %v1769
    %3151 = vmatprep.subr.bf16.mxu0 %v1766
    %3152 = vmatpush2.bf16.msra.mxu0 %v1765
    %3153 = vmatprep.subr.bf16.mxu0 %v1762
    %3154 = vmatpush2.bf16.msra.mxu0 %v1761
    %3155 = vmatprep.subr.bf16.mxu0 %v1758
    %3156 = vmatpush2.bf16.msra.mxu0 %v1757
    %3157 = vmatprep.subr.bf16.mxu0 %v1754
    %3158 = vmatpush2.bf16.msra.mxu0 %v1753
    %3159 = vmatprep.subr.bf16.mxu0 %v1750
    %3160 = vmatpush2.bf16.msra.mxu0 %v1749
    %3161 = vmatprep.subr.bf16.mxu0 %v1746
    %3162 = vmatpush2.bf16.msra.mxu0 %v1745
    %3163 = vmatprep.mubr.bf16.mxu0 %v2707
    %3164 = vmatmul.mubr.bf16.gmra.mxu0 %v2706
    %v3165 = vpop.f32.mrf.mxu0
    %v3166 = vadd.f32 %v3125, %v3165
    %v3167 = vpop.f32.mrf.mxu0
    %v3168 = vadd.f32 %v3127, %v3167
    %v3169 = vpop.f32.mrf.mxu0
    %v3170 = vpop.f32.mrf.mxu0
    %3171 = vdwg.mxu0
    %3172 = vmatprep.subr.bf16.mxu0 0
    %3173 = vmatpush1.bf16.msra.mxu0 0
    %3174 = vmatprep.subr.bf16.mxu0 0
    %3175 = vmatpush1.bf16.msra.mxu0 0
    %3176 = vmatprep.subr.bf16.mxu0 0
    %3177 = vmatpush1.bf16.msra.mxu0 0
    %3178 = vmatprep.subr.bf16.mxu0 0
    %3179 = vmatpush1.bf16.msra.mxu0 0
    %3180 = vmatprep.subr.bf16.mxu0 0
    %3181 = vmatpush1.bf16.msra.mxu0 0
    %3182 = vmatprep.subr.bf16.mxu0 0
    %3183 = vmatpush1.bf16.msra.mxu0 0
    %3184 = vmatprep.subr.bf16.mxu0 0
    %3185 = vmatpush1.bf16.msra.mxu0 0
    %3186 = vmatprep.subr.bf16.mxu0 %v1778
    %3187 = vmatpush1.bf16.msra.mxu0 %v1777
    %3188 = vmatprep.subr.bf16.mxu0 0
    %3189 = vmatpush2.bf16.msra.mxu0 0
    %3190 = vmatprep.subr.bf16.mxu0 0
    %3191 = vmatpush2.bf16.msra.mxu0 0
    %3192 = vmatprep.subr.bf16.mxu0 0
    %3193 = vmatpush2.bf16.msra.mxu0 0
    %3194 = vmatprep.subr.bf16.mxu0 0
    %3195 = vmatpush2.bf16.msra.mxu0 0
    %3196 = vmatprep.subr.bf16.mxu0 0
    %3197 = vmatpush2.bf16.msra.mxu0 0
    %3198 = vmatprep.subr.bf16.mxu0 0
    %3199 = vmatpush2.bf16.msra.mxu0 0
    %3200 = vmatprep.subr.bf16.mxu0 0
    %3201 = vmatpush2.bf16.msra.mxu0 0
    %3202 = vmatprep.subr.bf16.mxu0 0
    %3203 = vmatpush2.bf16.msra.mxu0 0
    %3204 = vmatprep.mubr.bf16.mxu0 0
    %3205 = vmatmul.mubr.bf16.gmra.mxu0 %v2719
    %v3206 = vpop.f32.mrf.mxu0
    %v3207 = vadd.f32 %v3166, %v3206
    %v3208 = vpop.f32.mrf.mxu0
    %v3209 = vadd.f32 %v3168, %v3208
    %v3210 = vpop.f32.mrf.mxu0
    %v3211 = vpop.f32.mrf.mxu0
    %3212 = vdwg.mxu0
    %v3213 = vmax.f32 %v2347, %v2961
    %v3214 = vmax.f32 %v2349, %v2963
    %v3215 = vmax.f32 %v2593, %v3207
    %v3216 = vmax.f32 %v2595, %v3209
    %v3217 = vld [vmem:[%s0] sm:$0xff]
    %v3218 = vld [vmem:[%s0 + $0x8] sm:$0x7]
    %v3221 = vcombine.high %v3217, %v3217
    %v3223 = vunpack.c.l.s4 1966171168
    %v3224 = vunpack.c.0.s8 %v3223
    %v3225 = vlaneseq
    %v3226 = vshrl.u32 %v3225, 7
    %v3227 = vsub.s32 %v3224, %v3226
    %v3228 = vrot.slane %v3217, %v3227
    %v3230 = vunpack.c.l.s4 1966171168
    %v3231 = vunpack.c.0.s8 %v3230
    %v3232 = vlaneseq
    %v3233 = vshrl.u32 %v3232, 7
    %v3234 = vsub.s32 %v3231, %v3233
    %v3235 = vrot.slane %v3221, %v3234
    %v3236 = vcombine.high %v3228, %v3228
    %v3237 = vcombine.high %v3235, %v3235
    %v3239 = vunpack.c.l.s4 1966171168
    %v3240 = vunpack.c.0.s8 %v3239
    %v3241 = vlaneseq
    %v3242 = vshrl.u32 %v3241, 7
    %v3243 = vsub.s32 %v3240, %v3242
    %v3244 = vrot.slane %v3228, %v3243
    %v3246 = vunpack.c.l.s4 1966171168
    %v3247 = vunpack.c.0.s8 %v3246
    %v3248 = vlaneseq
    %v3249 = vshrl.u32 %v3248, 7
    %v3250 = vsub.s32 %v3247, %v3249
    %v3251 = vrot.slane %v3235, %v3250
    %v3253 = vunpack.c.l.s4 1966171168
    %v3254 = vunpack.c.0.s8 %v3253
    %v3255 = vlaneseq
    %v3256 = vshrl.u32 %v3255, 7
    %v3257 = vsub.s32 %v3254, %v3256
    %v3258 = vrot.slane %v3236, %v3257
    %v3260 = vunpack.c.l.s4 1966171168
    %v3261 = vunpack.c.0.s8 %v3260
    %v3262 = vlaneseq
    %v3263 = vshrl.u32 %v3262, 7
    %v3264 = vsub.s32 %v3261, %v3263
    %v3265 = vrot.slane %v3237, %v3264
    %v3266 = vcombine.high %v3244, %v3244
    %v3267 = vcombine.high %v3251, %v3251
    %v3268 = vcombine.high %v3258, %v3258
    %v3269 = vcombine.high %v3265, %v3265
    %v3271 = vunpack.c.l.s4 1966171168
    %v3272 = vunpack.c.0.s8 %v3271
    %v3273 = vlaneseq
    %v3274 = vshrl.u32 %v3273, 7
    %v3275 = vsub.s32 %v3272, %v3274
    %v3276 = vrot.slane %v3218, %v3275
    %v3277 = vcombine.high %v3276, %v3276
    %v3279 = vunpack.c.l.s4 1966171168
    %v3280 = vunpack.c.0.s8 %v3279
    %v3281 = vlaneseq
    %v3282 = vshrl.u32 %v3281, 7
    %v3283 = vsub.s32 %v3280, %v3282
    %v3284 = vrot.slane %v3276, %v3283
    %v3286 = vunpack.c.l.s4 1966171168
    %v3287 = vunpack.c.0.s8 %v3286
    %v3288 = vlaneseq
    %v3289 = vshrl.u32 %v3288, 7
    %v3290 = vsub.s32 %v3287, %v3289
    %v3291 = vrot.slane %v3277, %v3290
    %v3292 = vcombine.high %v3284, %v3284
    %3293 = vrot.lane.b32.xlu0 %v3244, 56
    %v3294 = vpop.permute.xlu0 %3293
    %3295 = vrot.lane.b32.xlu0 %v3258, 56
    %v3296 = vpop.permute.xlu0 %3295
    %3297 = vrot.lane.b32.xlu0 %v3266, 56
    %v3298 = vpop.permute.xlu0 %3297
    %3299 = vrot.lane.b32.xlu0 %v3268, 56
    %v3300 = vpop.permute.xlu0 %3299
    %3301 = vrot.lane.b32.xlu0 %v3251, 56
    %v3302 = vpop.permute.xlu0 %3301
    %3303 = vrot.lane.b32.xlu0 %v3265, 56
    %v3304 = vpop.permute.xlu0 %3303
    %3305 = vrot.lane.b32.xlu0 %v3267, 56
    %v3306 = vpop.permute.xlu0 %3305
    %3307 = vrot.lane.b32.xlu0 %v3269, 56
    %v3308 = vpop.permute.xlu0 %3307
    %3309 = vrot.lane.b32.xlu0 %v3284, 56
    %v3310 = vpop.permute.xlu0 %3309
    %3311 = vrot.lane.b32.xlu0 %v3291, 56
    %v3312 = vpop.permute.xlu0 %3311
    %3313 = vrot.lane.b32.xlu0 %v3292, 56
    %v3314 = vpop.permute.xlu0 %3313
    %vm3315 = vcmask 457728
    %v3316 = vsel %vm3315, %v3294, %v3296
    %v3317 = vsel %vm3315, %v3296, %v3298
    %v3318 = vsel %vm3315, %v3298, %v3300
    %v3319 = vsel %vm3315, %v3300, %v3302
    %v3320 = vsel %vm3315, %v3302, %v3304
    %v3321 = vsel %vm3315, %v3304, %v3306
    %v3322 = vsel %vm3315, %v3306, %v3308
    %v3323 = vsel %vm3315, %v3308, %v3310
    %v3324 = vsel %vm3315, %v3310, %v3312
    %v3325 = vsel %vm3315, %v3312, %v3314
    %v3337 = vsel %vm2103, %v3314, 0
    %3339 = vmatprep.subr.bf16.mxu0 %v1484
    %3340 = vmatpush1.bf16.msra.mxu0 %v1483
    %3341 = vmatprep.subr.bf16.mxu0 %v1480
    %3342 = vmatpush1.bf16.msra.mxu0 %v1479
    %3343 = vmatprep.subr.bf16.mxu0 %v1476
    %3344 = vmatpush1.bf16.msra.mxu0 %v1475
    %3345 = vmatprep.subr.bf16.mxu0 %v1472
    %3346 = vmatpush1.bf16.msra.mxu0 %v1471
    %3347 = vmatprep.subr.bf16.mxu0 %v1468
    %3348 = vmatpush1.bf16.msra.mxu0 %v1467
    %3349 = vmatprep.subr.bf16.mxu0 %v1464
    %3350 = vmatpush1.bf16.msra.mxu0 %v1463
    %3351 = vmatprep.subr.bf16.mxu0 %v1460
    %3352 = vmatpush1.bf16.msra.mxu0 %v1459
    %3353 = vmatprep.subr.bf16.mxu0 %v1456
    %3354 = vmatpush1.bf16.msra.mxu0 %v1455
    %3355 = vmatprep.subr.bf16.mxu0 %v1516
    %3356 = vmatpush2.bf16.msra.mxu0 %v1515
    %3357 = vmatprep.subr.bf16.mxu0 %v1512
    %3358 = vmatpush2.bf16.msra.mxu0 %v1511
    %3359 = vmatprep.subr.bf16.mxu0 %v1508
    %3360 = vmatpush2.bf16.msra.mxu0 %v1507
    %3361 = vmatprep.subr.bf16.mxu0 %v1504
    %3362 = vmatpush2.bf16.msra.mxu0 %v1503
    %3363 = vmatprep.subr.bf16.mxu0 %v1500
    %3364 = vmatpush2.bf16.msra.mxu0 %v1499
    %3365 = vmatprep.subr.bf16.mxu0 %v1496
    %3366 = vmatpush2.bf16.msra.mxu0 %v1495
    %3367 = vmatprep.subr.bf16.mxu0 %v1492
    %3368 = vmatpush2.bf16.msra.mxu0 %v1491
    %3369 = vmatprep.subr.bf16.mxu0 %v1488
    %3370 = vmatpush2.bf16.msra.mxu0 %v1487
    %3371 = vmatprep.mubr.bf16.mxu0 %v3317
    %3372 = vmatmul.mubr.bf16.gmra.mxu0 %v3316
    %v3373 = vpop.f32.mrf.mxu0
    %v3374 = vadd.f32 0.0, %v3373
    %v3375 = vpop.f32.mrf.mxu0
    %v3376 = vadd.f32 0.0, %v3375
    %v3377 = vpop.f32.mrf.mxu0
    %v3378 = vpop.f32.mrf.mxu0
    %3379 = vdwg.mxu0
    %3380 = vmatprep.subr.bf16.mxu0 %v1548
    %3381 = vmatpush1.bf16.msra.mxu0 %v1547
    %3382 = vmatprep.subr.bf16.mxu0 %v1544
    %3383 = vmatpush1.bf16.msra.mxu0 %v1543
    %3384 = vmatprep.subr.bf16.mxu0 %v1540
    %3385 = vmatpush1.bf16.msra.mxu0 %v1539
    %3386 = vmatprep.subr.bf16.mxu0 %v1536
    %3387 = vmatpush1.bf16.msra.mxu0 %v1535
    %3388 = vmatprep.subr.bf16.mxu0 %v1532
    %3389 = vmatpush1.bf16.msra.mxu0 %v1531
    %3390 = vmatprep.subr.bf16.mxu0 %v1528
    %3391 = vmatpush1.bf16.msra.mxu0 %v1527
    %3392 = vmatprep.subr.bf16.mxu0 %v1524
    %3393 = vmatpush1.bf16.msra.mxu0 %v1523
    %3394 = vmatprep.subr.bf16.mxu0 %v1520
    %3395 = vmatpush1.bf16.msra.mxu0 %v1519
    %3396 = vmatprep.subr.bf16.mxu0 %v1580
    %3397 = vmatpush2.bf16.msra.mxu0 %v1579
    %3398 = vmatprep.subr.bf16.mxu0 %v1576
    %3399 = vmatpush2.bf16.msra.mxu0 %v1575
    %3400 = vmatprep.subr.bf16.mxu0 %v1572
    %3401 = vmatpush2.bf16.msra.mxu0 %v1571
    %3402 = vmatprep.subr.bf16.mxu0 %v1568
    %3403 = vmatpush2.bf16.msra.mxu0 %v1567
    %3404 = vmatprep.subr.bf16.mxu0 %v1564
    %3405 = vmatpush2.bf16.msra.mxu0 %v1563
    %3406 = vmatprep.subr.bf16.mxu0 %v1560
    %3407 = vmatpush2.bf16.msra.mxu0 %v1559
    %3408 = vmatprep.subr.bf16.mxu0 %v1556
    %3409 = vmatpush2.bf16.msra.mxu0 %v1555
    %3410 = vmatprep.subr.bf16.mxu0 %v1552
    %3411 = vmatpush2.bf16.msra.mxu0 %v1551
    %3412 = vmatprep.mubr.bf16.mxu0 %v3319
    %3413 = vmatmul.mubr.bf16.gmra.mxu0 %v3318
    %v3414 = vpop.f32.mrf.mxu0
    %v3415 = vadd.f32 %v3374, %v3414
    %v3416 = vpop.f32.mrf.mxu0
    %v3417 = vadd.f32 %v3376, %v3416
    %v3418 = vpop.f32.mrf.mxu0
    %v3419 = vpop.f32.mrf.mxu0
    %3420 = vdwg.mxu0
    %3421 = vmatprep.subr.bf16.mxu0 %v1612
    %3422 = vmatpush1.bf16.msra.mxu0 %v1611
    %3423 = vmatprep.subr.bf16.mxu0 %v1608
    %3424 = vmatpush1.bf16.msra.mxu0 %v1607
    %3425 = vmatprep.subr.bf16.mxu0 %v1604
    %3426 = vmatpush1.bf16.msra.mxu0 %v1603
    %3427 = vmatprep.subr.bf16.mxu0 %v1600
    %3428 = vmatpush1.bf16.msra.mxu0 %v1599
    %3429 = vmatprep.subr.bf16.mxu0 %v1596
    %3430 = vmatpush1.bf16.msra.mxu0 %v1595
    %3431 = vmatprep.subr.bf16.mxu0 %v1592
    %3432 = vmatpush1.bf16.msra.mxu0 %v1591
    %3433 = vmatprep.subr.bf16.mxu0 %v1588
    %3434 = vmatpush1.bf16.msra.mxu0 %v1587
    %3435 = vmatprep.subr.bf16.mxu0 %v1584
    %3436 = vmatpush1.bf16.msra.mxu0 %v1583
    %3437 = vmatprep.subr.bf16.mxu0 %v1644
    %3438 = vmatpush2.bf16.msra.mxu0 %v1643
    %3439 = vmatprep.subr.bf16.mxu0 %v1640
    %3440 = vmatpush2.bf16.msra.mxu0 %v1639
    %3441 = vmatprep.subr.bf16.mxu0 %v1636
    %3442 = vmatpush2.bf16.msra.mxu0 %v1635
    %3443 = vmatprep.subr.bf16.mxu0 %v1632
    %3444 = vmatpush2.bf16.msra.mxu0 %v1631
    %3445 = vmatprep.subr.bf16.mxu0 %v1628
    %3446 = vmatpush2.bf16.msra.mxu0 %v1627
    %3447 = vmatprep.subr.bf16.mxu0 %v1624
    %3448 = vmatpush2.bf16.msra.mxu0 %v1623
    %3449 = vmatprep.subr.bf16.mxu0 %v1620
    %3450 = vmatpush2.bf16.msra.mxu0 %v1619
    %3451 = vmatprep.subr.bf16.mxu0 %v1616
    %3452 = vmatpush2.bf16.msra.mxu0 %v1615
    %3453 = vmatprep.mubr.bf16.mxu0 %v3321
    %3454 = vmatmul.mubr.bf16.gmra.mxu0 %v3320
    %v3455 = vpop.f32.mrf.mxu0
    %v3456 = vadd.f32 %v3415, %v3455
    %v3457 = vpop.f32.mrf.mxu0
    %v3458 = vadd.f32 %v3417, %v3457
    %v3459 = vpop.f32.mrf.mxu0
    %v3460 = vpop.f32.mrf.mxu0
    %3461 = vdwg.mxu0
    %3462 = vmatprep.subr.bf16.mxu0 %v1676
    %3463 = vmatpush1.bf16.msra.mxu0 %v1675
    %3464 = vmatprep.subr.bf16.mxu0 %v1672
    %3465 = vmatpush1.bf16.msra.mxu0 %v1671
    %3466 = vmatprep.subr.bf16.mxu0 %v1668
    %3467 = vmatpush1.bf16.msra.mxu0 %v1667
    %3468 = vmatprep.subr.bf16.mxu0 %v1664
    %3469 = vmatpush1.bf16.msra.mxu0 %v1663
    %3470 = vmatprep.subr.bf16.mxu0 %v1660
    %3471 = vmatpush1.bf16.msra.mxu0 %v1659
    %3472 = vmatprep.subr.bf16.mxu0 %v1656
    %3473 = vmatpush1.bf16.msra.mxu0 %v1655
    %3474 = vmatprep.subr.bf16.mxu0 %v1652
    %3475 = vmatpush1.bf16.msra.mxu0 %v1651
    %3476 = vmatprep.subr.bf16.mxu0 %v1648
    %3477 = vmatpush1.bf16.msra.mxu0 %v1647
    %3478 = vmatprep.subr.bf16.mxu0 %v1708
    %3479 = vmatpush2.bf16.msra.mxu0 %v1707
    %3480 = vmatprep.subr.bf16.mxu0 %v1704
    %3481 = vmatpush2.bf16.msra.mxu0 %v1703
    %3482 = vmatprep.subr.bf16.mxu0 %v1700
    %3483 = vmatpush2.bf16.msra.mxu0 %v1699
    %3484 = vmatprep.subr.bf16.mxu0 %v1696
    %3485 = vmatpush2.bf16.msra.mxu0 %v1695
    %3486 = vmatprep.subr.bf16.mxu0 %v1692
    %3487 = vmatpush2.bf16.msra.mxu0 %v1691
    %3488 = vmatprep.subr.bf16.mxu0 %v1688
    %3489 = vmatpush2.bf16.msra.mxu0 %v1687
    %3490 = vmatprep.subr.bf16.mxu0 %v1684
    %3491 = vmatpush2.bf16.msra.mxu0 %v1683
    %3492 = vmatprep.subr.bf16.mxu0 %v1680
    %3493 = vmatpush2.bf16.msra.mxu0 %v1679
    %3494 = vmatprep.mubr.bf16.mxu0 %v3323
    %3495 = vmatmul.mubr.bf16.gmra.mxu0 %v3322
    %v3496 = vpop.f32.mrf.mxu0
    %v3497 = vadd.f32 %v3456, %v3496
    %v3498 = vpop.f32.mrf.mxu0
    %v3499 = vadd.f32 %v3458, %v3498
    %v3500 = vpop.f32.mrf.mxu0
    %v3501 = vpop.f32.mrf.mxu0
    %3502 = vdwg.mxu0
    %3503 = vmatprep.subr.bf16.mxu0 %v1740
    %3504 = vmatpush1.bf16.msra.mxu0 %v1739
    %3505 = vmatprep.subr.bf16.mxu0 %v1736
    %3506 = vmatpush1.bf16.msra.mxu0 %v1735
    %3507 = vmatprep.subr.bf16.mxu0 %v1732
    %3508 = vmatpush1.bf16.msra.mxu0 %v1731
    %3509 = vmatprep.subr.bf16.mxu0 %v1728
    %3510 = vmatpush1.bf16.msra.mxu0 %v1727
    %3511 = vmatprep.subr.bf16.mxu0 %v1724
    %3512 = vmatpush1.bf16.msra.mxu0 %v1723
    %3513 = vmatprep.subr.bf16.mxu0 %v1720
    %3514 = vmatpush1.bf16.msra.mxu0 %v1719
    %3515 = vmatprep.subr.bf16.mxu0 %v1716
    %3516 = vmatpush1.bf16.msra.mxu0 %v1715
    %3517 = vmatprep.subr.bf16.mxu0 %v1712
    %3518 = vmatpush1.bf16.msra.mxu0 %v1711
    %3519 = vmatprep.subr.bf16.mxu0 %v1772
    %3520 = vmatpush2.bf16.msra.mxu0 %v1771
    %3521 = vmatprep.subr.bf16.mxu0 %v1768
    %3522 = vmatpush2.bf16.msra.mxu0 %v1767
    %3523 = vmatprep.subr.bf16.mxu0 %v1764
    %3524 = vmatpush2.bf16.msra.mxu0 %v1763
    %3525 = vmatprep.subr.bf16.mxu0 %v1760
    %3526 = vmatpush2.bf16.msra.mxu0 %v1759
    %3527 = vmatprep.subr.bf16.mxu0 %v1756
    %3528 = vmatpush2.bf16.msra.mxu0 %v1755
    %3529 = vmatprep.subr.bf16.mxu0 %v1752
    %3530 = vmatpush2.bf16.msra.mxu0 %v1751
    %3531 = vmatprep.subr.bf16.mxu0 %v1748
    %3532 = vmatpush2.bf16.msra.mxu0 %v1747
    %3533 = vmatprep.subr.bf16.mxu0 %v1744
    %3534 = vmatpush2.bf16.msra.mxu0 %v1743
    %3535 = vmatprep.mubr.bf16.mxu0 %v3325
    %3536 = vmatmul.mubr.bf16.gmra.mxu0 %v3324
    %v3537 = vpop.f32.mrf.mxu0
    %v3538 = vadd.f32 %v3497, %v3537
    %v3539 = vpop.f32.mrf.mxu0
    %v3540 = vadd.f32 %v3499, %v3539
    %v3541 = vpop.f32.mrf.mxu0
    %v3542 = vpop.f32.mrf.mxu0
    %3543 = vdwg.mxu0
    %3544 = vmatprep.subr.bf16.mxu0 0
    %3545 = vmatpush1.bf16.msra.mxu0 0
    %3546 = vmatprep.subr.bf16.mxu0 0
    %3547 = vmatpush1.bf16.msra.mxu0 0
    %3548 = vmatprep.subr.bf16.mxu0 0
    %3549 = vmatpush1.bf16.msra.mxu0 0
    %3550 = vmatprep.subr.bf16.mxu0 0
    %3551 = vmatpush1.bf16.msra.mxu0 0
    %3552 = vmatprep.subr.bf16.mxu0 0
    %3553 = vmatpush1.bf16.msra.mxu0 0
    %3554 = vmatprep.subr.bf16.mxu0 0
    %3555 = vmatpush1.bf16.msra.mxu0 0
    %3556 = vmatprep.subr.bf16.mxu0 0
    %3557 = vmatpush1.bf16.msra.mxu0 0
    %3558 = vmatprep.subr.bf16.mxu0 %v1776
    %3559 = vmatpush1.bf16.msra.mxu0 %v1775
    %3560 = vmatprep.subr.bf16.mxu0 0
    %3561 = vmatpush2.bf16.msra.mxu0 0
    %3562 = vmatprep.subr.bf16.mxu0 0
    %3563 = vmatpush2.bf16.msra.mxu0 0
    %3564 = vmatprep.subr.bf16.mxu0 0
    %3565 = vmatpush2.bf16.msra.mxu0 0
    %3566 = vmatprep.subr.bf16.mxu0 0
    %3567 = vmatpush2.bf16.msra.mxu0 0
    %3568 = vmatprep.subr.bf16.mxu0 0
    %3569 = vmatpush2.bf16.msra.mxu0 0
    %3570 = vmatprep.subr.bf16.mxu0 0
    %3571 = vmatpush2.bf16.msra.mxu0 0
    %3572 = vmatprep.subr.bf16.mxu0 0
    %3573 = vmatpush2.bf16.msra.mxu0 0
    %3574 = vmatprep.subr.bf16.mxu0 0
    %3575 = vmatpush2.bf16.msra.mxu0 0
    %3576 = vmatprep.mubr.bf16.mxu0 0
    %3577 = vmatmul.mubr.bf16.gmra.mxu0 %v3337
    %v3578 = vpop.f32.mrf.mxu0
    %v3579 = vadd.f32 %v3538, %v3578
    %v3580 = vpop.f32.mrf.mxu0
    %v3581 = vadd.f32 %v3540, %v3580
    %v3582 = vpop.f32.mrf.mxu0
    %v3583 = vpop.f32.mrf.mxu0
    %3584 = vdwg.mxu0
    %3585 = vmatprep.subr.bf16.mxu0 %v1486
    %3586 = vmatpush1.bf16.msra.mxu0 %v1485
    %3587 = vmatprep.subr.bf16.mxu0 %v1482
    %3588 = vmatpush1.bf16.msra.mxu0 %v1481
    %3589 = vmatprep.subr.bf16.mxu0 %v1478
    %3590 = vmatpush1.bf16.msra.mxu0 %v1477
    %3591 = vmatprep.subr.bf16.mxu0 %v1474
    %3592 = vmatpush1.bf16.msra.mxu0 %v1473
    %3593 = vmatprep.subr.bf16.mxu0 %v1470
    %3594 = vmatpush1.bf16.msra.mxu0 %v1469
    %3595 = vmatprep.subr.bf16.mxu0 %v1466
    %3596 = vmatpush1.bf16.msra.mxu0 %v1465
    %3597 = vmatprep.subr.bf16.mxu0 %v1462
    %3598 = vmatpush1.bf16.msra.mxu0 %v1461
    %3599 = vmatprep.subr.bf16.mxu0 %v1458
    %3600 = vmatpush1.bf16.msra.mxu0 %v1457
    %3601 = vmatprep.subr.bf16.mxu0 %v1518
    %3602 = vmatpush2.bf16.msra.mxu0 %v1517
    %3603 = vmatprep.subr.bf16.mxu0 %v1514
    %3604 = vmatpush2.bf16.msra.mxu0 %v1513
    %3605 = vmatprep.subr.bf16.mxu0 %v1510
    %3606 = vmatpush2.bf16.msra.mxu0 %v1509
    %3607 = vmatprep.subr.bf16.mxu0 %v1506
    %3608 = vmatpush2.bf16.msra.mxu0 %v1505
    %3609 = vmatprep.subr.bf16.mxu0 %v1502
    %3610 = vmatpush2.bf16.msra.mxu0 %v1501
    %3611 = vmatprep.subr.bf16.mxu0 %v1498
    %3612 = vmatpush2.bf16.msra.mxu0 %v1497
    %3613 = vmatprep.subr.bf16.mxu0 %v1494
    %3614 = vmatpush2.bf16.msra.mxu0 %v1493
    %3615 = vmatprep.subr.bf16.mxu0 %v1490
    %3616 = vmatpush2.bf16.msra.mxu0 %v1489
    %3617 = vmatprep.mubr.bf16.mxu0 %v3317
    %3618 = vmatmul.mubr.bf16.gmra.mxu0 %v3316
    %v3619 = vpop.f32.mrf.mxu0
    %v3620 = vadd.f32 0.0, %v3619
    %v3621 = vpop.f32.mrf.mxu0
    %v3622 = vadd.f32 0.0, %v3621
    %v3623 = vpop.f32.mrf.mxu0
    %v3624 = vpop.f32.mrf.mxu0
    %3625 = vdwg.mxu0
    %3626 = vmatprep.subr.bf16.mxu0 %v1550
    %3627 = vmatpush1.bf16.msra.mxu0 %v1549
    %3628 = vmatprep.subr.bf16.mxu0 %v1546
    %3629 = vmatpush1.bf16.msra.mxu0 %v1545
    %3630 = vmatprep.subr.bf16.mxu0 %v1542
    %3631 = vmatpush1.bf16.msra.mxu0 %v1541
    %3632 = vmatprep.subr.bf16.mxu0 %v1538
    %3633 = vmatpush1.bf16.msra.mxu0 %v1537
    %3634 = vmatprep.subr.bf16.mxu0 %v1534
    %3635 = vmatpush1.bf16.msra.mxu0 %v1533
    %3636 = vmatprep.subr.bf16.mxu0 %v1530
    %3637 = vmatpush1.bf16.msra.mxu0 %v1529
    %3638 = vmatprep.subr.bf16.mxu0 %v1526
    %3639 = vmatpush1.bf16.msra.mxu0 %v1525
    %3640 = vmatprep.subr.bf16.mxu0 %v1522
    %3641 = vmatpush1.bf16.msra.mxu0 %v1521
    %3642 = vmatprep.subr.bf16.mxu0 %v1582
    %3643 = vmatpush2.bf16.msra.mxu0 %v1581
    %3644 = vmatprep.subr.bf16.mxu0 %v1578
    %3645 = vmatpush2.bf16.msra.mxu0 %v1577
    %3646 = vmatprep.subr.bf16.mxu0 %v1574
    %3647 = vmatpush2.bf16.msra.mxu0 %v1573
    %3648 = vmatprep.subr.bf16.mxu0 %v1570
    %3649 = vmatpush2.bf16.msra.mxu0 %v1569
    %3650 = vmatprep.subr.bf16.mxu0 %v1566
    %3651 = vmatpush2.bf16.msra.mxu0 %v1565
    %3652 = vmatprep.subr.bf16.mxu0 %v1562
    %3653 = vmatpush2.bf16.msra.mxu0 %v1561
    %3654 = vmatprep.subr.bf16.mxu0 %v1558
    %3655 = vmatpush2.bf16.msra.mxu0 %v1557
    %3656 = vmatprep.subr.bf16.mxu0 %v1554
    %3657 = vmatpush2.bf16.msra.mxu0 %v1553
    %3658 = vmatprep.mubr.bf16.mxu0 %v3319
    %3659 = vmatmul.mubr.bf16.gmra.mxu0 %v3318
    %v3660 = vpop.f32.mrf.mxu0
    %v3661 = vadd.f32 %v3620, %v3660
    %v3662 = vpop.f32.mrf.mxu0
    %v3663 = vadd.f32 %v3622, %v3662
    %v3664 = vpop.f32.mrf.mxu0
    %v3665 = vpop.f32.mrf.mxu0
    %3666 = vdwg.mxu0
    %3667 = vmatprep.subr.bf16.mxu0 %v1614
    %3668 = vmatpush1.bf16.msra.mxu0 %v1613
    %3669 = vmatprep.subr.bf16.mxu0 %v1610
    %3670 = vmatpush1.bf16.msra.mxu0 %v1609
    %3671 = vmatprep.subr.bf16.mxu0 %v1606
    %3672 = vmatpush1.bf16.msra.mxu0 %v1605
    %3673 = vmatprep.subr.bf16.mxu0 %v1602
    %3674 = vmatpush1.bf16.msra.mxu0 %v1601
    %3675 = vmatprep.subr.bf16.mxu0 %v1598
    %3676 = vmatpush1.bf16.msra.mxu0 %v1597
    %3677 = vmatprep.subr.bf16.mxu0 %v1594
    %3678 = vmatpush1.bf16.msra.mxu0 %v1593
    %3679 = vmatprep.subr.bf16.mxu0 %v1590
    %3680 = vmatpush1.bf16.msra.mxu0 %v1589
    %3681 = vmatprep.subr.bf16.mxu0 %v1586
    %3682 = vmatpush1.bf16.msra.mxu0 %v1585
    %3683 = vmatprep.subr.bf16.mxu0 %v1646
    %3684 = vmatpush2.bf16.msra.mxu0 %v1645
    %3685 = vmatprep.subr.bf16.mxu0 %v1642
    %3686 = vmatpush2.bf16.msra.mxu0 %v1641
    %3687 = vmatprep.subr.bf16.mxu0 %v1638
    %3688 = vmatpush2.bf16.msra.mxu0 %v1637
    %3689 = vmatprep.subr.bf16.mxu0 %v1634
    %3690 = vmatpush2.bf16.msra.mxu0 %v1633
    %3691 = vmatprep.subr.bf16.mxu0 %v1630
    %3692 = vmatpush2.bf16.msra.mxu0 %v1629
    %3693 = vmatprep.subr.bf16.mxu0 %v1626
    %3694 = vmatpush2.bf16.msra.mxu0 %v1625
    %3695 = vmatprep.subr.bf16.mxu0 %v1622
    %3696 = vmatpush2.bf16.msra.mxu0 %v1621
    %3697 = vmatprep.subr.bf16.mxu0 %v1618
    %3698 = vmatpush2.bf16.msra.mxu0 %v1617
    %3699 = vmatprep.mubr.bf16.mxu0 %v3321
    %3700 = vmatmul.mubr.bf16.gmra.mxu0 %v3320
    %v3701 = vpop.f32.mrf.mxu0
    %v3702 = vadd.f32 %v3661, %v3701
    %v3703 = vpop.f32.mrf.mxu0
    %v3704 = vadd.f32 %v3663, %v3703
    %v3705 = vpop.f32.mrf.mxu0
    %v3706 = vpop.f32.mrf.mxu0
    %3707 = vdwg.mxu0
    %3708 = vmatprep.subr.bf16.mxu0 %v1678
    %3709 = vmatpush1.bf16.msra.mxu0 %v1677
    %3710 = vmatprep.subr.bf16.mxu0 %v1674
    %3711 = vmatpush1.bf16.msra.mxu0 %v1673
    %3712 = vmatprep.subr.bf16.mxu0 %v1670
    %3713 = vmatpush1.bf16.msra.mxu0 %v1669
    %3714 = vmatprep.subr.bf16.mxu0 %v1666
    %3715 = vmatpush1.bf16.msra.mxu0 %v1665
    %3716 = vmatprep.subr.bf16.mxu0 %v1662
    %3717 = vmatpush1.bf16.msra.mxu0 %v1661
    %3718 = vmatprep.subr.bf16.mxu0 %v1658
    %3719 = vmatpush1.bf16.msra.mxu0 %v1657
    %3720 = vmatprep.subr.bf16.mxu0 %v1654
    %3721 = vmatpush1.bf16.msra.mxu0 %v1653
    %3722 = vmatprep.subr.bf16.mxu0 %v1650
    %3723 = vmatpush1.bf16.msra.mxu0 %v1649
    %3724 = vmatprep.subr.bf16.mxu0 %v1710
    %3725 = vmatpush2.bf16.msra.mxu0 %v1709
    %3726 = vmatprep.subr.bf16.mxu0 %v1706
    %3727 = vmatpush2.bf16.msra.mxu0 %v1705
    %3728 = vmatprep.subr.bf16.mxu0 %v1702
    %3729 = vmatpush2.bf16.msra.mxu0 %v1701
    %3730 = vmatprep.subr.bf16.mxu0 %v1698
    %3731 = vmatpush2.bf16.msra.mxu0 %v1697
    %3732 = vmatprep.subr.bf16.mxu0 %v1694
    %3733 = vmatpush2.bf16.msra.mxu0 %v1693
    %3734 = vmatprep.subr.bf16.mxu0 %v1690
    %3735 = vmatpush2.bf16.msra.mxu0 %v1689
    %3736 = vmatprep.subr.bf16.mxu0 %v1686
    %3737 = vmatpush2.bf16.msra.mxu0 %v1685
    %3738 = vmatprep.subr.bf16.mxu0 %v1682
    %3739 = vmatpush2.bf16.msra.mxu0 %v1681
    %3740 = vmatprep.mubr.bf16.mxu0 %v3323
    %3741 = vmatmul.mubr.bf16.gmra.mxu0 %v3322
    %v3742 = vpop.f32.mrf.mxu0
    %v3743 = vadd.f32 %v3702, %v3742
    %v3744 = vpop.f32.mrf.mxu0
    %v3745 = vadd.f32 %v3704, %v3744
    %v3746 = vpop.f32.mrf.mxu0
    %v3747 = vpop.f32.mrf.mxu0
    %3748 = vdwg.mxu0
    %3749 = vmatprep.subr.bf16.mxu0 %v1742
    %3750 = vmatpush1.bf16.msra.mxu0 %v1741
    %3751 = vmatprep.subr.bf16.mxu0 %v1738
    %3752 = vmatpush1.bf16.msra.mxu0 %v1737
    %3753 = vmatprep.subr.bf16.mxu0 %v1734
    %3754 = vmatpush1.bf16.msra.mxu0 %v1733
    %3755 = vmatprep.subr.bf16.mxu0 %v1730
    %3756 = vmatpush1.bf16.msra.mxu0 %v1729
    %3757 = vmatprep.subr.bf16.mxu0 %v1726
    %3758 = vmatpush1.bf16.msra.mxu0 %v1725
    %3759 = vmatprep.subr.bf16.mxu0 %v1722
    %3760 = vmatpush1.bf16.msra.mxu0 %v1721
    %3761 = vmatprep.subr.bf16.mxu0 %v1718
    %3762 = vmatpush1.bf16.msra.mxu0 %v1717
    %3763 = vmatprep.subr.bf16.mxu0 %v1714
    %3764 = vmatpush1.bf16.msra.mxu0 %v1713
    %3765 = vmatprep.subr.bf16.mxu0 %v1774
    %3766 = vmatpush2.bf16.msra.mxu0 %v1773
    %3767 = vmatprep.subr.bf16.mxu0 %v1770
    %3768 = vmatpush2.bf16.msra.mxu0 %v1769
    %3769 = vmatprep.subr.bf16.mxu0 %v1766
    %3770 = vmatpush2.bf16.msra.mxu0 %v1765
    %3771 = vmatprep.subr.bf16.mxu0 %v1762
    %3772 = vmatpush2.bf16.msra.mxu0 %v1761
    %3773 = vmatprep.subr.bf16.mxu0 %v1758
    %3774 = vmatpush2.bf16.msra.mxu0 %v1757
    %3775 = vmatprep.subr.bf16.mxu0 %v1754
    %3776 = vmatpush2.bf16.msra.mxu0 %v1753
    %3777 = vmatprep.subr.bf16.mxu0 %v1750
    %3778 = vmatpush2.bf16.msra.mxu0 %v1749
    %3779 = vmatprep.subr.bf16.mxu0 %v1746
    %3780 = vmatpush2.bf16.msra.mxu0 %v1745
    %3781 = vmatprep.mubr.bf16.mxu0 %v3325
    %3782 = vmatmul.mubr.bf16.gmra.mxu0 %v3324
    %v3783 = vpop.f32.mrf.mxu0
    %v3784 = vadd.f32 %v3743, %v3783
    %v3785 = vpop.f32.mrf.mxu0
    %v3786 = vadd.f32 %v3745, %v3785
    %v3787 = vpop.f32.mrf.mxu0
    %v3788 = vpop.f32.mrf.mxu0
    %3789 = vdwg.mxu0
    %3790 = vmatprep.subr.bf16.mxu0 0
    %3791 = vmatpush1.bf16.msra.mxu0 0
    %3792 = vmatprep.subr.bf16.mxu0 0
    %3793 = vmatpush1.bf16.msra.mxu0 0
    %3794 = vmatprep.subr.bf16.mxu0 0
    %3795 = vmatpush1.bf16.msra.mxu0 0
    %3796 = vmatprep.subr.bf16.mxu0 0
    %3797 = vmatpush1.bf16.msra.mxu0 0
    %3798 = vmatprep.subr.bf16.mxu0 0
    %3799 = vmatpush1.bf16.msra.mxu0 0
    %3800 = vmatprep.subr.bf16.mxu0 0
    %3801 = vmatpush1.bf16.msra.mxu0 0
    %3802 = vmatprep.subr.bf16.mxu0 0
    %3803 = vmatpush1.bf16.msra.mxu0 0
    %3804 = vmatprep.subr.bf16.mxu0 %v1778
    %3805 = vmatpush1.bf16.msra.mxu0 %v1777
    %3806 = vmatprep.subr.bf16.mxu0 0
    %3807 = vmatpush2.bf16.msra.mxu0 0
    %3808 = vmatprep.subr.bf16.mxu0 0
    %3809 = vmatpush2.bf16.msra.mxu0 0
    %3810 = vmatprep.subr.bf16.mxu0 0
    %3811 = vmatpush2.bf16.msra.mxu0 0
    %3812 = vmatprep.subr.bf16.mxu0 0
    %3813 = vmatpush2.bf16.msra.mxu0 0
    %3814 = vmatprep.subr.bf16.mxu0 0
    %3815 = vmatpush2.bf16.msra.mxu0 0
    %3816 = vmatprep.subr.bf16.mxu0 0
    %3817 = vmatpush2.bf16.msra.mxu0 0
    %3818 = vmatprep.subr.bf16.mxu0 0
    %3819 = vmatpush2.bf16.msra.mxu0 0
    %3820 = vmatprep.subr.bf16.mxu0 0
    %3821 = vmatpush2.bf16.msra.mxu0 0
    %3822 = vmatprep.mubr.bf16.mxu0 0
    %3823 = vmatmul.mubr.bf16.gmra.mxu0 %v3337
    %v3824 = vpop.f32.mrf.mxu0
    %v3825 = vadd.f32 %v3784, %v3824
    %v3826 = vpop.f32.mrf.mxu0
    %v3827 = vadd.f32 %v3786, %v3826
    %v3828 = vpop.f32.mrf.mxu0
    %v3829 = vpop.f32.mrf.mxu0
    %3830 = vdwg.mxu0
    %v3831 = vmax.f32 %v3213, %v3579
    %v3832 = vmax.f32 %v3214, %v3581
    %v3833 = vmax.f32 %v3215, %v3825
    %v3834 = vmax.f32 %v3216, %v3827
    %v3835 = vld [vmem:[%s0] sm:$0xff]
    %v3836 = vld [vmem:[%s0 + $0x8] sm:$0x7]
    %v3839 = vcombine.high %v3835, %v3835
    %v3841 = vunpack.c.l.s4 1966171168
    %v3842 = vunpack.c.0.s8 %v3841
    %v3843 = vlaneseq
    %v3844 = vshrl.u32 %v3843, 7
    %v3845 = vsub.s32 %v3842, %v3844
    %v3846 = vrot.slane %v3835, %v3845
    %v3848 = vunpack.c.l.s4 1966171168
    %v3849 = vunpack.c.0.s8 %v3848
    %v3850 = vlaneseq
    %v3851 = vshrl.u32 %v3850, 7
    %v3852 = vsub.s32 %v3849, %v3851
    %v3853 = vrot.slane %v3839, %v3852
    %v3854 = vcombine.high %v3846, %v3846
    %v3855 = vcombine.high %v3853, %v3853
    %v3857 = vunpack.c.l.s4 1966171168
    %v3858 = vunpack.c.0.s8 %v3857
    %v3859 = vlaneseq
    %v3860 = vshrl.u32 %v3859, 7
    %v3861 = vsub.s32 %v3858, %v3860
    %v3862 = vrot.slane %v3846, %v3861
    %v3864 = vunpack.c.l.s4 1966171168
    %v3865 = vunpack.c.0.s8 %v3864
    %v3866 = vlaneseq
    %v3867 = vshrl.u32 %v3866, 7
    %v3868 = vsub.s32 %v3865, %v3867
    %v3869 = vrot.slane %v3853, %v3868
    %v3871 = vunpack.c.l.s4 1966171168
    %v3872 = vunpack.c.0.s8 %v3871
    %v3873 = vlaneseq
    %v3874 = vshrl.u32 %v3873, 7
    %v3875 = vsub.s32 %v3872, %v3874
    %v3876 = vrot.slane %v3854, %v3875
    %v3878 = vunpack.c.l.s4 1966171168
    %v3879 = vunpack.c.0.s8 %v3878
    %v3880 = vlaneseq
    %v3881 = vshrl.u32 %v3880, 7
    %v3882 = vsub.s32 %v3879, %v3881
    %v3883 = vrot.slane %v3855, %v3882
    %v3884 = vcombine.high %v3862, %v3862
    %v3885 = vcombine.high %v3869, %v3869
    %v3886 = vcombine.high %v3876, %v3876
    %v3887 = vcombine.high %v3883, %v3883
    %v3889 = vunpack.c.l.s4 1966171168
    %v3890 = vunpack.c.0.s8 %v3889
    %v3891 = vlaneseq
    %v3892 = vshrl.u32 %v3891, 7
    %v3893 = vsub.s32 %v3890, %v3892
    %v3894 = vrot.slane %v3836, %v3893
    %v3895 = vcombine.high %v3894, %v3894
    %v3897 = vunpack.c.l.s4 1966171168
    %v3898 = vunpack.c.0.s8 %v3897
    %v3899 = vlaneseq
    %v3900 = vshrl.u32 %v3899, 7
    %v3901 = vsub.s32 %v3898, %v3900
    %v3902 = vrot.slane %v3894, %v3901
    %v3904 = vunpack.c.l.s4 1966171168
    %v3905 = vunpack.c.0.s8 %v3904
    %v3906 = vlaneseq
    %v3907 = vshrl.u32 %v3906, 7
    %v3908 = vsub.s32 %v3905, %v3907
    %v3909 = vrot.slane %v3895, %v3908
    %v3910 = vcombine.high %v3902, %v3902
    %3911 = vrot.lane.b32.xlu0 %v3862, 55
    %v3912 = vpop.permute.xlu0 %3911
    %3913 = vrot.lane.b32.xlu0 %v3876, 55
    %v3914 = vpop.permute.xlu0 %3913
    %3915 = vrot.lane.b32.xlu0 %v3884, 55
    %v3916 = vpop.permute.xlu0 %3915
    %3917 = vrot.lane.b32.xlu0 %v3886, 55
    %v3918 = vpop.permute.xlu0 %3917
    %3919 = vrot.lane.b32.xlu0 %v3869, 55
    %v3920 = vpop.permute.xlu0 %3919
    %3921 = vrot.lane.b32.xlu0 %v3883, 55
    %v3922 = vpop.permute.xlu0 %3921
    %3923 = vrot.lane.b32.xlu0 %v3885, 55
    %v3924 = vpop.permute.xlu0 %3923
    %3925 = vrot.lane.b32.xlu0 %v3887, 55
    %v3926 = vpop.permute.xlu0 %3925
    %3927 = vrot.lane.b32.xlu0 %v3902, 55
    %v3928 = vpop.permute.xlu0 %3927
    %3929 = vrot.lane.b32.xlu0 %v3909, 55
    %v3930 = vpop.permute.xlu0 %3929
    %3931 = vrot.lane.b32.xlu0 %v3910, 55
    %v3932 = vpop.permute.xlu0 %3931
    %vm3933 = vcmask 449536
    %v3934 = vsel %vm3933, %v3912, %v3914
    %v3935 = vsel %vm3933, %v3914, %v3916
    %v3936 = vsel %vm3933, %v3916, %v3918
    %v3937 = vsel %vm3933, %v3918, %v3920
    %v3938 = vsel %vm3933, %v3920, %v3922
    %v3939 = vsel %vm3933, %v3922, %v3924
    %v3940 = vsel %vm3933, %v3924, %v3926
    %v3941 = vsel %vm3933, %v3926, %v3928
    %v3942 = vsel %vm3933, %v3928, %v3930
    %v3943 = vsel %vm3933, %v3930, %v3932
    %v3955 = vsel %vm2103, %v3932, 0
    %3957 = vmatprep.subr.bf16.mxu0 %v1484
    %3958 = vmatpush1.bf16.msra.mxu0 %v1483
    %3959 = vmatprep.subr.bf16.mxu0 %v1480
    %3960 = vmatpush1.bf16.msra.mxu0 %v1479
    %3961 = vmatprep.subr.bf16.mxu0 %v1476
    %3962 = vmatpush1.bf16.msra.mxu0 %v1475
    %3963 = vmatprep.subr.bf16.mxu0 %v1472
    %3964 = vmatpush1.bf16.msra.mxu0 %v1471
    %3965 = vmatprep.subr.bf16.mxu0 %v1468
    %3966 = vmatpush1.bf16.msra.mxu0 %v1467
    %3967 = vmatprep.subr.bf16.mxu0 %v1464
    %3968 = vmatpush1.bf16.msra.mxu0 %v1463
    %3969 = vmatprep.subr.bf16.mxu0 %v1460
    %3970 = vmatpush1.bf16.msra.mxu0 %v1459
    %3971 = vmatprep.subr.bf16.mxu0 %v1456
    %3972 = vmatpush1.bf16.msra.mxu0 %v1455
    %3973 = vmatprep.subr.bf16.mxu0 %v1516
    %3974 = vmatpush2.bf16.msra.mxu0 %v1515
    %3975 = vmatprep.subr.bf16.mxu0 %v1512
    %3976 = vmatpush2.bf16.msra.mxu0 %v1511
    %3977 = vmatprep.subr.bf16.mxu0 %v1508
    %3978 = vmatpush2.bf16.msra.mxu0 %v1507
    %3979 = vmatprep.subr.bf16.mxu0 %v1504
    %3980 = vmatpush2.bf16.msra.mxu0 %v1503
    %3981 = vmatprep.subr.bf16.mxu0 %v1500
    %3982 = vmatpush2.bf16.msra.mxu0 %v1499
    %3983 = vmatprep.subr.bf16.mxu0 %v1496
    %3984 = vmatpush2.bf16.msra.mxu0 %v1495
    %3985 = vmatprep.subr.bf16.mxu0 %v1492
    %3986 = vmatpush2.bf16.msra.mxu0 %v1491
    %3987 = vmatprep.subr.bf16.mxu0 %v1488
    %3988 = vmatpush2.bf16.msra.mxu0 %v1487
    %3989 = vmatprep.mubr.bf16.mxu0 %v3935
    %3990 = vmatmul.mubr.bf16.gmra.mxu0 %v3934
    %v3991 = vpop.f32.mrf.mxu0
    %v3992 = vadd.f32 0.0, %v3991
    %v3993 = vpop.f32.mrf.mxu0
    %v3994 = vadd.f32 0.0, %v3993
    %v3995 = vpop.f32.mrf.mxu0
    %v3996 = vpop.f32.mrf.mxu0
    %3997 = vdwg.mxu0
    %3998 = vmatprep.subr.bf16.mxu0 %v1548
    %3999 = vmatpush1.bf16.msra.mxu0 %v1547
    %4000 = vmatprep.subr.bf16.mxu0 %v1544
    %4001 = vmatpush1.bf16.msra.mxu0 %v1543
    %4002 = vmatprep.subr.bf16.mxu0 %v1540
    %4003 = vmatpush1.bf16.msra.mxu0 %v1539
    %4004 = vmatprep.subr.bf16.mxu0 %v1536
    %4005 = vmatpush1.bf16.msra.mxu0 %v1535
    %4006 = vmatprep.subr.bf16.mxu0 %v1532
    %4007 = vmatpush1.bf16.msra.mxu0 %v1531
    %4008 = vmatprep.subr.bf16.mxu0 %v1528
    %4009 = vmatpush1.bf16.msra.mxu0 %v1527
    %4010 = vmatprep.subr.bf16.mxu0 %v1524
    %4011 = vmatpush1.bf16.msra.mxu0 %v1523
    %4012 = vmatprep.subr.bf16.mxu0 %v1520
    %4013 = vmatpush1.bf16.msra.mxu0 %v1519
    %4014 = vmatprep.subr.bf16.mxu0 %v1580
    %4015 = vmatpush2.bf16.msra.mxu0 %v1579
    %4016 = vmatprep.subr.bf16.mxu0 %v1576
    %4017 = vmatpush2.bf16.msra.mxu0 %v1575
    %4018 = vmatprep.subr.bf16.mxu0 %v1572
    %4019 = vmatpush2.bf16.msra.mxu0 %v1571
    %4020 = vmatprep.subr.bf16.mxu0 %v1568
    %4021 = vmatpush2.bf16.msra.mxu0 %v1567
    %4022 = vmatprep.subr.bf16.mxu0 %v1564
    %4023 = vmatpush2.bf16.msra.mxu0 %v1563
    %4024 = vmatprep.subr.bf16.mxu0 %v1560
    %4025 = vmatpush2.bf16.msra.mxu0 %v1559
    %4026 = vmatprep.subr.bf16.mxu0 %v1556
    %4027 = vmatpush2.bf16.msra.mxu0 %v1555
    %4028 = vmatprep.subr.bf16.mxu0 %v1552
    %4029 = vmatpush2.bf16.msra.mxu0 %v1551
    %4030 = vmatprep.mubr.bf16.mxu0 %v3937
    %4031 = vmatmul.mubr.bf16.gmra.mxu0 %v3936
    %v4032 = vpop.f32.mrf.mxu0
    %v4033 = vadd.f32 %v3992, %v4032
    %v4034 = vpop.f32.mrf.mxu0
    %v4035 = vadd.f32 %v3994, %v4034
    %v4036 = vpop.f32.mrf.mxu0
    %v4037 = vpop.f32.mrf.mxu0
    %4038 = vdwg.mxu0
    %4039 = vmatprep.subr.bf16.mxu0 %v1612
    %4040 = vmatpush1.bf16.msra.mxu0 %v1611
    %4041 = vmatprep.subr.bf16.mxu0 %v1608
    %4042 = vmatpush1.bf16.msra.mxu0 %v1607
    %4043 = vmatprep.subr.bf16.mxu0 %v1604
    %4044 = vmatpush1.bf16.msra.mxu0 %v1603
    %4045 = vmatprep.subr.bf16.mxu0 %v1600
    %4046 = vmatpush1.bf16.msra.mxu0 %v1599
    %4047 = vmatprep.subr.bf16.mxu0 %v1596
    %4048 = vmatpush1.bf16.msra.mxu0 %v1595
    %4049 = vmatprep.subr.bf16.mxu0 %v1592
    %4050 = vmatpush1.bf16.msra.mxu0 %v1591
    %4051 = vmatprep.subr.bf16.mxu0 %v1588
    %4052 = vmatpush1.bf16.msra.mxu0 %v1587
    %4053 = vmatprep.subr.bf16.mxu0 %v1584
    %4054 = vmatpush1.bf16.msra.mxu0 %v1583
    %4055 = vmatprep.subr.bf16.mxu0 %v1644
    %4056 = vmatpush2.bf16.msra.mxu0 %v1643
    %4057 = vmatprep.subr.bf16.mxu0 %v1640
    %4058 = vmatpush2.bf16.msra.mxu0 %v1639
    %4059 = vmatprep.subr.bf16.mxu0 %v1636
    %4060 = vmatpush2.bf16.msra.mxu0 %v1635
    %4061 = vmatprep.subr.bf16.mxu0 %v1632
    %4062 = vmatpush2.bf16.msra.mxu0 %v1631
    %4063 = vmatprep.subr.bf16.mxu0 %v1628
    %4064 = vmatpush2.bf16.msra.mxu0 %v1627
    %4065 = vmatprep.subr.bf16.mxu0 %v1624
    %4066 = vmatpush2.bf16.msra.mxu0 %v1623
    %4067 = vmatprep.subr.bf16.mxu0 %v1620
    %4068 = vmatpush2.bf16.msra.mxu0 %v1619
    %4069 = vmatprep.subr.bf16.mxu0 %v1616
    %4070 = vmatpush2.bf16.msra.mxu0 %v1615
    %4071 = vmatprep.mubr.bf16.mxu0 %v3939
    %4072 = vmatmul.mubr.bf16.gmra.mxu0 %v3938
    %v4073 = vpop.f32.mrf.mxu0
    %v4074 = vadd.f32 %v4033, %v4073
    %v4075 = vpop.f32.mrf.mxu0
    %v4076 = vadd.f32 %v4035, %v4075
    %v4077 = vpop.f32.mrf.mxu0
    %v4078 = vpop.f32.mrf.mxu0
    %4079 = vdwg.mxu0
    %4080 = vmatprep.subr.bf16.mxu0 %v1676
    %4081 = vmatpush1.bf16.msra.mxu0 %v1675
    %4082 = vmatprep.subr.bf16.mxu0 %v1672
    %4083 = vmatpush1.bf16.msra.mxu0 %v1671
    %4084 = vmatprep.subr.bf16.mxu0 %v1668
    %4085 = vmatpush1.bf16.msra.mxu0 %v1667
    %4086 = vmatprep.subr.bf16.mxu0 %v1664
    %4087 = vmatpush1.bf16.msra.mxu0 %v1663
    %4088 = vmatprep.subr.bf16.mxu0 %v1660
    %4089 = vmatpush1.bf16.msra.mxu0 %v1659
    %4090 = vmatprep.subr.bf16.mxu0 %v1656
    %4091 = vmatpush1.bf16.msra.mxu0 %v1655
    %4092 = vmatprep.subr.bf16.mxu0 %v1652
    %4093 = vmatpush1.bf16.msra.mxu0 %v1651
    %4094 = vmatprep.subr.bf16.mxu0 %v1648
    %4095 = vmatpush1.bf16.msra.mxu0 %v1647
    %4096 = vmatprep.subr.bf16.mxu0 %v1708
    %4097 = vmatpush2.bf16.msra.mxu0 %v1707
    %4098 = vmatprep.subr.bf16.mxu0 %v1704
    %4099 = vmatpush2.bf16.msra.mxu0 %v1703
    %4100 = vmatprep.subr.bf16.mxu0 %v1700
    %4101 = vmatpush2.bf16.msra.mxu0 %v1699
    %4102 = vmatprep.subr.bf16.mxu0 %v1696
    %4103 = vmatpush2.bf16.msra.mxu0 %v1695
    %4104 = vmatprep.subr.bf16.mxu0 %v1692
    %4105 = vmatpush2.bf16.msra.mxu0 %v1691
    %4106 = vmatprep.subr.bf16.mxu0 %v1688
    %4107 = vmatpush2.bf16.msra.mxu0 %v1687
    %4108 = vmatprep.subr.bf16.mxu0 %v1684
    %4109 = vmatpush2.bf16.msra.mxu0 %v1683
    %4110 = vmatprep.subr.bf16.mxu0 %v1680
    %4111 = vmatpush2.bf16.msra.mxu0 %v1679
    %4112 = vmatprep.mubr.bf16.mxu0 %v3941
    %4113 = vmatmul.mubr.bf16.gmra.mxu0 %v3940
    %v4114 = vpop.f32.mrf.mxu0
    %v4115 = vadd.f32 %v4074, %v4114
    %v4116 = vpop.f32.mrf.mxu0
    %v4117 = vadd.f32 %v4076, %v4116
    %v4118 = vpop.f32.mrf.mxu0
    %v4119 = vpop.f32.mrf.mxu0
    %4120 = vdwg.mxu0
    %4121 = vmatprep.subr.bf16.mxu0 %v1740
    %4122 = vmatpush1.bf16.msra.mxu0 %v1739
    %4123 = vmatprep.subr.bf16.mxu0 %v1736
    %4124 = vmatpush1.bf16.msra.mxu0 %v1735
    %4125 = vmatprep.subr.bf16.mxu0 %v1732
    %4126 = vmatpush1.bf16.msra.mxu0 %v1731
    %4127 = vmatprep.subr.bf16.mxu0 %v1728
    %4128 = vmatpush1.bf16.msra.mxu0 %v1727
    %4129 = vmatprep.subr.bf16.mxu0 %v1724
    %4130 = vmatpush1.bf16.msra.mxu0 %v1723
    %4131 = vmatprep.subr.bf16.mxu0 %v1720
    %4132 = vmatpush1.bf16.msra.mxu0 %v1719
    %4133 = vmatprep.subr.bf16.mxu0 %v1716
    %4134 = vmatpush1.bf16.msra.mxu0 %v1715
    %4135 = vmatprep.subr.bf16.mxu0 %v1712
    %4136 = vmatpush1.bf16.msra.mxu0 %v1711
    %4137 = vmatprep.subr.bf16.mxu0 %v1772
    %4138 = vmatpush2.bf16.msra.mxu0 %v1771
    %4139 = vmatprep.subr.bf16.mxu0 %v1768
    %4140 = vmatpush2.bf16.msra.mxu0 %v1767
    %4141 = vmatprep.subr.bf16.mxu0 %v1764
    %4142 = vmatpush2.bf16.msra.mxu0 %v1763
    %4143 = vmatprep.subr.bf16.mxu0 %v1760
    %4144 = vmatpush2.bf16.msra.mxu0 %v1759
    %4145 = vmatprep.subr.bf16.mxu0 %v1756
    %4146 = vmatpush2.bf16.msra.mxu0 %v1755
    %4147 = vmatprep.subr.bf16.mxu0 %v1752
    %4148 = vmatpush2.bf16.msra.mxu0 %v1751
    %4149 = vmatprep.subr.bf16.mxu0 %v1748
    %4150 = vmatpush2.bf16.msra.mxu0 %v1747
    %4151 = vmatprep.subr.bf16.mxu0 %v1744
    %4152 = vmatpush2.bf16.msra.mxu0 %v1743
    %4153 = vmatprep.mubr.bf16.mxu0 %v3943
    %4154 = vmatmul.mubr.bf16.gmra.mxu0 %v3942
    %v4155 = vpop.f32.mrf.mxu0
    %v4156 = vadd.f32 %v4115, %v4155
    %v4157 = vpop.f32.mrf.mxu0
    %v4158 = vadd.f32 %v4117, %v4157
    %v4159 = vpop.f32.mrf.mxu0
    %v4160 = vpop.f32.mrf.mxu0
    %4161 = vdwg.mxu0
    %4162 = vmatprep.subr.bf16.mxu0 0
    %4163 = vmatpush1.bf16.msra.mxu0 0
    %4164 = vmatprep.subr.bf16.mxu0 0
    %4165 = vmatpush1.bf16.msra.mxu0 0
    %4166 = vmatprep.subr.bf16.mxu0 0
    %4167 = vmatpush1.bf16.msra.mxu0 0
    %4168 = vmatprep.subr.bf16.mxu0 0
    %4169 = vmatpush1.bf16.msra.mxu0 0
    %4170 = vmatprep.subr.bf16.mxu0 0
    %4171 = vmatpush1.bf16.msra.mxu0 0
    %4172 = vmatprep.subr.bf16.mxu0 0
    %4173 = vmatpush1.bf16.msra.mxu0 0
    %4174 = vmatprep.subr.bf16.mxu0 0
    %4175 = vmatpush1.bf16.msra.mxu0 0
    %4176 = vmatprep.subr.bf16.mxu0 %v1776
    %4177 = vmatpush1.bf16.msra.mxu0 %v1775
    %4178 = vmatprep.subr.bf16.mxu0 0
    %4179 = vmatpush2.bf16.msra.mxu0 0
    %4180 = vmatprep.subr.bf16.mxu0 0
    %4181 = vmatpush2.bf16.msra.mxu0 0
    %4182 = vmatprep.subr.bf16.mxu0 0
    %4183 = vmatpush2.bf16.msra.mxu0 0
    %4184 = vmatprep.subr.bf16.mxu0 0
    %4185 = vmatpush2.bf16.msra.mxu0 0
    %4186 = vmatprep.subr.bf16.mxu0 0
    %4187 = vmatpush2.bf16.msra.mxu0 0
    %4188 = vmatprep.subr.bf16.mxu0 0
    %4189 = vmatpush2.bf16.msra.mxu0 0
    %4190 = vmatprep.subr.bf16.mxu0 0
    %4191 = vmatpush2.bf16.msra.mxu0 0
    %4192 = vmatprep.subr.bf16.mxu0 0
    %4193 = vmatpush2.bf16.msra.mxu0 0
    %4194 = vmatprep.mubr.bf16.mxu0 0
    %4195 = vmatmul.mubr.bf16.gmra.mxu0 %v3955
    %v4196 = vpop.f32.mrf.mxu0
    %v4197 = vadd.f32 %v4156, %v4196
    %v4198 = vpop.f32.mrf.mxu0
    %v4199 = vadd.f32 %v4158, %v4198
    %v4200 = vpop.f32.mrf.mxu0
    %v4201 = vpop.f32.mrf.mxu0
    %4202 = vdwg.mxu0
    %4203 = vmatprep.subr.bf16.mxu0 %v1486
    %4204 = vmatpush1.bf16.msra.mxu0 %v1485
    %4205 = vmatprep.subr.bf16.mxu0 %v1482
    %4206 = vmatpush1.bf16.msra.mxu0 %v1481
    %4207 = vmatprep.subr.bf16.mxu0 %v1478
    %4208 = vmatpush1.bf16.msra.mxu0 %v1477
    %4209 = vmatprep.subr.bf16.mxu0 %v1474
    %4210 = vmatpush1.bf16.msra.mxu0 %v1473
    %4211 = vmatprep.subr.bf16.mxu0 %v1470
    %4212 = vmatpush1.bf16.msra.mxu0 %v1469
    %4213 = vmatprep.subr.bf16.mxu0 %v1466
    %4214 = vmatpush1.bf16.msra.mxu0 %v1465
    %4215 = vmatprep.subr.bf16.mxu0 %v1462
    %4216 = vmatpush1.bf16.msra.mxu0 %v1461
    %4217 = vmatprep.subr.bf16.mxu0 %v1458
    %4218 = vmatpush1.bf16.msra.mxu0 %v1457
    %4219 = vmatprep.subr.bf16.mxu0 %v1518
    %4220 = vmatpush2.bf16.msra.mxu0 %v1517
    %4221 = vmatprep.subr.bf16.mxu0 %v1514
    %4222 = vmatpush2.bf16.msra.mxu0 %v1513
    %4223 = vmatprep.subr.bf16.mxu0 %v1510
    %4224 = vmatpush2.bf16.msra.mxu0 %v1509
    %4225 = vmatprep.subr.bf16.mxu0 %v1506
    %4226 = vmatpush2.bf16.msra.mxu0 %v1505
    %4227 = vmatprep.subr.bf16.mxu0 %v1502
    %4228 = vmatpush2.bf16.msra.mxu0 %v1501
    %4229 = vmatprep.subr.bf16.mxu0 %v1498
    %4230 = vmatpush2.bf16.msra.mxu0 %v1497
    %4231 = vmatprep.subr.bf16.mxu0 %v1494
    %4232 = vmatpush2.bf16.msra.mxu0 %v1493
    %4233 = vmatprep.subr.bf16.mxu0 %v1490
    %4234 = vmatpush2.bf16.msra.mxu0 %v1489
    %4235 = vmatprep.mubr.bf16.mxu0 %v3935
    %4236 = vmatmul.mubr.bf16.gmra.mxu0 %v3934
    %v4237 = vpop.f32.mrf.mxu0
    %v4238 = vadd.f32 0.0, %v4237
    %v4239 = vpop.f32.mrf.mxu0
    %v4240 = vadd.f32 0.0, %v4239
    %v4241 = vpop.f32.mrf.mxu0
    %v4242 = vpop.f32.mrf.mxu0
    %4243 = vdwg.mxu0
    %4244 = vmatprep.subr.bf16.mxu0 %v1550
    %4245 = vmatpush1.bf16.msra.mxu0 %v1549
    %4246 = vmatprep.subr.bf16.mxu0 %v1546
    %4247 = vmatpush1.bf16.msra.mxu0 %v1545
    %4248 = vmatprep.subr.bf16.mxu0 %v1542
    %4249 = vmatpush1.bf16.msra.mxu0 %v1541
    %4250 = vmatprep.subr.bf16.mxu0 %v1538
    %4251 = vmatpush1.bf16.msra.mxu0 %v1537
    %4252 = vmatprep.subr.bf16.mxu0 %v1534
    %4253 = vmatpush1.bf16.msra.mxu0 %v1533
    %4254 = vmatprep.subr.bf16.mxu0 %v1530
    %4255 = vmatpush1.bf16.msra.mxu0 %v1529
    %4256 = vmatprep.subr.bf16.mxu0 %v1526
    %4257 = vmatpush1.bf16.msra.mxu0 %v1525
    %4258 = vmatprep.subr.bf16.mxu0 %v1522
    %4259 = vmatpush1.bf16.msra.mxu0 %v1521
    %4260 = vmatprep.subr.bf16.mxu0 %v1582
    %4261 = vmatpush2.bf16.msra.mxu0 %v1581
    %4262 = vmatprep.subr.bf16.mxu0 %v1578
    %4263 = vmatpush2.bf16.msra.mxu0 %v1577
    %4264 = vmatprep.subr.bf16.mxu0 %v1574
    %4265 = vmatpush2.bf16.msra.mxu0 %v1573
    %4266 = vmatprep.subr.bf16.mxu0 %v1570
    %4267 = vmatpush2.bf16.msra.mxu0 %v1569
    %4268 = vmatprep.subr.bf16.mxu0 %v1566
    %4269 = vmatpush2.bf16.msra.mxu0 %v1565
    %4270 = vmatprep.subr.bf16.mxu0 %v1562
    %4271 = vmatpush2.bf16.msra.mxu0 %v1561
    %4272 = vmatprep.subr.bf16.mxu0 %v1558
    %4273 = vmatpush2.bf16.msra.mxu0 %v1557
    %4274 = vmatprep.subr.bf16.mxu0 %v1554
    %4275 = vmatpush2.bf16.msra.mxu0 %v1553
    %4276 = vmatprep.mubr.bf16.mxu0 %v3937
    %4277 = vmatmul.mubr.bf16.gmra.mxu0 %v3936
    %v4278 = vpop.f32.mrf.mxu0
    %v4279 = vadd.f32 %v4238, %v4278
    %v4280 = vpop.f32.mrf.mxu0
    %v4281 = vadd.f32 %v4240, %v4280
    %v4282 = vpop.f32.mrf.mxu0
    %v4283 = vpop.f32.mrf.mxu0
    %4284 = vdwg.mxu0
    %4285 = vmatprep.subr.bf16.mxu0 %v1614
    %4286 = vmatpush1.bf16.msra.mxu0 %v1613
    %4287 = vmatprep.subr.bf16.mxu0 %v1610
    %4288 = vmatpush1.bf16.msra.mxu0 %v1609
    %4289 = vmatprep.subr.bf16.mxu0 %v1606
    %4290 = vmatpush1.bf16.msra.mxu0 %v1605
    %4291 = vmatprep.subr.bf16.mxu0 %v1602
    %4292 = vmatpush1.bf16.msra.mxu0 %v1601
    %4293 = vmatprep.subr.bf16.mxu0 %v1598
    %4294 = vmatpush1.bf16.msra.mxu0 %v1597
    %4295 = vmatprep.subr.bf16.mxu0 %v1594
    %4296 = vmatpush1.bf16.msra.mxu0 %v1593
    %4297 = vmatprep.subr.bf16.mxu0 %v1590
    %4298 = vmatpush1.bf16.msra.mxu0 %v1589
    %4299 = vmatprep.subr.bf16.mxu0 %v1586
    %4300 = vmatpush1.bf16.msra.mxu0 %v1585
    %4301 = vmatprep.subr.bf16.mxu0 %v1646
    %4302 = vmatpush2.bf16.msra.mxu0 %v1645
    %4303 = vmatprep.subr.bf16.mxu0 %v1642
    %4304 = vmatpush2.bf16.msra.mxu0 %v1641
    %4305 = vmatprep.subr.bf16.mxu0 %v1638
    %4306 = vmatpush2.bf16.msra.mxu0 %v1637
    %4307 = vmatprep.subr.bf16.mxu0 %v1634
    %4308 = vmatpush2.bf16.msra.mxu0 %v1633
    %4309 = vmatprep.subr.bf16.mxu0 %v1630
    %4310 = vmatpush2.bf16.msra.mxu0 %v1629
    %4311 = vmatprep.subr.bf16.mxu0 %v1626
    %4312 = vmatpush2.bf16.msra.mxu0 %v1625
    %4313 = vmatprep.subr.bf16.mxu0 %v1622
    %4314 = vmatpush2.bf16.msra.mxu0 %v1621
    %4315 = vmatprep.subr.bf16.mxu0 %v1618
    %4316 = vmatpush2.bf16.msra.mxu0 %v1617
    %4317 = vmatprep.mubr.bf16.mxu0 %v3939
    %4318 = vmatmul.mubr.bf16.gmra.mxu0 %v3938
    %v4319 = vpop.f32.mrf.mxu0
    %v4320 = vadd.f32 %v4279, %v4319
    %v4321 = vpop.f32.mrf.mxu0
    %v4322 = vadd.f32 %v4281, %v4321
    %v4323 = vpop.f32.mrf.mxu0
    %v4324 = vpop.f32.mrf.mxu0
    %4325 = vdwg.mxu0
    %4326 = vmatprep.subr.bf16.mxu0 %v1678
    %4327 = vmatpush1.bf16.msra.mxu0 %v1677
    %4328 = vmatprep.subr.bf16.mxu0 %v1674
    %4329 = vmatpush1.bf16.msra.mxu0 %v1673
    %4330 = vmatprep.subr.bf16.mxu0 %v1670
    %4331 = vmatpush1.bf16.msra.mxu0 %v1669
    %4332 = vmatprep.subr.bf16.mxu0 %v1666
    %4333 = vmatpush1.bf16.msra.mxu0 %v1665
    %4334 = vmatprep.subr.bf16.mxu0 %v1662
    %4335 = vmatpush1.bf16.msra.mxu0 %v1661
    %4336 = vmatprep.subr.bf16.mxu0 %v1658
    %4337 = vmatpush1.bf16.msra.mxu0 %v1657
    %4338 = vmatprep.subr.bf16.mxu0 %v1654
    %4339 = vmatpush1.bf16.msra.mxu0 %v1653
    %4340 = vmatprep.subr.bf16.mxu0 %v1650
    %4341 = vmatpush1.bf16.msra.mxu0 %v1649
    %4342 = vmatprep.subr.bf16.mxu0 %v1710
    %4343 = vmatpush2.bf16.msra.mxu0 %v1709
    %4344 = vmatprep.subr.bf16.mxu0 %v1706
    %4345 = vmatpush2.bf16.msra.mxu0 %v1705
    %4346 = vmatprep.subr.bf16.mxu0 %v1702
    %4347 = vmatpush2.bf16.msra.mxu0 %v1701
    %4348 = vmatprep.subr.bf16.mxu0 %v1698
    %4349 = vmatpush2.bf16.msra.mxu0 %v1697
    %4350 = vmatprep.subr.bf16.mxu0 %v1694
    %4351 = vmatpush2.bf16.msra.mxu0 %v1693
    %4352 = vmatprep.subr.bf16.mxu0 %v1690
    %4353 = vmatpush2.bf16.msra.mxu0 %v1689
    %4354 = vmatprep.subr.bf16.mxu0 %v1686
    %4355 = vmatpush2.bf16.msra.mxu0 %v1685
    %4356 = vmatprep.subr.bf16.mxu0 %v1682
    %4357 = vmatpush2.bf16.msra.mxu0 %v1681
    %4358 = vmatprep.mubr.bf16.mxu0 %v3941
    %4359 = vmatmul.mubr.bf16.gmra.mxu0 %v3940
    %v4360 = vpop.f32.mrf.mxu0
    %v4361 = vadd.f32 %v4320, %v4360
    %v4362 = vpop.f32.mrf.mxu0
    %v4363 = vadd.f32 %v4322, %v4362
    %v4364 = vpop.f32.mrf.mxu0
    %v4365 = vpop.f32.mrf.mxu0
    %4366 = vdwg.mxu0
    %4367 = vmatprep.subr.bf16.mxu0 %v1742
    %4368 = vmatpush1.bf16.msra.mxu0 %v1741
    %4369 = vmatprep.subr.bf16.mxu0 %v1738
    %4370 = vmatpush1.bf16.msra.mxu0 %v1737
    %4371 = vmatprep.subr.bf16.mxu0 %v1734
    %4372 = vmatpush1.bf16.msra.mxu0 %v1733
    %4373 = vmatprep.subr.bf16.mxu0 %v1730
    %4374 = vmatpush1.bf16.msra.mxu0 %v1729
    %4375 = vmatprep.subr.bf16.mxu0 %v1726
    %4376 = vmatpush1.bf16.msra.mxu0 %v1725
    %4377 = vmatprep.subr.bf16.mxu0 %v1722
    %4378 = vmatpush1.bf16.msra.mxu0 %v1721
    %4379 = vmatprep.subr.bf16.mxu0 %v1718
    %4380 = vmatpush1.bf16.msra.mxu0 %v1717
    %4381 = vmatprep.subr.bf16.mxu0 %v1714
    %4382 = vmatpush1.bf16.msra.mxu0 %v1713
    %4383 = vmatprep.subr.bf16.mxu0 %v1774
    %4384 = vmatpush2.bf16.msra.mxu0 %v1773
    %4385 = vmatprep.subr.bf16.mxu0 %v1770
    %4386 = vmatpush2.bf16.msra.mxu0 %v1769
    %4387 = vmatprep.subr.bf16.mxu0 %v1766
    %4388 = vmatpush2.bf16.msra.mxu0 %v1765
    %4389 = vmatprep.subr.bf16.mxu0 %v1762
    %4390 = vmatpush2.bf16.msra.mxu0 %v1761
    %4391 = vmatprep.subr.bf16.mxu0 %v1758
    %4392 = vmatpush2.bf16.msra.mxu0 %v1757
    %4393 = vmatprep.subr.bf16.mxu0 %v1754
    %4394 = vmatpush2.bf16.msra.mxu0 %v1753
    %4395 = vmatprep.subr.bf16.mxu0 %v1750
    %4396 = vmatpush2.bf16.msra.mxu0 %v1749
    %4397 = vmatprep.subr.bf16.mxu0 %v1746
    %4398 = vmatpush2.bf16.msra.mxu0 %v1745
    %4399 = vmatprep.mubr.bf16.mxu0 %v3943
    %4400 = vmatmul.mubr.bf16.gmra.mxu0 %v3942
    %v4401 = vpop.f32.mrf.mxu0
    %v4402 = vadd.f32 %v4361, %v4401
    %v4403 = vpop.f32.mrf.mxu0
    %v4404 = vadd.f32 %v4363, %v4403
    %v4405 = vpop.f32.mrf.mxu0
    %v4406 = vpop.f32.mrf.mxu0
    %4407 = vdwg.mxu0
    %4408 = vmatprep.subr.bf16.mxu0 0
    %4409 = vmatpush1.bf16.msra.mxu0 0
    %4410 = vmatprep.subr.bf16.mxu0 0
    %4411 = vmatpush1.bf16.msra.mxu0 0
    %4412 = vmatprep.subr.bf16.mxu0 0
    %4413 = vmatpush1.bf16.msra.mxu0 0
    %4414 = vmatprep.subr.bf16.mxu0 0
    %4415 = vmatpush1.bf16.msra.mxu0 0
    %4416 = vmatprep.subr.bf16.mxu0 0
    %4417 = vmatpush1.bf16.msra.mxu0 0
    %4418 = vmatprep.subr.bf16.mxu0 0
    %4419 = vmatpush1.bf16.msra.mxu0 0
    %4420 = vmatprep.subr.bf16.mxu0 0
    %4421 = vmatpush1.bf16.msra.mxu0 0
    %4422 = vmatprep.subr.bf16.mxu0 %v1778
    %4423 = vmatpush1.bf16.msra.mxu0 %v1777
    %4424 = vmatprep.subr.bf16.mxu0 0
    %4425 = vmatpush2.bf16.msra.mxu0 0
    %4426 = vmatprep.subr.bf16.mxu0 0
    %4427 = vmatpush2.bf16.msra.mxu0 0
    %4428 = vmatprep.subr.bf16.mxu0 0
    %4429 = vmatpush2.bf16.msra.mxu0 0
    %4430 = vmatprep.subr.bf16.mxu0 0
    %4431 = vmatpush2.bf16.msra.mxu0 0
    %4432 = vmatprep.subr.bf16.mxu0 0
    %4433 = vmatpush2.bf16.msra.mxu0 0
    %4434 = vmatprep.subr.bf16.mxu0 0
    %4435 = vmatpush2.bf16.msra.mxu0 0
    %4436 = vmatprep.subr.bf16.mxu0 0
    %4437 = vmatpush2.bf16.msra.mxu0 0
    %4438 = vmatprep.subr.bf16.mxu0 0
    %4439 = vmatpush2.bf16.msra.mxu0 0
    %4440 = vmatprep.mubr.bf16.mxu0 0
    %4441 = vmatmul.mubr.bf16.gmra.mxu0 %v3955
    %v4442 = vpop.f32.mrf.mxu0
    %v4443 = vadd.f32 %v4402, %v4442
    %v4444 = vpop.f32.mrf.mxu0
    %v4445 = vadd.f32 %v4404, %v4444
    %v4446 = vpop.f32.mrf.mxu0
    %v4447 = vpop.f32.mrf.mxu0
    %4448 = vdwg.mxu0
    %v4449 = vmax.f32 %v3831, %v4197
    %v4450 = vmax.f32 %v3832, %v4199
    %v4451 = vmax.f32 %v3833, %v4443
    %v4452 = vmax.f32 %v3834, %v4445
    %v4453 = vld [vmem:[#allocation5] sm:$0xf]
    %v4455 = vlaneseq
    %v4456 = vshrl.u32 %v4455, 7
    %v4457 = vsub.s32 0, %v4456
    %v4458 = vrot.slane %v4453, %v4457
    %v4459 = vlaneseq
    %v4460 = vshrl.u32 %v4459, 7
    %v4461 = vsub.s32 1, %v4460
    %v4462 = vrot.slane %v4453, %v4461
    %v4463 = vlaneseq
    %v4464 = vshrl.u32 %v4463, 7
    %v4465 = vsub.s32 2, %v4464
    %v4466 = vrot.slane %v4453, %v4465
    %v4467 = vlaneseq
    %v4468 = vshrl.u32 %v4467, 7
    %v4469 = vsub.s32 3, %v4468
    %v4470 = vrot.slane %v4453, %v4469
    %v4475 = vadd.f32 %v4449, %v4458
    %v4476 = vadd.f32 %v4450, %v4462
    %v4477 = vadd.f32 %v4451, %v4466
    %v4478 = vadd.f32 %v4452, %v4470
    %v4479 = vmax.f32 %v4475, 0.0
    %v4480 = vmax.f32 %v4476, 0.0
    %v4481 = vmax.f32 %v4477, 0.0
    %v4482 = vmax.f32 %v4478, 0.0
    %v4483 = vpack.c.bf16 %v4479, %v4479
    %v4484 = vpack.c.bf16 %v4480, %v4480
    %v4485 = vpack.c.bf16 %v4481, %v4481
    %v4486 = vpack.c.bf16 %v4482, %v4482
    %v4487 = vld [vmem:[#allocation7] sm:$0xf]
    %v4488 = vld [vmem:[#allocation7 + $0x4] sm:$0xf]
    %v4489 = vld [vmem:[#allocation7 + $0x8] sm:$0xf]
    %v4490 = vld [vmem:[#allocation7 + $0xc] sm:$0xf]
    %v4491 = vld [vmem:[#allocation7 + $0x10] sm:$0xf]
    %v4492 = vld [vmem:[#allocation7 + $0x14] sm:$0xf]
    %v4493 = vld [vmem:[#allocation7 + $0x18] sm:$0xf]
    %v4494 = vld [vmem:[#allocation7 + $0x1c] sm:$0xf]
    %v4495 = vld [vmem:[#allocation7 + $0x20] sm:$0xf]
    %v4496 = vld [vmem:[#allocation7 + $0x24] sm:$0xf]
    %v4497 = vld [vmem:[#allocation7 + $0x28] sm:$0xf]
    %v4498 = vld [vmem:[#allocation7 + $0x2c] sm:$0xf]
    %v4499 = vld [vmem:[#allocation7 + $0x30] sm:$0xf]
    %v4500 = vld [vmem:[#allocation7 + $0x34] sm:$0xf]
    %v4501 = vld [vmem:[#allocation7 + $0x38] sm:$0xf]
    %v4502 = vld [vmem:[#allocation7 + $0x3c] sm:$0xf]
    %v4503 = vld [vmem:[#allocation7 + $0x40] sm:$0xf]
    %v4504 = vld [vmem:[#allocation7 + $0x44] sm:$0xf]
    %v4505 = vld [vmem:[#allocation7 + $0x48] sm:$0xf]
    %v4506 = vld [vmem:[#allocation7 + $0x4c] sm:$0xf]
    %v4507 = vld [vmem:[#allocation7 + $0x50] sm:$0xf]
    %v4508 = vld [vmem:[#allocation7 + $0x54] sm:$0xf]
    %v4509 = vld [vmem:[#allocation7 + $0x58] sm:$0xf]
    %v4510 = vld [vmem:[#allocation7 + $0x5c] sm:$0xf]
    %v4511 = vld [vmem:[#allocation7 + $0x60] sm:$0xf]
    %v4512 = vld [vmem:[#allocation7 + $0x64] sm:$0xf]
    %v4513 = vld [vmem:[#allocation7 + $0x68] sm:$0xf]
    %v4514 = vld [vmem:[#allocation7 + $0x6c] sm:$0xf]
    %v4515 = vld [vmem:[#allocation7 + $0x70] sm:$0xf]
    %v4516 = vld [vmem:[#allocation7 + $0x74] sm:$0xf]
    %v4517 = vld [vmem:[#allocation7 + $0x78] sm:$0xf]
    %v4518 = vld [vmem:[#allocation7 + $0x7c] sm:$0xf]
    %v4519 = vld [vmem:[#allocation7 + $0x80] sm:$0xf]
    %v4520 = vld [vmem:[#allocation7 + $0x84] sm:$0xf]
    %v4521 = vld [vmem:[#allocation7 + $0x88] sm:$0xf]
    %v4522 = vld [vmem:[#allocation7 + $0x8c] sm:$0xf]
    %v4523 = vld [vmem:[#allocation7 + $0x90] sm:$0xf]
    %v4524 = vld [vmem:[#allocation7 + $0x94] sm:$0xf]
    %v4525 = vld [vmem:[#allocation7 + $0x98] sm:$0xf]
    %v4526 = vld [vmem:[#allocation7 + $0x9c] sm:$0xf]
    %v4527 = vld [vmem:[#allocation7 + $0xa0] sm:$0xf]
    %v4528 = vld [vmem:[#allocation7 + $0xa4] sm:$0xf]
    %v4529 = vld [vmem:[#allocation7 + $0xa8] sm:$0xf]
    %v4530 = vld [vmem:[#allocation7 + $0xac] sm:$0xf]
    %v4531 = vld [vmem:[#allocation7 + $0xb0] sm:$0xf]
    %v4532 = vld [vmem:[#allocation7 + $0xb4] sm:$0xf]
    %v4533 = vld [vmem:[#allocation7 + $0xb8] sm:$0xf]
    %v4534 = vld [vmem:[#allocation7 + $0xbc] sm:$0xf]
    %v4535 = vld [vmem:[#allocation7 + $0xc0] sm:$0xf]
    %v4536 = vld [vmem:[#allocation7 + $0xc4] sm:$0xf]
    %v4537 = vld [vmem:[#allocation7 + $0xc8] sm:$0xf]
    %v4538 = vld [vmem:[#allocation7 + $0xcc] sm:$0xf]
    %v4539 = vld [vmem:[#allocation7 + $0xd0] sm:$0xf]
    %v4540 = vld [vmem:[#allocation7 + $0xd4] sm:$0xf]
    %v4541 = vld [vmem:[#allocation7 + $0xd8] sm:$0xf]
    %v4542 = vld [vmem:[#allocation7 + $0xdc] sm:$0xf]
    %v4543 = vld [vmem:[#allocation7 + $0xe0] sm:$0xf]
    %v4544 = vld [vmem:[#allocation7 + $0xe4] sm:$0xf]
    %v4545 = vld [vmem:[#allocation7 + $0xe8] sm:$0xf]
    %v4546 = vld [vmem:[#allocation7 + $0xec] sm:$0xf]
    %v4547 = vld [vmem:[#allocation7 + $0xf0] sm:$0xf]
    %v4548 = vld [vmem:[#allocation7 + $0xf4] sm:$0xf]
    %v4549 = vld [vmem:[#allocation7 + $0xf8] sm:$0xf]
    %v4550 = vld [vmem:[#allocation7 + $0xfc] sm:$0xf]
    %v4551 = vld [vmem:[#allocation8] sm:$0x1]
    %v4553 = vlaneseq
    %v4554 = vshrl.u32 %v4553, 7
    %v4555 = vsub.s32 0, %v4554
    %v4556 = vrot.slane %v4551, %v4555
    %v4622 = vunpack.c.l.b16 %v4487
    %v4623 = vunpack.c.l.b16 %v4488
    %v4624 = vunpack.c.l.b16 %v4489
    %v4625 = vunpack.c.l.b16 %v4490
    %v4626 = vunpack.c.l.b16 %v4491
    %v4627 = vunpack.c.l.b16 %v4492
    %v4628 = vunpack.c.l.b16 %v4493
    %v4629 = vunpack.c.l.b16 %v4494
    %v4630 = vunpack.c.l.b16 %v4495
    %v4631 = vunpack.c.l.b16 %v4496
    %v4632 = vunpack.c.l.b16 %v4497
    %v4633 = vunpack.c.l.b16 %v4498
    %v4634 = vunpack.c.l.b16 %v4499
    %v4635 = vunpack.c.l.b16 %v4500
    %v4636 = vunpack.c.l.b16 %v4501
    %v4637 = vunpack.c.l.b16 %v4502
    %v4638 = vunpack.c.l.b16 %v4503
    %v4639 = vunpack.c.l.b16 %v4504
    %v4640 = vunpack.c.l.b16 %v4505
    %v4641 = vunpack.c.l.b16 %v4506
    %v4642 = vunpack.c.l.b16 %v4507
    %v4643 = vunpack.c.l.b16 %v4508
    %v4644 = vunpack.c.l.b16 %v4509
    %v4645 = vunpack.c.l.b16 %v4510
    %v4646 = vunpack.c.l.b16 %v4511
    %v4647 = vunpack.c.l.b16 %v4512
    %v4648 = vunpack.c.l.b16 %v4513
    %v4649 = vunpack.c.l.b16 %v4514
    %v4650 = vunpack.c.l.b16 %v4515
    %v4651 = vunpack.c.l.b16 %v4516
    %v4652 = vunpack.c.l.b16 %v4517
    %v4653 = vunpack.c.l.b16 %v4518
    %v4654 = vunpack.c.l.b16 %v4519
    %v4655 = vunpack.c.l.b16 %v4520
    %v4656 = vunpack.c.l.b16 %v4521
    %v4657 = vunpack.c.l.b16 %v4522
    %v4658 = vunpack.c.l.b16 %v4523
    %v4659 = vunpack.c.l.b16 %v4524
    %v4660 = vunpack.c.l.b16 %v4525
    %v4661 = vunpack.c.l.b16 %v4526
    %v4662 = vunpack.c.l.b16 %v4527
    %v4663 = vunpack.c.l.b16 %v4528
    %v4664 = vunpack.c.l.b16 %v4529
    %v4665 = vunpack.c.l.b16 %v4530
    %v4666 = vunpack.c.l.b16 %v4531
    %v4667 = vunpack.c.l.b16 %v4532
    %v4668 = vunpack.c.l.b16 %v4533
    %v4669 = vunpack.c.l.b16 %v4534
    %v4670 = vunpack.c.l.b16 %v4535
    %v4671 = vunpack.c.l.b16 %v4536
    %v4672 = vunpack.c.l.b16 %v4537
    %v4673 = vunpack.c.l.b16 %v4538
    %v4674 = vunpack.c.l.b16 %v4539
    %v4675 = vunpack.c.l.b16 %v4540
    %v4676 = vunpack.c.l.b16 %v4541
    %v4677 = vunpack.c.l.b16 %v4542
    %v4678 = vunpack.c.l.b16 %v4543
    %v4679 = vunpack.c.l.b16 %v4544
    %v4680 = vunpack.c.l.b16 %v4545
    %v4681 = vunpack.c.l.b16 %v4546
    %v4682 = vunpack.c.l.b16 %v4547
    %v4683 = vunpack.c.l.b16 %v4548
    %v4684 = vunpack.c.l.b16 %v4549
    %v4685 = vunpack.c.l.b16 %v4550
    %v4686 = vpack.c.b16 %v4623, %v4622
    %v4687 = vpack.c.b16 %v4625, %v4624
    %v4688 = vpack.c.b16 %v4627, %v4626
    %v4689 = vpack.c.b16 %v4629, %v4628
    %v4690 = vpack.c.b16 %v4631, %v4630
    %v4691 = vpack.c.b16 %v4633, %v4632
    %v4692 = vpack.c.b16 %v4635, %v4634
    %v4693 = vpack.c.b16 %v4637, %v4636
    %v4694 = vpack.c.b16 %v4639, %v4638
    %v4695 = vpack.c.b16 %v4641, %v4640
    %v4696 = vpack.c.b16 %v4643, %v4642
    %v4697 = vpack.c.b16 %v4645, %v4644
    %v4698 = vpack.c.b16 %v4647, %v4646
    %v4699 = vpack.c.b16 %v4649, %v4648
    %v4700 = vpack.c.b16 %v4651, %v4650
    %v4701 = vpack.c.b16 %v4653, %v4652
    %v4702 = vpack.c.b16 %v4655, %v4654
    %v4703 = vpack.c.b16 %v4657, %v4656
    %v4704 = vpack.c.b16 %v4659, %v4658
    %v4705 = vpack.c.b16 %v4661, %v4660
    %v4706 = vpack.c.b16 %v4663, %v4662
    %v4707 = vpack.c.b16 %v4665, %v4664
    %v4708 = vpack.c.b16 %v4667, %v4666
    %v4709 = vpack.c.b16 %v4669, %v4668
    %v4710 = vpack.c.b16 %v4671, %v4670
    %v4711 = vpack.c.b16 %v4673, %v4672
    %v4712 = vpack.c.b16 %v4675, %v4674
    %v4713 = vpack.c.b16 %v4677, %v4676
    %v4714 = vpack.c.b16 %v4679, %v4678
    %v4715 = vpack.c.b16 %v4681, %v4680
    %v4716 = vpack.c.b16 %v4683, %v4682
    %v4717 = vpack.c.b16 %v4685, %v4684
    %4750 = vmatprep.subr.bf16.mxu0 0
    %4751 = vmatpush1.bf16.msra.mxu0 %v4693
    %4752 = vmatprep.subr.bf16.mxu0 0
    %4753 = vmatpush1.bf16.msra.mxu0 %v4692
    %4754 = vmatprep.subr.bf16.mxu0 0
    %4755 = vmatpush1.bf16.msra.mxu0 %v4691
    %4756 = vmatprep.subr.bf16.mxu0 0
    %4757 = vmatpush1.bf16.msra.mxu0 %v4690
    %4758 = vmatprep.subr.bf16.mxu0 0
    %4759 = vmatpush1.bf16.msra.mxu0 %v4689
    %4760 = vmatprep.subr.bf16.mxu0 0
    %4761 = vmatpush1.bf16.msra.mxu0 %v4688
    %4762 = vmatprep.subr.bf16.mxu0 0
    %4763 = vmatpush1.bf16.msra.mxu0 %v4687
    %4764 = vmatprep.subr.bf16.mxu0 0
    %4765 = vmatpush1.bf16.msra.mxu0 %v4686
    %4766 = vmatprep.subr.bf16.mxu0 0
    %4767 = vmatpush2.bf16.msra.mxu0 %v4701
    %4768 = vmatprep.subr.bf16.mxu0 0
    %4769 = vmatpush2.bf16.msra.mxu0 %v4700
    %4770 = vmatprep.subr.bf16.mxu0 0
    %4771 = vmatpush2.bf16.msra.mxu0 %v4699
    %4772 = vmatprep.subr.bf16.mxu0 0
    %4773 = vmatpush2.bf16.msra.mxu0 %v4698
    %4774 = vmatprep.subr.bf16.mxu0 0
    %4775 = vmatpush2.bf16.msra.mxu0 %v4697
    %4776 = vmatprep.subr.bf16.mxu0 0
    %4777 = vmatpush2.bf16.msra.mxu0 %v4696
    %4778 = vmatprep.subr.bf16.mxu0 0
    %4779 = vmatpush2.bf16.msra.mxu0 %v4695
    %4780 = vmatprep.subr.bf16.mxu0 0
    %4781 = vmatpush2.bf16.msra.mxu0 %v4694
    %4782 = vmatprep.mubr.bf16.mxu0 %v4484
    %4783 = vmatmul.mubr.bf16.gmra.mxu0 %v4483
    %v4784 = vpop.f32.mrf.mxu0
    %v4785 = vadd.f32 %v4556, %v4784
    %v4786 = vpop.f32.mrf.mxu0
    %v4787 = vpop.f32.mrf.mxu0
    %v4788 = vpop.f32.mrf.mxu0
    %4789 = vdwg.mxu0
    %4790 = vmatprep.subr.bf16.mxu0 0
    %4791 = vmatpush1.bf16.msra.mxu0 %v4709
    %4792 = vmatprep.subr.bf16.mxu0 0
    %4793 = vmatpush1.bf16.msra.mxu0 %v4708
    %4794 = vmatprep.subr.bf16.mxu0 0
    %4795 = vmatpush1.bf16.msra.mxu0 %v4707
    %4796 = vmatprep.subr.bf16.mxu0 0
    %4797 = vmatpush1.bf16.msra.mxu0 %v4706
    %4798 = vmatprep.subr.bf16.mxu0 0
    %4799 = vmatpush1.bf16.msra.mxu0 %v4705
    %4800 = vmatprep.subr.bf16.mxu0 0
    %4801 = vmatpush1.bf16.msra.mxu0 %v4704
    %4802 = vmatprep.subr.bf16.mxu0 0
    %4803 = vmatpush1.bf16.msra.mxu0 %v4703
    %4804 = vmatprep.subr.bf16.mxu0 0
    %4805 = vmatpush1.bf16.msra.mxu0 %v4702
    %4806 = vmatprep.subr.bf16.mxu0 0
    %4807 = vmatpush2.bf16.msra.mxu0 %v4717
    %4808 = vmatprep.subr.bf16.mxu0 0
    %4809 = vmatpush2.bf16.msra.mxu0 %v4716
    %4810 = vmatprep.subr.bf16.mxu0 0
    %4811 = vmatpush2.bf16.msra.mxu0 %v4715
    %4812 = vmatprep.subr.bf16.mxu0 0
    %4813 = vmatpush2.bf16.msra.mxu0 %v4714
    %4814 = vmatprep.subr.bf16.mxu0 0
    %4815 = vmatpush2.bf16.msra.mxu0 %v4713
    %4816 = vmatprep.subr.bf16.mxu0 0
    %4817 = vmatpush2.bf16.msra.mxu0 %v4712
    %4818 = vmatprep.subr.bf16.mxu0 0
    %4819 = vmatpush2.bf16.msra.mxu0 %v4711
    %4820 = vmatprep.subr.bf16.mxu0 0
    %4821 = vmatpush2.bf16.msra.mxu0 %v4710
    %4822 = vmatprep.mubr.bf16.mxu0 %v4486
    %4823 = vmatmul.mubr.bf16.gmra.mxu0 %v4485
    %v4824 = vpop.f32.mrf.mxu0
    %v4825 = vadd.f32 %v4785, %v4824
    %v4826 = vpop.f32.mrf.mxu0
    %v4827 = vpop.f32.mrf.mxu0
    %v4828 = vpop.f32.mrf.mxu0
    %4829 = vdwg.mxu0
    %v4830 = vlaneseq
    %v4831 = vand.u32 %v4830, 127
    %vm4832 = vcmp.lt.s32.totalorder %v4831, 10
    %v4833 = vsel %vm4832, %v4825, -1e+30
    %vm4834 = vcmask 1041408
    %v4835 = vsel %vm4834, %v4833, -inf
    %4836 = vmax.xlane.f32.xlu0 %v4835
    %v4837 = vpop.xlane.xlu0 %4836
    %v4838 = vsub.f32 %v4833, %v4837
    %v4839 = vmul.f32 %v4838, 1.442695
    %v4840 = vpow.pop %v4839
    %v4841 = vsel %vm4832, %v4840, 0.0
    %v4842 = vsel %vm4834, %v4841, 0.0
    %4843 = vadd.xlane.f32.xlu0 %v4842
    %v4844 = vpop.xlane.xlu0 %4843
    %v4845 = vrcp.pop %v4844
    %v4846 = vmul.f32 %v4841, %v4845
    %4847 = vst [vmem:[#allocation10] sm:$0x3] %v4846
    // Predicated region
    $region38: #{model_forward.1} parent=1 // pred_check
      _
    $region39: #{model_forward.1} parent=1 // pred_check_branch
      %4849 = sbr.rel (0) target = $region41
    $region40: #{model_forward.1} parent=1 // pred_region
      %s4851 = ssub.s32 32, 32
      %4852 = vsyncadd [#allocation4], %s4851
      %s4854 = sshll.u32 [#allocation10], 4
      %s4855 = int_to_ptr.vmem [resolvable:$true] %s4854
      %4857 = dma.vmem_to_hbm [thread:$0]  %s4855, 32, %s5, [#allocation4]
    $region41: #{model_forward.1} parent=1 // pred_fallthru
      _
    // Predicated region
    $region42: #{model_forward.1} parent=1 // pred_check
      _
    $region43: #{model_forward.1} parent=1 // pred_check_branch
      %4859 = sbr.rel (0) target = $region45
    $region44: #{model_forward.1} parent=1 // pred_region
      %4860 = dma.done [#allocation4], 32
    $region45: #{model_forward.1} parent=1 // pred_fallthru
      _
    %4861 = vsyncpa [#allocation3], 1
    %4862 = vsyncpa [#allocation6], 1
    %4863 = vsyncpa [#allocation9], 1
    %4864 = vsyncpa [#allocation4], 1

</llo_original>
